<compile_context>
chip_gen: v6e
topology: v6e:2x2x1
jax: 0.10.0
libtpu: 0.0.40
codegen_flags: <defaults>
</compile_context>

<pallas_src>
import functools

import jax
import jax.numpy as jnp
from jax import lax
from jax.experimental import pallas as pl
from jax.experimental.pallas import tpu as pltpu

MAX_VAL = 1.0e7          # encoder padding-mask constant
LOGIT_MASK_VAL = -1.0e7  # value written into logits_mask for already-predicted labels
NEG_BIG = -1.0e30        # mask value for padded label columns / invalid history rows


def _round_up(x, m):
    return ((x + m - 1) // m) * m


def _pad_to(x, shape):
    return jnp.pad(x, [(0, s - d) for d, s in zip(x.shape, shape)])


# --------------------------------------------------------------------------- kernel
def _decode_step_kernel(enc_ref, negpad_ref, h0_ref, c0_ref,
                        w_ih_ref, w_hh_ref, bl_ref,
                        wd_ref, bd_ref, wk_ref, bk_ref, wo_ref,
                        w1_ref, b1_ref, w2_ref, b2_ref, emb_ref,
                        logits_ref,
                        h_s, c_s, in_s, last_s, s2_s, lmask_s,
                        *, eos_id, Hp):
    """One greedy decode step for one batch block; grid = (batch_block, step)."""
    t = pl.program_id(1)

    @pl.when(t == 0)
    def _init():
        h_s[...] = h0_ref[...]
        c_s[...] = c0_ref[...]
        in_s[...] = jnp.zeros_like(in_s)
        last_s[...] = jnp.zeros_like(last_s)
        s2_s[...] = jnp.zeros_like(s2_s)
        lmask_s[...] = jnp.zeros_like(lmask_s)

    Bb, Np = lmask_s.shape

    # ---- single-step LSTM cell (PyTorch gate order i, f, g, o); each gate occupies an
    #      aligned Hp-wide lane span so the slices below never cross a lane tile.
    in_emb = in_s[...]
    gates = (jnp.dot(in_emb, w_ih_ref[...], preferred_element_type=jnp.float32)
             + jnp.dot(h_s[...], w_hh_ref[...], preferred_element_type=jnp.float32)
             + bl_ref[...])                                          # (Bb, 4Hp)
    i_g = jax.nn.sigmoid(gates[:, 0 * Hp:1 * Hp])
    f_g = jax.nn.sigmoid(gates[:, 1 * Hp:2 * Hp])
    g_g = jnp.tanh(gates[:, 2 * Hp:3 * Hp])
    o_g = jax.nn.sigmoid(gates[:, 3 * Hp:4 * Hp])
    c_new = f_g * c_s[...] + i_g * g_g
    h_new = o_g * jnp.tanh(c_new)
    h_s[...] = h_new
    c_s[...] = c_new

    # ---- attention over encoder states (batched MXU dots, EUP reciprocal for softmax)
    encoded = enc_ref[...]                                           # (Bb, Sep, Hp)
    q3 = (jnp.dot(h_new, wd_ref[...], preferred_element_type=jnp.float32)
          + bd_ref[...])[:, None, :]                                 # (Bb, 1, Hp)
    score = (jnp.einsum('bqh,bsh->bqs', q3, encoded,
                        preferred_element_type=jnp.float32)
             + negpad_ref[...][:, None, :])                          # (Bb, 1, Sep)
    score = score - jnp.max(score, axis=-1, keepdims=True)
    ex = jnp.exp(score)
    attn_w = ex * pl.reciprocal(jnp.sum(ex, axis=-1, keepdims=True))
    attn_enc = jnp.einsum('bqs,bsh->bqh', attn_w, encoded,
                          preferred_element_type=jnp.float32)[:, 0, :]   # (Bb, Hp)

    # ---- SelfAttentiveSum over previously predicted label embeddings.
    #      Scores of old rows are cached in s2_s (rows never change once written);
    #      only the softmax + weighted sum is recomputed per step.
    s2 = s2_s[...]                                                   # (T, Bb, 1)
    rows = lax.broadcasted_iota(jnp.int32, s2.shape, 0)
    s2 = jnp.where(rows < jnp.maximum(t, 1), s2, NEG_BIG)            # step 0: single zero row
    s2 = s2 - jnp.max(s2, axis=0, keepdims=True)
    e2 = jnp.exp(s2)
    w_last = e2 * pl.reciprocal(jnp.sum(e2, axis=0, keepdims=True))  # (T, Bb, 1)
    attn_last = jnp.sum(w_last * last_s[...], axis=0)                # (Bb, Edp)

    # ---- MLP head
    sent = encoded[:, 0, :]                                          # sentence repr (dropout=id)
    m = jnp.concatenate([sent + attn_enc, in_emb + attn_last], axis=-1)   # (Bb, Hp+Edp)
    hid = jnp.maximum(jnp.dot(m, w1_ref[...], preferred_element_type=jnp.float32)
                      + b1_ref[...], 0.0)
    logits = (jnp.dot(hid, w2_ref[...], preferred_element_type=jnp.float32)
              + b2_ref[...] + lmask_s[...])                          # (Bb, Np)
    logits_ref[0] = logits

    # ---- greedy argmax (first max index); one-hot matmul doubles as the embedding
    #      lookup and the scatter source for the logits mask.
    col = lax.broadcasted_iota(jnp.int32, (Bb, Np), 1)
    maxv = jnp.max(logits, axis=-1, keepdims=True)
    ids = jnp.min(jnp.where(logits == maxv, col, Np), axis=-1, keepdims=True)   # (Bb, 1)
    onehot = (col == ids).astype(jnp.float32)                                   # (Bb, Np)
    new_emb = jnp.dot(onehot, emb_ref[...], preferred_element_type=jnp.float32)  # (Bb, Edp)

    # ---- state updates (in-place scratch writes, no loop carry)
    in_s[...] = new_emb
    last_s[t] = new_emb
    key = jnp.maximum(jnp.dot(new_emb, wk_ref[...], preferred_element_type=jnp.float32)
                      + bk_ref[...], 0.0)
    # key_out bias omitted: softmax over the history is shift-invariant.
    s2_s[t] = jnp.sum(key * wo_ref[...], axis=-1, keepdims=True)     # (Bb, 1)

    new_mask = jnp.where(onehot > 0.0, LOGIT_MASK_VAL, lmask_s[...])
    lmask_s[...] = jnp.where(col == eos_id, 0.0, new_mask)


# --------------------------------------------------------------------------- wrapper
def seq2seq_decode(params, encoded, hidden, cell, encoder_mask, *, T, eos_id,
                   batch_block=None):
    """Returns (outputs (B,T,N), next_input_ids (B,T)) matching the PyTorch forward."""
    B, Se, He = encoded.shape
    De = hidden.shape[0]
    Hd = De * hidden.shape[-1]
    N, Ed = params["emb"].shape
    assert He == Hd, "module requires encoder_hidden_dim == De * decoder_hidden_size"

    Bp = _round_up(B, 8)          # sublanes
    Sep = _round_up(Se, 8)
    Hp = _round_up(Hd, 128)       # lanes
    Edp = _round_up(Ed, 128)
    Np = _round_up(N, 128)
    Mp = _round_up(Hd + Ed, 128)

    if batch_block is None:
        batch_block = Bp          # on v7x pass Bp // 2 to use both TensorCores
    assert Bp % batch_block == 0 and batch_block % 8 == 0
    nb = Bp // batch_block

    f32 = jnp.float32
    enc = _pad_to(encoded.astype(f32), (Bp, Sep, Hp))
    maskf = _pad_to(encoder_mask.astype(f32), (Bp, Sep))
    negpad = (1.0 - maskf) * (-MAX_VAL)
    h0 = _pad_to(jnp.transpose(hidden, (1, 0, 2)).reshape(B, Hd).astype(f32), (Bp, Hp))
    c0 = _pad_to(jnp.transpose(cell, (1, 0, 2)).reshape(B, Hd).astype(f32), (Bp, Hp))

    # LSTM weights: transpose and re-pack so every gate occupies an aligned Hp lane span.
    w_ih_t = params["lstm_w_ih"].astype(f32).T        # (Ed, 4Hd)
    w_hh_t = params["lstm_w_hh"].astype(f32).T        # (Hd, 4Hd)
    b_lstm = (params["lstm_b_ih"] + params["lstm_b_hh"]).astype(f32)

    def pack_gates(w_t, in_pad):
        return jnp.concatenate(
            [_pad_to(w_t[:, g * Hd:(g + 1) * Hd], (in_pad, Hp)) for g in range(4)], axis=1)

    w_ih = pack_gates(w_ih_t, Edp)                     # (Edp, 4Hp)
    w_hh = pack_gates(w_hh_t, Hp)                      # (Hp, 4Hp)
    b_l = jnp.concatenate(
        [_pad_to(b_lstm[g * Hd:(g + 1) * Hd], (Hp,)) for g in range(4)]).reshape(1, 4 * Hp)

    wd = _pad_to(params["dense_w"].astype(f32).T, (Hp, Hp))
    bd = _pad_to(params["dense_b"].astype(f32), (Hp,)).reshape(1, Hp)
    wk = _pad_to(params["key_maker_w"].astype(f32).T, (Edp, Edp))
    bk = _pad_to(params["key_maker_b"].astype(f32), (Edp,)).reshape(1, Edp)
    wo = _pad_to(params["key_out_w"].astype(f32), (1, Edp))

    # MLP input layout inside the kernel is [m1 (Hp lanes) | m2 (Edp lanes)].
    w1_t = params["mlp1_w"].astype(f32).T              # (Hd+Ed, Hd+Ed)
    w1 = jnp.zeros((Hp + Edp, Mp), f32)
    w1 = w1.at[:Hd, :Hd + Ed].set(w1_t[:Hd])
    w1 = w1.at[Hp:Hp + Ed, :Hd + Ed].set(w1_t[Hd:])
    b1 = _pad_to(params["mlp1_b"].astype(f32), (Mp,)).reshape(1, Mp)

    w2_t = params["mlp2_w"].astype(f32).T              # (Hd+Ed, N)
    w2 = jnp.zeros((Mp, Np), f32).at[:Hd + Ed, :N].set(w2_t)
    # padded label columns get -1e30 bias so greedy argmax can never select them
    b2 = jnp.full((Np,), NEG_BIG, f32).at[:N].set(params["mlp2_b"].astype(f32)).reshape(1, Np)

    emb_p = _pad_to(params["emb"].astype(f32), (Np, Edp))

    weight_args = (w_ih, w_hh, b_l, wd, bd, wk, bk, wo, w1, b1, w2, b2, emb_p)

    def const_spec(a):
        n = a.ndim
        return pl.BlockSpec(a.shape, lambda b, t, n=n: (0,) * n)   # VMEM-resident, fetched once

    in_specs = [
        pl.BlockSpec((batch_block, Sep, Hp), lambda b, t: (b, 0, 0)),   # encoded
        pl.BlockSpec((batch_block, Sep), lambda b, t: (b, 0)),          # -MAX_VAL pad mask
        pl.BlockSpec((batch_block, Hp), lambda b, t: (b, 0)),           # h0
        pl.BlockSpec((batch_block, Hp), lambda b, t: (b, 0)),           # c0
    ] + [const_spec(a) for a in weight_args]

    out_specs = pl.BlockSpec((1, batch_block, Np), lambda b, t: (t, b, 0))

    scratch_shapes = [
        pltpu.VMEM((batch_block, Hp), f32),        # h
        pltpu.VMEM((batch_block, Hp), f32),        # c
        pltpu.VMEM((batch_block, Edp), f32),       # fed-back label embedding
        pltpu.VMEM((T, batch_block, Edp), f32),    # predicted label-embedding history
        pltpu.VMEM((T, batch_block, 1), f32),      # cached SelfAttentiveSum scores
        pltpu.VMEM((batch_block, Np), f32),        # cumulative logits mask
    ]

    kernel = functools.partial(_decode_step_kernel, eos_id=eos_id, Hp=Hp)
    logits_tbn = pl.pallas_call(
        kernel,
        out_shape=jax.ShapeDtypeStruct((T, Bp, Np), f32),
        grid=(nb, T),
        in_specs=in_specs,
        out_specs=out_specs,
        scratch_shapes=scratch_shapes,
        compiler_params=pltpu.CompilerParams(
            dimension_semantics=("parallel", "arbitrary"),
            vmem_limit_bytes=48 * 1024 * 1024,     # > 16/32 MiB defaults, < v7x 64 MiB physical
        ),
    )(enc, negpad, h0, c0, *weight_args)

    outputs = jnp.transpose(logits_tbn, (1, 0, 2))[:B, :, :N]        # (B, T, N)
    # same greedy ids the kernel fed back internally (logits already contain the mask)
    next_ids = jnp.argmax(outputs, axis=-1).astype(jnp.int32)        # (B, T)
    return outputs, next_ids


# --------------------------------------------------------------------------- reference
def reference_decode(params, encoded, hidden, cell, encoder_mask, *, T, eos_id):
    B, Se, He = encoded.shape
    Hd = hidden.shape[0] * hidden.shape[-1]
    N, Ed = params["emb"].shape
    h = jnp.transpose(hidden, (1, 0, 2)).reshape(B, Hd)
    c = jnp.transpose(cell, (1, 0, 2)).reshape(B, Hd)
    in_emb = jnp.zeros((B, Ed), jnp.float32)
    last = jnp.zeros((B, 1, Ed), jnp.float32)
    lmask = jnp.zeros((B, N), jnp.float32)
    maskf = encoder_mask.astype(jnp.float32)
    outs, ids_all = [], []
    for t in range(T):
        gates = (in_emb @ params["lstm_w_ih"].T + h @ params["lstm_w_hh"].T
                 + params["lstm_b_ih"] + params["lstm_b_hh"])
        i_g = jax.nn.sigmoid(gates[:, :Hd]); f_g = jax.nn.sigmoid(gates[:, Hd:2 * Hd])
        g_g = jnp.tanh(gates[:, 2 * Hd:3 * Hd]); o_g = jax.nn.sigmoid(gates[:, 3 * Hd:])
        c = f_g * c + i_g * g_g
        h = o_g * jnp.tanh(c)
        query = h @ params["dense_w"].T + params["dense_b"]
        score = jnp.einsum("bsh,bh->bs", encoded, query) + (1.0 - maskf) * (-MAX_VAL)
        w = jax.nn.softmax(score, axis=1)
        attn_enc = jnp.einsum("bs,bsh->bh", w, encoded)
        k = jax.nn.relu(last @ params["key_maker_w"].T + params["key_maker_b"])
        s2 = jnp.squeeze(k @ params["key_out_w"].T, -1) + params["key_out_b"]
        w2 = jax.nn.softmax(s2, axis=1)
        attn_last = jnp.einsum("bs,bse->be", w2, last)
        m = jnp.concatenate([encoded[:, 0, :] + attn_enc, in_emb + attn_last], axis=-1)
        hid = jax.nn.relu(m @ params["mlp1_w"].T + params["mlp1_b"])
        logits = hid @ params["mlp2_w"].T + params["mlp2_b"] + lmask
        outs.append(logits)
        ids = jnp.argmax(logits, axis=-1)
        ids_all.append(ids.astype(jnp.int32))
        in_emb = params["emb"][ids]
        last = in_emb[:, None, :] if t == 0 else jnp.concatenate(
            [last, in_emb[:, None, :]], axis=1)
        onehot = jax.nn.one_hot(ids, N)
        lmask = jnp.where(onehot > 0, LOGIT_MASK_VAL, lmask)
        lmask = lmask.at[:, eos_id].set(0.0)
    return jnp.stack(outs, 1), jnp.stack(ids_all, 1)


# --------------------------------------------------------------------------- params
def init_params(key, *, Ed, Hd, He, N):
    ks = jax.random.split(key, 15)
    s = 0.1
    return {
        "lstm_w_ih": s * jax.random.normal(ks[0], (4 * Hd, Ed), jnp.float32),
        "lstm_w_hh": s * jax.random.normal(ks[1], (4 * Hd, Hd), jnp.float32),
        "lstm_b_ih": s * jax.random.normal(ks[2], (4 * Hd,), jnp.float32),
        "lstm_b_hh": s * jax.random.normal(ks[3], (4 * Hd,), jnp.float32),
        "dense_w": s * jax.random.normal(ks[4], (He, Hd), jnp.float32),
        "dense_b": s * jax.random.normal(ks[5], (He,), jnp.float32),
        "key_maker_w": s * jax.random.normal(ks[6], (Ed, Ed), jnp.float32),
        "key_maker_b": s * jax.random.normal(ks[7], (Ed,), jnp.float32),
        "key_out_w": s * jax.random.normal(ks[8], (1, Ed), jnp.float32),
        "key_out_b": s * jax.random.normal(ks[9], (1,), jnp.float32),
        "mlp1_w": s * jax.random.normal(ks[10], (Hd + Ed, Hd + Ed), jnp.float32),
        "mlp1_b": s * jax.random.normal(ks[11], (Hd + Ed,), jnp.float32),
        "mlp2_w": s * jax.random.normal(ks[12], (N, Hd + Ed), jnp.float32),
        "mlp2_b": s * jax.random.normal(ks[13], (N,), jnp.float32),
        "emb": s * jax.random.normal(ks[14], (N, Ed), jnp.float32),
    }


if __name__ == "__main__":
    # small shapes: B=2, Se=8, He=Hd=32 (De=1 so De*He==Hd), Ed=32, N=16 labels, T=5 steps
    B, Se, He, Hd, Ed, N = 2, 8, 32, 32, 32, 16
    De, T, eos_id = 1, 5, 1

    key = jax.random.PRNGKey(0)
    k_enc, k_h, k_c, k_p = jax.random.split(key, 4)

    encoded = jax.random.normal(k_enc, (B, Se, He), jnp.float32)
    hidden = jax.random.normal(k_h, (De, B, He), jnp.float32)
    cell = jax.random.normal(k_c, (De, B, He), jnp.float32)
    text_lengths = jnp.array([8, 5], jnp.int32)
    encoder_mask = (jnp.arange(Se)[None, :] < text_lengths[:, None])  # (B, Se) bool

    params = init_params(k_p, Ed=Ed, Hd=Hd, He=He, N=N)

    outputs, next_ids = seq2seq_decode(params, encoded, hidden, cell, encoder_mask,
                                       T=T, eos_id=eos_id)
    outputs = jax.block_until_ready(outputs)
    next_ids = jax.block_until_ready(next_ids)

    ref_out, ref_ids = reference_decode(params, encoded, hidden, cell, encoder_mask,
                                        T=T, eos_id=eos_id)

    assert outputs.shape == (B, T, N) and next_ids.shape == (B, T)
    assert jnp.allclose(outputs, ref_out, atol=5e-3, rtol=5e-3)
    assert jnp.array_equal(next_ids, ref_ids)
    print("KERNEL_OK")
</pallas_src>

<mosaic_0001>
module attributes {stable_mosaic.version = 11 : i64} {
  func.func @_decode_step_kernel(%arg0: i32, %arg1: i32, %arg2: memref<8x8x128xf32, #tpu.memory_space<vmem>>, %arg3: memref<8x8xf32, #tpu.memory_space<vmem>>, %arg4: memref<8x128xf32, #tpu.memory_space<vmem>>, %arg5: memref<8x128xf32, #tpu.memory_space<vmem>>, %arg6: memref<128x512xf32, #tpu.memory_space<vmem>>, %arg7: memref<128x512xf32, #tpu.memory_space<vmem>>, %arg8: memref<1x512xf32, #tpu.memory_space<vmem>>, %arg9: memref<128x128xf32, #tpu.memory_space<vmem>>, %arg10: memref<1x128xf32, #tpu.memory_space<vmem>>, %arg11: memref<128x128xf32, #tpu.memory_space<vmem>>, %arg12: memref<1x128xf32, #tpu.memory_space<vmem>>, %arg13: memref<1x128xf32, #tpu.memory_space<vmem>>, %arg14: memref<256x128xf32, #tpu.memory_space<vmem>>, %arg15: memref<1x128xf32, #tpu.memory_space<vmem>>, %arg16: memref<128x128xf32, #tpu.memory_space<vmem>>, %arg17: memref<1x128xf32, #tpu.memory_space<vmem>>, %arg18: memref<128x128xf32, #tpu.memory_space<vmem>>, %arg19: memref<1x8x128xf32, #tpu.memory_space<vmem>>, %arg20: memref<8x128xf32, #tpu.memory_space<vmem>>, %arg21: memref<8x128xf32, #tpu.memory_space<vmem>>, %arg22: memref<8x128xf32, #tpu.memory_space<vmem>>, %arg23: memref<5x8x128xf32, #tpu.memory_space<vmem>>, %arg24: memref<5x8x1xf32, #tpu.memory_space<vmem>>, %arg25: memref<8x128xf32, #tpu.memory_space<vmem>>) attributes {dimension_semantics = [#tpu.dimension_semantics<parallel>, #tpu.dimension_semantics<arbitrary>], iteration_bounds = array<i64: 1, 5>, scalar_prefetch = 0 : i64, scratch_operands = 6 : i64, tpu.core_type = #tpu.core_type<tc>, window_params = [{transform_indices = @transform_0, window_bounds = array<i64: 8, 8, 128>}, {transform_indices = @transform_1, window_bounds = array<i64: 8, 8>}, {transform_indices = @transform_2, window_bounds = array<i64: 8, 128>}, {transform_indices = @transform_3, window_bounds = array<i64: 8, 128>}, {pipeline_mode = #tpu.pipeline_mode<synchronous>, transform_indices = @transform_4, window_bounds = array<i64: 128, 512>}, {pipeline_mode = #tpu.pipeline_mode<synchronous>, transform_indices = @transform_5, window_bounds = array<i64: 128, 512>}, {pipeline_mode = #tpu.pipeline_mode<synchronous>, transform_indices = @transform_6, window_bounds = array<i64: 1, 512>}, {pipeline_mode = #tpu.pipeline_mode<synchronous>, transform_indices = @transform_7, window_bounds = array<i64: 128, 128>}, {pipeline_mode = #tpu.pipeline_mode<synchronous>, transform_indices = @transform_8, window_bounds = array<i64: 1, 128>}, {pipeline_mode = #tpu.pipeline_mode<synchronous>, transform_indices = @transform_9, window_bounds = array<i64: 128, 128>}, {pipeline_mode = #tpu.pipeline_mode<synchronous>, transform_indices = @transform_10, window_bounds = array<i64: 1, 128>}, {pipeline_mode = #tpu.pipeline_mode<synchronous>, transform_indices = @transform_11, window_bounds = array<i64: 1, 128>}, {pipeline_mode = #tpu.pipeline_mode<synchronous>, transform_indices = @transform_12, window_bounds = array<i64: 256, 128>}, {pipeline_mode = #tpu.pipeline_mode<synchronous>, transform_indices = @transform_13, window_bounds = array<i64: 1, 128>}, {pipeline_mode = #tpu.pipeline_mode<synchronous>, transform_indices = @transform_14, window_bounds = array<i64: 128, 128>}, {pipeline_mode = #tpu.pipeline_mode<synchronous>, transform_indices = @transform_15, window_bounds = array<i64: 1, 128>}, {pipeline_mode = #tpu.pipeline_mode<synchronous>, transform_indices = @transform_16, window_bounds = array<i64: 128, 128>}, {transform_indices = @transform_17, window_bounds = array<i64: 1, 8, 128>}]} {
    %c0_i32 = arith.constant 0 : i32
    %0 = arith.cmpi eq, %arg1, %c0_i32 : i32
    %1 = arith.extui %0 : i1 to i32
    %c0_i32_0 = arith.constant 0 : i32
    %2 = arith.cmpi ne, %1, %c0_i32_0 : i32
    scf.if %2 {
      %c0_88 = arith.constant 0 : index
      %c0_89 = arith.constant 0 : index
      %153 = vector.load %arg4[%c0_88, %c0_89] : memref<8x128xf32, #tpu.memory_space<vmem>>, vector<8x128xf32>
      %c0_90 = arith.constant 0 : index
      %c0_91 = arith.constant 0 : index
      %154 = vector.load %arg20[%c0_90, %c0_91] : memref<8x128xf32, #tpu.memory_space<vmem>>, vector<8x128xf32>
      tpu.vector_store %arg20[%c0_90, %c0_91], %153 {strides = array<i32>} : memref<8x128xf32, #tpu.memory_space<vmem>>, vector<8x128xf32>,
      %c0_92 = arith.constant 0 : index
      %c0_93 = arith.constant 0 : index
      %155 = vector.load %arg5[%c0_92, %c0_93] : memref<8x128xf32, #tpu.memory_space<vmem>>, vector<8x128xf32>
      %c0_94 = arith.constant 0 : index
      %c0_95 = arith.constant 0 : index
      %156 = vector.load %arg21[%c0_94, %c0_95] : memref<8x128xf32, #tpu.memory_space<vmem>>, vector<8x128xf32>
      tpu.vector_store %arg21[%c0_94, %c0_95], %155 {strides = array<i32>} : memref<8x128xf32, #tpu.memory_space<vmem>>, vector<8x128xf32>,
      %cst_96 = arith.constant 0.000000e+00 : f32
      %157 = vector.broadcast %cst_96 : f32 to vector<8x128xf32>
      %c0_97 = arith.constant 0 : index
      %c0_98 = arith.constant 0 : index
      %158 = vector.load %arg22[%c0_97, %c0_98] : memref<8x128xf32, #tpu.memory_space<vmem>>, vector<8x128xf32>
      tpu.vector_store %arg22[%c0_97, %c0_98], %157 {strides = array<i32>} : memref<8x128xf32, #tpu.memory_space<vmem>>, vector<8x128xf32>,
      %cst_99 = arith.constant 0.000000e+00 : f32
      %159 = vector.broadcast %cst_99 : f32 to vector<5x8x128xf32>
      %c0_100 = arith.constant 0 : index
      %c0_101 = arith.constant 0 : index
      %c0_102 = arith.constant 0 : index
      %160 = vector.load %arg23[%c0_100, %c0_101, %c0_102] : memref<5x8x128xf32, #tpu.memory_space<vmem>>, vector<5x8x128xf32>
      tpu.vector_store %arg23[%c0_100, %c0_101, %c0_102], %159 {strides = array<i32>} : memref<5x8x128xf32, #tpu.memory_space<vmem>>, vector<5x8x128xf32>,
      %cst_103 = arith.constant 0.000000e+00 : f32
      %161 = vector.broadcast %cst_103 : f32 to vector<5x8x1xf32>
      %c0_104 = arith.constant 0 : index
      %c0_105 = arith.constant 0 : index
      %c0_106 = arith.constant 0 : index
      %162 = vector.load %arg24[%c0_104, %c0_105, %c0_106] : memref<5x8x1xf32, #tpu.memory_space<vmem>>, vector<5x8x1xf32>
      tpu.vector_store %arg24[%c0_104, %c0_105, %c0_106], %161 {strides = array<i32>} : memref<5x8x1xf32, #tpu.memory_space<vmem>>, vector<5x8x1xf32>,
      %cst_107 = arith.constant 0.000000e+00 : f32
      %163 = vector.broadcast %cst_107 : f32 to vector<8x128xf32>
      %c0_108 = arith.constant 0 : index
      %c0_109 = arith.constant 0 : index
      %164 = vector.load %arg25[%c0_108, %c0_109] : memref<8x128xf32, #tpu.memory_space<vmem>>, vector<8x128xf32>
      tpu.vector_store %arg25[%c0_108, %c0_109], %163 {strides = array<i32>} : memref<8x128xf32, #tpu.memory_space<vmem>>, vector<8x128xf32>,
    } else {
    }
    %c0 = arith.constant 0 : index
    %c0_1 = arith.constant 0 : index
    %3 = vector.load %arg22[%c0, %c0_1] : memref<8x128xf32, #tpu.memory_space<vmem>>, vector<8x128xf32>
    %c0_2 = arith.constant 0 : index
    %c0_3 = arith.constant 0 : index
    %4 = vector.load %arg6[%c0_2, %c0_3] : memref<128x512xf32, #tpu.memory_space<vmem>>, vector<128x512xf32>
    %cst = arith.constant dense<0.000000e+00> : vector<8x512xf32>
    %5 = tpu.matmul %3, %4, %cst {dimension_numbers = #tpu.dot_dimension_numbers<[1], [0], [0], [1], [0, 0, 1, 1], [], []>} : vector<8x128xf32>, vector<128x512xf32>, vector<8x512xf32> -> vector<8x512xf32>
    %c0_4 = arith.constant 0 : index
    %c0_5 = arith.constant 0 : index
    %6 = vector.load %arg20[%c0_4, %c0_5] : memref<8x128xf32, #tpu.memory_space<vmem>>, vector<8x128xf32>
    %c0_6 = arith.constant 0 : index
    %c0_7 = arith.constant 0 : index
    %7 = vector.load %arg7[%c0_6, %c0_7] : memref<128x512xf32, #tpu.memory_space<vmem>>, vector<128x512xf32>
    %cst_8 = arith.constant dense<0.000000e+00> : vector<8x512xf32>
    %8 = tpu.matmul %6, %7, %cst_8 {dimension_numbers = #tpu.dot_dimension_numbers<[1], [0], [0], [1], [0, 0, 1, 1], [], []>} : vector<8x128xf32>, vector<128x512xf32>, vector<8x512xf32> -> vector<8x512xf32>
    %9 = arith.addf %5, %8 : vector<8x512xf32>
    %c0_9 = arith.constant 0 : index
    %c0_10 = arith.constant 0 : index
    %10 = vector.load %arg8[%c0_9, %c0_10] : memref<1x512xf32, #tpu.memory_space<vmem>>, vector<1x512xf32>
    %11 = vector.broadcast %10 : vector<1x512xf32> to vector<8x512xf32>
    %12 = arith.addf %9, %11 : vector<8x512xf32>
    %13 = vector.extract_strided_slice %12 {offsets = [0, 0], sizes = [8, 128], strides = [1, 1]} : vector<8x512xf32> to vector<8x128xf32>
    %14 = arith.negf %13 : vector<8x128xf32>
    %15 = math.exp %14 : vector<8x128xf32>
    %cst_11 = arith.constant 1.000000e+00 : f32
    %16 = vector.broadcast %cst_11 : f32 to vector<8x128xf32>
    %17 = arith.addf %16, %15 : vector<8x128xf32>
    %18 = arith.divf %16, %17 : vector<8x128xf32>
    %19 = vector.extract_strided_slice %12 {offsets = [0, 128], sizes = [8, 128], strides = [1, 1]} : vector<8x512xf32> to vector<8x128xf32>
    %20 = arith.negf %19 : vector<8x128xf32>
    %21 = math.exp %20 : vector<8x128xf32>
    %cst_12 = arith.constant 1.000000e+00 : f32
    %22 = vector.broadcast %cst_12 : f32 to vector<8x128xf32>
    %23 = arith.addf %22, %21 : vector<8x128xf32>
    %24 = arith.divf %22, %23 : vector<8x128xf32>
    %25 = vector.extract_strided_slice %12 {offsets = [0, 256], sizes = [8, 128], strides = [1, 1]} : vector<8x512xf32> to vector<8x128xf32>
    %26 = math.tanh %25 : vector<8x128xf32>
    %27 = vector.extract_strided_slice %12 {offsets = [0, 384], sizes = [8, 128], strides = [1, 1]} : vector<8x512xf32> to vector<8x128xf32>
    %28 = arith.negf %27 : vector<8x128xf32>
    %29 = math.exp %28 : vector<8x128xf32>
    %cst_13 = arith.constant 1.000000e+00 : f32
    %30 = vector.broadcast %cst_13 : f32 to vector<8x128xf32>
    %31 = arith.addf %30, %29 : vector<8x128xf32>
    %32 = arith.divf %30, %31 : vector<8x128xf32>
    %c0_14 = arith.constant 0 : index
    %c0_15 = arith.constant 0 : index
    %33 = vector.load %arg21[%c0_14, %c0_15] : memref<8x128xf32, #tpu.memory_space<vmem>>, vector<8x128xf32>
    %34 = arith.mulf %24, %33 : vector<8x128xf32>
    %35 = arith.mulf %18, %26 : vector<8x128xf32>
    %36 = arith.addf %34, %35 : vector<8x128xf32>
    %37 = math.tanh %36 : vector<8x128xf32>
    %38 = arith.mulf %32, %37 : vector<8x128xf32>
    %c0_16 = arith.constant 0 : index
    %c0_17 = arith.constant 0 : index
    %39 = vector.load %arg20[%c0_16, %c0_17] : memref<8x128xf32, #tpu.memory_space<vmem>>, vector<8x128xf32>
    tpu.vector_store %arg20[%c0_16, %c0_17], %38 {strides = array<i32>} : memref<8x128xf32, #tpu.memory_space<vmem>>, vector<8x128xf32>,
    %c0_18 = arith.constant 0 : index
    %c0_19 = arith.constant 0 : index
    %40 = vector.load %arg21[%c0_18, %c0_19] : memref<8x128xf32, #tpu.memory_space<vmem>>, vector<8x128xf32>
    tpu.vector_store %arg21[%c0_18, %c0_19], %36 {strides = array<i32>} : memref<8x128xf32, #tpu.memory_space<vmem>>, vector<8x128xf32>,
    %c0_20 = arith.constant 0 : index
    %c0_21 = arith.constant 0 : index
    %c0_22 = arith.constant 0 : index
    %41 = vector.load %arg2[%c0_20, %c0_21, %c0_22] : memref<8x8x128xf32, #tpu.memory_space<vmem>>, vector<8x8x128xf32>
    %c0_23 = arith.constant 0 : index
    %c0_24 = arith.constant 0 : index
    %42 = vector.load %arg9[%c0_23, %c0_24] : memref<128x128xf32, #tpu.memory_space<vmem>>, vector<128x128xf32>
    %cst_25 = arith.constant dense<0.000000e+00> : vector<8x128xf32>
    %43 = tpu.matmul %38, %42, %cst_25 {dimension_numbers = #tpu.dot_dimension_numbers<[1], [0], [0], [1], [0, 0, 1, 1], [], []>} : vector<8x128xf32>, vector<128x128xf32>, vector<8x128xf32> -> vector<8x128xf32>
    %c0_26 = arith.constant 0 : index
    %c0_27 = arith.constant 0 : index
    %44 = vector.load %arg10[%c0_26, %c0_27] : memref<1x128xf32, #tpu.memory_space<vmem>>, vector<1x128xf32>
    %45 = vector.broadcast %44 : vector<1x128xf32> to vector<8x128xf32>
    %46 = arith.addf %43, %45 : vector<8x128xf32>
    %47 = vector.shape_cast %46 : vector<8x128xf32> to vector<8x1x128xf32>
    "tpu.trace_start"() <{level = 10 : i32, message = "bqh,bsh->bqs"}> : () -> ()
    %cst_28 = arith.constant dense<0.000000e+00> : vector<8x1x8xf32>
    %48 = tpu.matmul %47, %41, %cst_28 {dimension_numbers = #tpu.dot_dimension_numbers<[2], [2], [1], [1], [0, 0, 0, 1, 1, 1], [0], [0]>} : vector<8x1x128xf32>, vector<8x8x128xf32>, vector<8x1x8xf32> -> vector<8x1x8xf32>
    "tpu.trace_stop"() : () -> ()
    %c0_29 = arith.constant 0 : index
    %c0_30 = arith.constant 0 : index
    %49 = vector.load %arg3[%c0_29, %c0_30] : memref<8x8xf32, #tpu.memory_space<vmem>>, vector<8x8xf32>
    %50 = vector.shape_cast %49 : vector<8x8xf32> to vector<8x1x8xf32>
    %51 = arith.addf %48, %50 : vector<8x1x8xf32>
    %cst_31 = arith.constant dense<0xFF800000> : vector<8x1xf32>
    %52 = vector.multi_reduction <maximumf>, %51, %cst_31 [2] : vector<8x1x8xf32> to vector<8x1xf32>
    %53 = vector.shape_cast %52 : vector<8x1xf32> to vector<8x1x1xf32>
    %54 = vector.broadcast %53 : vector<8x1x1xf32> to vector<8x1x8xf32>
    %55 = arith.subf %51, %54 : vector<8x1x8xf32>
    %56 = math.exp %55 : vector<8x1x8xf32>
    %cst_32 = arith.constant dense<0.000000e+00> : vector<8x1xf32>
    %57 = vector.multi_reduction <add>, %56, %cst_32 [2] : vector<8x1x8xf32> to vector<8x1xf32>
    %58 = vector.shape_cast %57 : vector<8x1xf32> to vector<8x1x1xf32>
    %59 = tpu.reciprocal %58 : vector<8x1x1xf32> -> vector<8x1x1xf32>
    %60 = vector.broadcast %59 : vector<8x1x1xf32> to vector<8x1x8xf32>
    %61 = arith.mulf %56, %60 : vector<8x1x8xf32>
    "tpu.trace_start"() <{level = 10 : i32, message = "bqs,bsh->bqh"}> : () -> ()
    %cst_33 = arith.constant dense<0.000000e+00> : vector<8x1x128xf32>
    %62 = tpu.matmul %61, %41, %cst_33 {dimension_numbers = #tpu.dot_dimension_numbers<[2], [1], [1], [2], [0, 0, 0, 1, 1, 2], [0], [0]>} : vector<8x1x8xf32>, vector<8x8x128xf32>, vector<8x1x128xf32> -> vector<8x1x128xf32>
    "tpu.trace_stop"() : () -> ()
    %63 = vector.shape_cast %62 : vector<8x1x128xf32> to vector<8x128xf32>
    %c0_34 = arith.constant 0 : index
    %c0_35 = arith.constant 0 : index
    %c0_36 = arith.constant 0 : index
    %64 = vector.load %arg24[%c0_34, %c0_35, %c0_36] : memref<5x8x1xf32, #tpu.memory_space<vmem>>, vector<5x8x1xf32>
    %65 = tpu.iota {dimensions = array<i32: 0>} : vector<5x8x1xi32>
    %c1_i32 = arith.constant 1 : i32
    %66 = arith.maxsi %arg1, %c1_i32 : i32
    %67 = vector.broadcast %66 : i32 to vector<5x8x1xi32>
    %68 = arith.cmpi slt, %65, %67 : vector<5x8x1xi32>
    %cst_37 = arith.constant -1.000000e+30 : f32
    %69 = vector.broadcast %cst_37 : f32 to vector<5x8x1xf32>
    %70 = arith.select %68, %64, %69 : vector<5x8x1xi1>, vector<5x8x1xf32>
    %cst_38 = arith.constant dense<0xFF800000> : vector<8x1xf32>
    %71 = vector.multi_reduction <maximumf>, %70, %cst_38 [0] : vector<5x8x1xf32> to vector<8x1xf32>
    %72 = vector.shape_cast %71 : vector<8x1xf32> to vector<1x8x1xf32>
    %73 = vector.broadcast %72 : vector<1x8x1xf32> to vector<5x8x1xf32>
    %74 = arith.subf %70, %73 : vector<5x8x1xf32>
    %75 = math.exp %74 : vector<5x8x1xf32>
    %cst_39 = arith.constant dense<0.000000e+00> : vector<8x1xf32>
    %76 = vector.multi_reduction <add>, %75, %cst_39 [0] : vector<5x8x1xf32> to vector<8x1xf32>
    %77 = vector.shape_cast %76 : vector<8x1xf32> to vector<1x8x1xf32>
    %78 = tpu.reciprocal %77 : vector<1x8x1xf32> -> vector<1x8x1xf32>
    %79 = vector.broadcast %78 : vector<1x8x1xf32> to vector<5x8x1xf32>
    %80 = arith.mulf %75, %79 : vector<5x8x1xf32>
    %c0_40 = arith.constant 0 : index
    %c0_41 = arith.constant 0 : index
    %c0_42 = arith.constant 0 : index
    %81 = vector.load %arg23[%c0_40, %c0_41, %c0_42] : memref<5x8x128xf32, #tpu.memory_space<vmem>>, vector<5x8x128xf32>
    %82 = vector.broadcast %80 : vector<5x8x1xf32> to vector<5x8x128xf32>
    %83 = arith.mulf %82, %81 : vector<5x8x128xf32>
    %cst_43 = arith.constant dense<0.000000e+00> : vector<8x128xf32>
    %84 = vector.multi_reduction <add>, %83, %cst_43 [0] : vector<5x8x128xf32> to vector<8x128xf32>
    %85 = vector.extract_strided_slice %41 {offsets = [0, 0, 0], sizes = [8, 1, 128], strides = [1, 1, 1]} : vector<8x8x128xf32> to vector<8x1x128xf32>
    %86 = vector.shape_cast %85 : vector<8x1x128xf32> to vector<8x128xf32>
    %87 = arith.addf %86, %63 : vector<8x128xf32>
    %88 = arith.addf %3, %84 : vector<8x128xf32>
    %89 = tpu.concatenate %87, %88 in 1 : vector<8x128xf32>, vector<8x128xf32> -> vector<8x256xf32>
    %c0_44 = arith.constant 0 : index
    %c0_45 = arith.constant 0 : index
    %90 = vector.load %arg14[%c0_44, %c0_45] : memref<256x128xf32, #tpu.memory_space<vmem>>, vector<256x128xf32>
    %cst_46 = arith.constant dense<0.000000e+00> : vector<8x128xf32>
    %91 = tpu.matmul %89, %90, %cst_46 {dimension_numbers = #tpu.dot_dimension_numbers<[1], [0], [0], [1], [0, 0, 1, 1], [], []>} : vector<8x256xf32>, vector<256x128xf32>, vector<8x128xf32> -> vector<8x128xf32>
    %c0_47 = arith.constant 0 : index
    %c0_48 = arith.constant 0 : index
    %92 = vector.load %arg15[%c0_47, %c0_48] : memref<1x128xf32, #tpu.memory_space<vmem>>, vector<1x128xf32>
    %93 = vector.broadcast %92 : vector<1x128xf32> to vector<8x128xf32>
    %94 = arith.addf %91, %93 : vector<8x128xf32>
    %cst_49 = arith.constant 0.000000e+00 : f32
    %95 = vector.broadcast %cst_49 : f32 to vector<8x128xf32>
    %96 = arith.maximumf %94, %95 : vector<8x128xf32>
    %c0_50 = arith.constant 0 : index
    %c0_51 = arith.constant 0 : index
    %97 = vector.load %arg16[%c0_50, %c0_51] : memref<128x128xf32, #tpu.memory_space<vmem>>, vector<128x128xf32>
    %cst_52 = arith.constant dense<0.000000e+00> : vector<8x128xf32>
    %98 = tpu.matmul %96, %97, %cst_52 {dimension_numbers = #tpu.dot_dimension_numbers<[1], [0], [0], [1], [0, 0, 1, 1], [], []>} : vector<8x128xf32>, vector<128x128xf32>, vector<8x128xf32> -> vector<8x128xf32>
    %c0_53 = arith.constant 0 : index
    %c0_54 = arith.constant 0 : index
    %99 = vector.load %arg17[%c0_53, %c0_54] : memref<1x128xf32, #tpu.memory_space<vmem>>, vector<1x128xf32>
    %100 = vector.broadcast %99 : vector<1x128xf32> to vector<8x128xf32>
    %101 = arith.addf %98, %100 : vector<8x128xf32>
    %c0_55 = arith.constant 0 : index
    %c0_56 = arith.constant 0 : index
    %102 = vector.load %arg25[%c0_55, %c0_56] : memref<8x128xf32, #tpu.memory_space<vmem>>, vector<8x128xf32>
    %103 = arith.addf %101, %102 : vector<8x128xf32>
    %c0_57 = arith.constant 0 : index
    %c0_58 = arith.constant 0 : index
    %c0_59 = arith.constant 0 : index
    %104 = vector.load %arg19[%c0_57, %c0_58, %c0_59] : memref<1x8x128xf32, #tpu.memory_space<vmem>>, vector<1x8x128xf32>
    %105 = vector.shape_cast %104 : vector<1x8x128xf32> to vector<8x128xf32>
    %106 = vector.shape_cast %103 : vector<8x128xf32> to vector<1x8x128xf32>
    tpu.vector_store %arg19[%c0_57, %c0_58, %c0_59], %106 {strides = array<i32>} : memref<1x8x128xf32, #tpu.memory_space<vmem>>, vector<1x8x128xf32>,
    %107 = tpu.iota {dimensions = array<i32: 1>} : vector<8x128xi32>
    %cst_60 = arith.constant dense<0xFF800000> : vector<8xf32>
    %108 = vector.multi_reduction <maximumf>, %103, %cst_60 [1] : vector<8x128xf32> to vector<8xf32>
    %109 = vector.shape_cast %108 : vector<8xf32> to vector<8x1xf32>
    %110 = vector.broadcast %109 : vector<8x1xf32> to vector<8x128xf32>
    %111 = arith.cmpf oeq, %103, %110 : vector<8x128xf32>
    %c128_i32 = arith.constant 128 : i32
    %112 = vector.broadcast %c128_i32 : i32 to vector<8x128xi32>
    %113 = arith.select %111, %107, %112 : vector<8x128xi1>, vector<8x128xi32>
    %cst_61 = arith.constant dense<2147483647> : vector<8xi32>
    %114 = vector.multi_reduction <minsi>, %113, %cst_61 [1] : vector<8x128xi32> to vector<8xi32>
    %115 = vector.shape_cast %114 : vector<8xi32> to vector<8x1xi32>
    %116 = vector.broadcast %115 : vector<8x1xi32> to vector<8x128xi32>
    %117 = arith.cmpi eq, %107, %116 : vector<8x128xi32>
    %118 = arith.extui %117 : vector<8x128xi1> to vector<8x128xi32>
    %119 = arith.sitofp %118 : vector<8x128xi32> to vector<8x128xf32>
    %c0_62 = arith.constant 0 : index
    %c0_63 = arith.constant 0 : index
    %120 = vector.load %arg18[%c0_62, %c0_63] : memref<128x128xf32, #tpu.memory_space<vmem>>, vector<128x128xf32>
    %cst_64 = arith.constant dense<0.000000e+00> : vector<8x128xf32>
    %121 = tpu.matmul %119, %120, %cst_64 {dimension_numbers = #tpu.dot_dimension_numbers<[1], [0], [0], [1], [0, 0, 1, 1], [], []>} : vector<8x128xf32>, vector<128x128xf32>, vector<8x128xf32> -> vector<8x128xf32>
    %c0_65 = arith.constant 0 : index
    %c0_66 = arith.constant 0 : index
    %122 = vector.load %arg22[%c0_65, %c0_66] : memref<8x128xf32, #tpu.memory_space<vmem>>, vector<8x128xf32>
    tpu.vector_store %arg22[%c0_65, %c0_66], %121 {strides = array<i32>} : memref<8x128xf32, #tpu.memory_space<vmem>>, vector<8x128xf32>,
    %123 = arith.index_cast %arg1 : i32 to index
    %c0_67 = arith.constant 0 : index
    %c0_68 = arith.constant 0 : index
    %124 = vector.load %arg23[%123, %c0_67, %c0_68] : memref<5x8x128xf32, #tpu.memory_space<vmem>>, vector<1x8x128xf32>
    %125 = vector.shape_cast %124 : vector<1x8x128xf32> to vector<8x128xf32>
    %126 = vector.shape_cast %121 : vector<8x128xf32> to vector<1x8x128xf32>
    tpu.vector_store %arg23[%123, %c0_67, %c0_68], %126 {strides = array<i32>} : memref<5x8x128xf32, #tpu.memory_space<vmem>>, vector<1x8x128xf32>,
    %c0_69 = arith.constant 0 : index
    %c0_70 = arith.constant 0 : index
    %127 = vector.load %arg11[%c0_69, %c0_70] : memref<128x128xf32, #tpu.memory_space<vmem>>, vector<128x128xf32>
    %cst_71 = arith.constant dense<0.000000e+00> : vector<8x128xf32>
    %128 = tpu.matmul %121, %127, %cst_71 {dimension_numbers = #tpu.dot_dimension_numbers<[1], [0], [0], [1], [0, 0, 1, 1], [], []>} : vector<8x128xf32>, vector<128x128xf32>, vector<8x128xf32> -> vector<8x128xf32>
    %c0_72 = arith.constant 0 : index
    %c0_73 = arith.constant 0 : index
    %129 = vector.load %arg12[%c0_72, %c0_73] : memref<1x128xf32, #tpu.memory_space<vmem>>, vector<1x128xf32>
    %130 = vector.broadcast %129 : vector<1x128xf32> to vector<8x128xf32>
    %131 = arith.addf %128, %130 : vector<8x128xf32>
    %cst_74 = arith.constant 0.000000e+00 : f32
    %132 = vector.broadcast %cst_74 : f32 to vector<8x128xf32>
    %133 = arith.maximumf %131, %132 : vector<8x128xf32>
    %c0_75 = arith.constant 0 : index
    %c0_76 = arith.constant 0 : index
    %134 = vector.load %arg13[%c0_75, %c0_76] : memref<1x128xf32, #tpu.memory_space<vmem>>, vector<1x128xf32>
    %135 = vector.broadcast %134 : vector<1x128xf32> to vector<8x128xf32>
    %136 = arith.mulf %133, %135 : vector<8x128xf32>
    %cst_77 = arith.constant dense<0.000000e+00> : vector<8xf32>
    %137 = vector.multi_reduction <add>, %136, %cst_77 [1] : vector<8x128xf32> to vector<8xf32>
    %138 = vector.shape_cast %137 : vector<8xf32> to vector<8x1xf32>
    %139 = arith.index_cast %arg1 : i32 to index
    %c0_78 = arith.constant 0 : index
    %c0_79 = arith.constant 0 : index
    %140 = vector.load %arg24[%139, %c0_78, %c0_79] : memref<5x8x1xf32, #tpu.memory_space<vmem>>, vector<1x8x1xf32>
    %141 = vector.shape_cast %140 : vector<1x8x1xf32> to vector<8x1xf32>
    %142 = vector.shape_cast %138 : vector<8x1xf32> to vector<1x8x1xf32>
    tpu.vector_store %arg24[%139, %c0_78, %c0_79], %142 {strides = array<i32>} : memref<5x8x1xf32, #tpu.memory_space<vmem>>, vector<1x8x1xf32>,
    %cst_80 = arith.constant 0.000000e+00 : f32
    %143 = vector.broadcast %cst_80 : f32 to vector<8x128xf32>
    %144 = arith.cmpf ogt, %119, %143 : vector<8x128xf32>
    %c0_81 = arith.constant 0 : index
    %c0_82 = arith.constant 0 : index
    %145 = vector.load %arg25[%c0_81, %c0_82] : memref<8x128xf32, #tpu.memory_space<vmem>>, vector<8x128xf32>
    %cst_83 = arith.constant -1.000000e+07 : f32
    %146 = vector.broadcast %cst_83 : f32 to vector<8x128xf32>
    %147 = arith.select %144, %146, %145 : vector<8x128xi1>, vector<8x128xf32>
    %c1_i32_84 = arith.constant 1 : i32
    %148 = vector.broadcast %c1_i32_84 : i32 to vector<8x128xi32>
    %149 = arith.cmpi eq, %107, %148 : vector<8x128xi32>
    %cst_85 = arith.constant 0.000000e+00 : f32
    %150 = vector.broadcast %cst_85 : f32 to vector<8x128xf32>
    %151 = arith.select %149, %150, %147 : vector<8x128xi1>, vector<8x128xf32>
    %c0_86 = arith.constant 0 : index
    %c0_87 = arith.constant 0 : index
    %152 = vector.load %arg25[%c0_86, %c0_87] : memref<8x128xf32, #tpu.memory_space<vmem>>, vector<8x128xf32>
    tpu.vector_store %arg25[%c0_86, %c0_87], %151 {strides = array<i32>} : memref<8x128xf32, #tpu.memory_space<vmem>>, vector<8x128xf32>,
    return
  }
  func.func @transform_0(%arg0: i32, %arg1: i32) -> (i32, i32, i32) {
    %c0_i32 = arith.constant 0 : i32
    %c0_i32_0 = arith.constant 0 : i32
    %c0_i32_1 = arith.constant 0 : i32
    return %arg0, %c0_i32, %c0_i32_0 : i32, i32, i32
  }
  func.func @transform_1(%arg0: i32, %arg1: i32) -> (i32, i32) {
    %c0_i32 = arith.constant 0 : i32
    %c0_i32_0 = arith.constant 0 : i32
    return %arg0, %c0_i32 : i32, i32
  }
  func.func @transform_2(%arg0: i32, %arg1: i32) -> (i32, i32) {
    %c0_i32 = arith.constant 0 : i32
    %c0_i32_0 = arith.constant 0 : i32
    return %arg0, %c0_i32 : i32, i32
  }
  func.func @transform_3(%arg0: i32, %arg1: i32) -> (i32, i32) {
    %c0_i32 = arith.constant 0 : i32
    %c0_i32_0 = arith.constant 0 : i32
    return %arg0, %c0_i32 : i32, i32
  }
  func.func @transform_4(%arg0: i32, %arg1: i32) -> (i32, i32) {
    %c0_i32 = arith.constant 0 : i32
    %c0_i32_0 = arith.constant 0 : i32
    %c0_i32_1 = arith.constant 0 : i32
    return %c0_i32, %c0_i32_0 : i32, i32
  }
  func.func @transform_5(%arg0: i32, %arg1: i32) -> (i32, i32) {
    %c0_i32 = arith.constant 0 : i32
    %c0_i32_0 = arith.constant 0 : i32
    %c0_i32_1 = arith.constant 0 : i32
    return %c0_i32, %c0_i32_0 : i32, i32
  }
  func.func @transform_6(%arg0: i32, %arg1: i32) -> (i32, i32) {
    %c0_i32 = arith.constant 0 : i32
    %c0_i32_0 = arith.constant 0 : i32
    %c0_i32_1 = arith.constant 0 : i32
    return %c0_i32, %c0_i32_0 : i32, i32
  }
  func.func @transform_7(%arg0: i32, %arg1: i32) -> (i32, i32) {
    %c0_i32 = arith.constant 0 : i32
    %c0_i32_0 = arith.constant 0 : i32
    %c0_i32_1 = arith.constant 0 : i32
    return %c0_i32, %c0_i32_0 : i32, i32
  }
  func.func @transform_8(%arg0: i32, %arg1: i32) -> (i32, i32) {
    %c0_i32 = arith.constant 0 : i32
    %c0_i32_0 = arith.constant 0 : i32
    %c0_i32_1 = arith.constant 0 : i32
    return %c0_i32, %c0_i32_0 : i32, i32
  }
  func.func @transform_9(%arg0: i32, %arg1: i32) -> (i32, i32) {
    %c0_i32 = arith.constant 0 : i32
    %c0_i32_0 = arith.constant 0 : i32
    %c0_i32_1 = arith.constant 0 : i32
    return %c0_i32, %c0_i32_0 : i32, i32
  }
  func.func @transform_10(%arg0: i32, %arg1: i32) -> (i32, i32) {
    %c0_i32 = arith.constant 0 : i32
    %c0_i32_0 = arith.constant 0 : i32
    %c0_i32_1 = arith.constant 0 : i32
    return %c0_i32, %c0_i32_0 : i32, i32
  }
  func.func @transform_11(%arg0: i32, %arg1: i32) -> (i32, i32) {
    %c0_i32 = arith.constant 0 : i32
    %c0_i32_0 = arith.constant 0 : i32
    %c0_i32_1 = arith.constant 0 : i32
    return %c0_i32, %c0_i32_0 : i32, i32
  }
  func.func @transform_12(%arg0: i32, %arg1: i32) -> (i32, i32) {
    %c0_i32 = arith.constant 0 : i32
    %c0_i32_0 = arith.constant 0 : i32
    %c0_i32_1 = arith.constant 0 : i32
    return %c0_i32, %c0_i32_0 : i32, i32
  }
  func.func @transform_13(%arg0: i32, %arg1: i32) -> (i32, i32) {
    %c0_i32 = arith.constant 0 : i32
    %c0_i32_0 = arith.constant 0 : i32
    %c0_i32_1 = arith.constant 0 : i32
    return %c0_i32, %c0_i32_0 : i32, i32
  }
  func.func @transform_14(%arg0: i32, %arg1: i32) -> (i32, i32) {
    %c0_i32 = arith.constant 0 : i32
    %c0_i32_0 = arith.constant 0 : i32
    %c0_i32_1 = arith.constant 0 : i32
    return %c0_i32, %c0_i32_0 : i32, i32
  }
  func.func @transform_15(%arg0: i32, %arg1: i32) -> (i32, i32) {
    %c0_i32 = arith.constant 0 : i32
    %c0_i32_0 = arith.constant 0 : i32
    %c0_i32_1 = arith.constant 0 : i32
    return %c0_i32, %c0_i32_0 : i32, i32
  }
  func.func @transform_16(%arg0: i32, %arg1: i32) -> (i32, i32) {
    %c0_i32 = arith.constant 0 : i32
    %c0_i32_0 = arith.constant 0 : i32
    %c0_i32_1 = arith.constant 0 : i32
    return %c0_i32, %c0_i32_0 : i32, i32
  }
  func.func @transform_17(%arg0: i32, %arg1: i32) -> (i32, i32, i32) {
    %c0_i32 = arith.constant 0 : i32
    %c0_i32_0 = arith.constant 0 : i32
    return %arg1, %arg0, %c0_i32 : i32, i32, i32
  }
}

</mosaic_0001>

<llo_original>
// kernel: tpu_custom_call.1
$region0: #{tpu_custom_call.1}
  #allocation0 [shape = 'u32[]', space=smem, size = 0x4, offset = 0x4, fixed_abs, tag = 'smem constant byte address 0x4 - core index']
  #allocation1 [shape = 'u32[144,128]{1,0:T(1,128)}', space=vmem, size = 0x12000, scoped, tag = 'internal scratch']
  #allocation2 [shape = 'f32[8,128]{1,0:T(8,128)}', space=vmem, size = 0x1000, scoped, tag = 'scratch operand']
  #allocation3 [shape = 'f32[8,128]{1,0:T(8,128)}', space=vmem, size = 0x1000, scoped, tag = 'scratch operand']
  #allocation4 [shape = 'f32[8,128]{1,0:T(8,128)}', space=vmem, size = 0x1000, scoped, tag = 'scratch operand']
  #allocation5 [shape = 'f32[5,8,128]{2,1,0:T(8,128)}', space=vmem, size = 0x5000, scoped, tag = 'scratch operand']
  #allocation6 [shape = 'f32[5,8,1]{2,1,0:T(8,128)}', space=vmem, size = 0x5000, scoped, tag = 'scratch operand']
  #allocation7 [shape = 'f32[8,128]{1,0:T(8,128)}', space=vmem, size = 0x1000, scoped, tag = 'scratch operand']
  %s0 = inlined_call_operand.hbm [shape: f32[8,8,128], index: 0, kind: input, shape index: {}]
  %s1 = inlined_call_operand.hbm [shape: f32[8,8], index: 1, kind: input, shape index: {}]
  %s2 = inlined_call_operand.hbm [shape: f32[8,128], index: 2, kind: input, shape index: {}]
  %s3 = inlined_call_operand.hbm [shape: f32[8,128], index: 3, kind: input, shape index: {}]
  %s4 = inlined_call_operand.hbm [shape: f32[128,512], index: 4, kind: input, shape index: {}]
  %s5 = inlined_call_operand.hbm [shape: f32[128,512], index: 5, kind: input, shape index: {}]
  %s6 = inlined_call_operand.vmem [shape: f32[1,512], index: 6, kind: input, shape index: {}]
  %s7 = inlined_call_operand.hbm [shape: f32[128,128], index: 7, kind: input, shape index: {}]
  %s8 = inlined_call_operand.vmem [shape: f32[1,128], index: 8, kind: input, shape index: {}]
  %s9 = inlined_call_operand.hbm [shape: f32[128,128], index: 9, kind: input, shape index: {}]
  %s10 = inlined_call_operand.vmem [shape: f32[1,128], index: 10, kind: input, shape index: {}]
  %s11 = inlined_call_operand.vmem [shape: f32[1,128], index: 11, kind: input, shape index: {}]
  %s12 = inlined_call_operand.hbm [shape: f32[256,128], index: 12, kind: input, shape index: {}]
  %s13 = inlined_call_operand.vmem [shape: f32[1,128], index: 13, kind: input, shape index: {}]
  %s14 = inlined_call_operand.hbm [shape: f32[128,128], index: 14, kind: input, shape index: {}]
  %s15 = inlined_call_operand.vmem [shape: f32[1,128], index: 15, kind: input, shape index: {}]
  %s16 = inlined_call_operand.hbm [shape: f32[128,128], index: 16, kind: input, shape index: {}]
  %s17 = inlined_call_operand.hbm [shape: f32[5,8,128], index: 17, kind: output, shape index: {}]
  %s18 = sld [smem:[#allocation0]]
  $region149: #{tpu_custom_call.1} parent=0
    _
  %s20 = ssub.s32 1, %s18
  %s21 = scalar_select 0, %s20, %s18
  $region1: #{tpu_custom_call.1} parent=0
    #allocation8 [shape = 'u8[32768]{0}', space=vmem, size = 0x8000, scoped, tag = 'input window, operand 0, single buffered']
    #allocation9 [shape = 's32[2]{0}', space=sflag, size = 0x8, scoped, tag = 'scoped memory for tpu_custom_call.1']
    #allocation10 [shape = 's32[2]{0}', space=sflag, size = 0x8, scoped, tag = 'scoped memory for tpu_custom_call.1']
    #allocation11 [shape = 'u8[4096]{0}', space=vmem, size = 0x1000, scoped, tag = 'input window, operand 1, single buffered']
    #allocation12 [shape = 's32[1]{0}', space=sflag, size = 0x4, scoped, tag = 'scoped memory for tpu_custom_call.1']
    #allocation13 [shape = 'u8[4096]{0}', space=vmem, size = 0x1000, scoped, tag = 'input window, operand 2, single buffered']
    #allocation14 [shape = 'u8[4096]{0}', space=vmem, size = 0x1000, scoped, tag = 'input window, operand 3, single buffered']
    #allocation15 [shape = 's32[1]{0}', space=sflag, size = 0x4, scoped, tag = 'scoped memory for tpu_custom_call.1']
    #allocation16 [shape = 'u8[262144]{0}', space=vmem, size = 0x40000, scoped, tag = 'input window, operand 4, single buffered']
    #allocation17 [shape = 'u8[262144]{0}', space=vmem, size = 0x40000, scoped, tag = 'input window, operand 5, single buffered']
    #allocation18 [shape = 's32[1]{0}', space=sflag, size = 0x4, scoped, tag = 'scoped memory for tpu_custom_call.1']
    #allocation19 [shape = 'u8[65536]{0}', space=vmem, size = 0x10000, scoped, tag = 'input window, operand 7, single buffered']
    #allocation20 [shape = 'u8[65536]{0}', space=vmem, size = 0x10000, scoped, tag = 'input window, operand 9, single buffered']
    #allocation21 [shape = 's32[1]{0}', space=sflag, size = 0x4, scoped, tag = 'scoped memory for tpu_custom_call.1']
    #allocation22 [shape = 'u8[131072]{0}', space=vmem, size = 0x20000, scoped, tag = 'input window, operand 12, single buffered']
    #allocation23 [shape = 'u8[65536]{0}', space=vmem, size = 0x10000, scoped, tag = 'input window, operand 14, single buffered']
    #allocation24 [shape = 's32[1]{0}', space=sflag, size = 0x4, scoped, tag = 'scoped memory for tpu_custom_call.1']
    #allocation25 [shape = 'u8[65536]{0}', space=vmem, size = 0x10000, scoped, tag = 'input window, operand 16, single buffered']
    #allocation26 [shape = 'u8[8192]{0}', space=vmem, size = 0x2000, scoped, tag = 'output window, operand 0']
    %22 = vsyncpa [#allocation9], 0
    %23 = vsyncpa [#allocation12], 0
    %24 = vsyncpa [#allocation15], 0
    %25 = vsyncpa [#allocation18], 0
    %26 = vsyncpa [#allocation21], 0
    %27 = vsyncpa [#allocation24], 0
    %28 = vsyncpa [#allocation10], 0
    %s29 = scalar_lea.sflag [#allocation10], 1
    %30 = vsyncpa %s29, 0
    loop: start=0, step=1, limit=7
    $region2: #{tpu_custom_call.1} parent=1 // loop_pre_header
      _
    $region3: #{tpu_custom_call.1} parent=1 // loop_header
      %s32 = sphi 0, %s36
      %p33 = scmp.ge.s32.totalorder %s32, 7
      %s39 = sphi 0, %s51
      %s40 = sphi 0, %s47
      %s41 = sphi 0, %s39
      %s42 = sphi 0, %s40
      %s43 = sphi 0, %s41
      %s44 = sphi 0, %s42
      %s54 = sphi 0, %s56
      %s57 = sphi 0, %s54
      %s58 = sphi 0, %s57
      %s74 = sphi 0, %s58
      %s80 = sphi 0, %s82
      %s83 = sphi 0, %s80
      %s84 = sphi 0, %s83
      %s100 = sphi 0, %s84
      %s106 = sphi 0, %s108
      %s109 = sphi 0, %s106
      %s110 = sphi 0, %s109
      %s126 = sphi 0, %s110
      %s132 = sphi 0, %s134
      %s135 = sphi 0, %s132
      %s136 = sphi 0, %s135
      %s152 = sphi 0, %s136
      %s156 = sphi 0, %s156
      %s158 = sphi 0, %s156
      %s159 = sphi 0, %s158
      %s173 = sphi 0, %s159
      %s177 = sphi 0, %s177
      %s179 = sphi 0, %s177
      %s180 = sphi 0, %s179
      %s194 = sphi 0, %s180
      %s198 = sphi 0, %s198
      %s200 = sphi 0, %s198
      %s201 = sphi 0, %s200
      %s215 = sphi 0, %s201
      %s219 = sphi 0, %s219
      %s221 = sphi 0, %s219
      %s222 = sphi 0, %s221
      %s236 = sphi 0, %s222
      %s240 = sphi 0, %s240
      %s242 = sphi 0, %s240
      %s243 = sphi 0, %s242
      %s257 = sphi 0, %s243
      %s261 = sphi 0, %s261
      %s263 = sphi 0, %s261
      %s264 = sphi 0, %s263
      %s278 = sphi 0, %s264
      %s282 = sphi 0, %s282
      %s284 = sphi 0, %s282
      %s285 = sphi 0, %s284
      %s299 = sphi 0, %s285
      %s303 = sphi 0, %s303
      %s305 = sphi 0, %s303
      %s306 = sphi 0, %s305
      %s320 = sphi 0, %s306
      %s324 = sphi 0, %s324
      %s326 = sphi 0, %s324
      %s327 = sphi 0, %s326
      %s341 = sphi 0, %s327
      %s345 = sphi 0, %s345
      %s347 = sphi 0, %s345
      %s348 = sphi 0, %s347
      %s362 = sphi 0, %s348
      %s366 = sphi 0, %s366
      %s368 = sphi 0, %s366
      %s369 = sphi 0, %s368
      %s383 = sphi 0, %s369
      %s387 = sphi 0, %s387
      %s389 = sphi 0, %s387
      %s390 = sphi 0, %s389
      %s404 = sphi 0, %s390
      %s408 = sphi 0, %s408
      %s410 = sphi 0, %s408
      %s411 = sphi 0, %s410
      %s425 = sphi 0, %s411
      %s433 = sphi 0, %s435
      %s436 = sphi 0, %s433
      %s437 = sphi 0, %s436
      %s453 = sphi 0, %s437
    $region4: #{tpu_custom_call.1} parent=1 // loop_header_branch
      %35 = sbr.rel (%p33) target = $region8
    $region5: #{tpu_custom_call.1} parent=1 // loop_body
      %s37 = ssub.s32 %s32, 1
      %s38 = ssub.s32 %s32, 2
      %s45 = sadd.s32 1, %s40
      %p46 = scmp.ge.s32.totalorder %s45, 5
      %s47 = scalar_select %p46, 0, %s45
      %s48 = sadd.s32 1, %s39
      %s49 = scalar_select %p46, %s48, %s39
      %p50 = scmp.ge.s32.totalorder %s49, 1
      %s51 = scalar_select %p50, 0, %s49
      %s52 = ssub.s32 %s39, %s51
      %p53 = scmp.eq.s32.totalorder %s52, 0
      %s55 = sadd.s32 %s54, 1
      %s56 = scalar_select %p53, %s54, %s55
      %p59 = pneg %p53
      %p60 = scmp.eq.s32.totalorder %s32, 4
      %p61 = por %p59, %p60
      %p62 = scmp.ne.s32.totalorder %s54, %s57
      %p63 = scmp.eq.s32.totalorder %s32, 0
      %p64 = por %p62, %p63
      %p65 = scmp.ne.s32.totalorder %s54, %s57
      %p66 = scmp.eq.s32.totalorder %s37, 4
      %p67 = por %p65, %p66
      %p68 = scmp.ne.s32.totalorder %s57, %s58
      %p69 = scmp.eq.s32.totalorder %s37, 0
      %p70 = por %p68, %p69
      %p71 = scmp.ne.s32.totalorder %s57, %s58
      %p72 = scmp.eq.s32.totalorder %s38, 4
      %p73 = por %p71, %p72
      %p75 = scmp.ne.s32.totalorder %s58, %s74
      %p76 = scmp.eq.s32.totalorder %s38, 0
      %p77 = por %p75, %p76
      %s78 = ssub.s32 %s39, %s51
      %p79 = scmp.eq.s32.totalorder %s78, 0
      %s81 = sadd.s32 %s80, 1
      %s82 = scalar_select %p79, %s80, %s81
      %p85 = pneg %p79
      %p86 = scmp.eq.s32.totalorder %s32, 4
      %p87 = por %p85, %p86
      %p88 = scmp.ne.s32.totalorder %s80, %s83
      %p89 = scmp.eq.s32.totalorder %s32, 0
      %p90 = por %p88, %p89
      %p91 = scmp.ne.s32.totalorder %s80, %s83
      %p92 = scmp.eq.s32.totalorder %s37, 4
      %p93 = por %p91, %p92
      %p94 = scmp.ne.s32.totalorder %s83, %s84
      %p95 = scmp.eq.s32.totalorder %s37, 0
      %p96 = por %p94, %p95
      %p97 = scmp.ne.s32.totalorder %s83, %s84
      %p98 = scmp.eq.s32.totalorder %s38, 4
      %p99 = por %p97, %p98
      %p101 = scmp.ne.s32.totalorder %s84, %s100
      %p102 = scmp.eq.s32.totalorder %s38, 0
      %p103 = por %p101, %p102
      %s104 = ssub.s32 %s39, %s51
      %p105 = scmp.eq.s32.totalorder %s104, 0
      %s107 = sadd.s32 %s106, 1
      %s108 = scalar_select %p105, %s106, %s107
      %p111 = pneg %p105
      %p112 = scmp.eq.s32.totalorder %s32, 4
      %p113 = por %p111, %p112
      %p114 = scmp.ne.s32.totalorder %s106, %s109
      %p115 = scmp.eq.s32.totalorder %s32, 0
      %p116 = por %p114, %p115
      %p117 = scmp.ne.s32.totalorder %s106, %s109
      %p118 = scmp.eq.s32.totalorder %s37, 4
      %p119 = por %p117, %p118
      %p120 = scmp.ne.s32.totalorder %s109, %s110
      %p121 = scmp.eq.s32.totalorder %s37, 0
      %p122 = por %p120, %p121
      %p123 = scmp.ne.s32.totalorder %s109, %s110
      %p124 = scmp.eq.s32.totalorder %s38, 4
      %p125 = por %p123, %p124
      %p127 = scmp.ne.s32.totalorder %s110, %s126
      %p128 = scmp.eq.s32.totalorder %s38, 0
      %p129 = por %p127, %p128
      %s130 = ssub.s32 %s39, %s51
      %p131 = scmp.eq.s32.totalorder %s130, 0
      %s133 = sadd.s32 %s132, 1
      %s134 = scalar_select %p131, %s132, %s133
      %p137 = pneg %p131
      %p138 = scmp.eq.s32.totalorder %s32, 4
      %p139 = por %p137, %p138
      %p140 = scmp.ne.s32.totalorder %s132, %s135
      %p141 = scmp.eq.s32.totalorder %s32, 0
      %p142 = por %p140, %p141
      %p143 = scmp.ne.s32.totalorder %s132, %s135
      %p144 = scmp.eq.s32.totalorder %s37, 4
      %p145 = por %p143, %p144
      %p146 = scmp.ne.s32.totalorder %s135, %s136
      %p147 = scmp.eq.s32.totalorder %s37, 0
      %p148 = por %p146, %p147
      %p149 = scmp.ne.s32.totalorder %s135, %s136
      %p150 = scmp.eq.s32.totalorder %s38, 4
      %p151 = por %p149, %p150
      %p153 = scmp.ne.s32.totalorder %s136, %s152
      %p154 = scmp.eq.s32.totalorder %s38, 0
      %p155 = por %p153, %p154
      %s157 = sadd.s32 %s156, 1
      %p160 = scmp.eq.s32.totalorder %s32, 4
      %p161 = scmp.ne.s32.totalorder %s156, %s158
      %p162 = scmp.eq.s32.totalorder %s32, 0
      %p163 = por %p161, %p162
      %p164 = scmp.ne.s32.totalorder %s156, %s158
      %p165 = scmp.eq.s32.totalorder %s37, 4
      %p166 = por %p164, %p165
      %p167 = scmp.ne.s32.totalorder %s158, %s159
      %p168 = scmp.eq.s32.totalorder %s37, 0
      %p169 = por %p167, %p168
      %p170 = scmp.ne.s32.totalorder %s158, %s159
      %p171 = scmp.eq.s32.totalorder %s38, 4
      %p172 = por %p170, %p171
      %p174 = scmp.ne.s32.totalorder %s159, %s173
      %p175 = scmp.eq.s32.totalorder %s38, 0
      %p176 = por %p174, %p175
      %s178 = sadd.s32 %s177, 1
      %p181 = scmp.eq.s32.totalorder %s32, 4
      %p182 = scmp.ne.s32.totalorder %s177, %s179
      %p183 = scmp.eq.s32.totalorder %s32, 0
      %p184 = por %p182, %p183
      %p185 = scmp.ne.s32.totalorder %s177, %s179
      %p186 = scmp.eq.s32.totalorder %s37, 4
      %p187 = por %p185, %p186
      %p188 = scmp.ne.s32.totalorder %s179, %s180
      %p189 = scmp.eq.s32.totalorder %s37, 0
      %p190 = por %p188, %p189
      %p191 = scmp.ne.s32.totalorder %s179, %s180
      %p192 = scmp.eq.s32.totalorder %s38, 4
      %p193 = por %p191, %p192
      %p195 = scmp.ne.s32.totalorder %s180, %s194
      %p196 = scmp.eq.s32.totalorder %s38, 0
      %p197 = por %p195, %p196
      %s199 = sadd.s32 %s198, 1
      %p202 = scmp.eq.s32.totalorder %s32, 4
      %p203 = scmp.ne.s32.totalorder %s198, %s200
      %p204 = scmp.eq.s32.totalorder %s32, 0
      %p205 = por %p203, %p204
      %p206 = scmp.ne.s32.totalorder %s198, %s200
      %p207 = scmp.eq.s32.totalorder %s37, 4
      %p208 = por %p206, %p207
      %p209 = scmp.ne.s32.totalorder %s200, %s201
      %p210 = scmp.eq.s32.totalorder %s37, 0
      %p211 = por %p209, %p210
      %p212 = scmp.ne.s32.totalorder %s200, %s201
      %p213 = scmp.eq.s32.totalorder %s38, 4
      %p214 = por %p212, %p213
      %p216 = scmp.ne.s32.totalorder %s201, %s215
      %p217 = scmp.eq.s32.totalorder %s38, 0
      %p218 = por %p216, %p217
      %s220 = sadd.s32 %s219, 1
      %p223 = scmp.eq.s32.totalorder %s32, 4
      %p224 = scmp.ne.s32.totalorder %s219, %s221
      %p225 = scmp.eq.s32.totalorder %s32, 0
      %p226 = por %p224, %p225
      %p227 = scmp.ne.s32.totalorder %s219, %s221
      %p228 = scmp.eq.s32.totalorder %s37, 4
      %p229 = por %p227, %p228
      %p230 = scmp.ne.s32.totalorder %s221, %s222
      %p231 = scmp.eq.s32.totalorder %s37, 0
      %p232 = por %p230, %p231
      %p233 = scmp.ne.s32.totalorder %s221, %s222
      %p234 = scmp.eq.s32.totalorder %s38, 4
      %p235 = por %p233, %p234
      %p237 = scmp.ne.s32.totalorder %s222, %s236
      %p238 = scmp.eq.s32.totalorder %s38, 0
      %p239 = por %p237, %p238
      %s241 = sadd.s32 %s240, 1
      %p244 = scmp.eq.s32.totalorder %s32, 4
      %p245 = scmp.ne.s32.totalorder %s240, %s242
      %p246 = scmp.eq.s32.totalorder %s32, 0
      %p247 = por %p245, %p246
      %p248 = scmp.ne.s32.totalorder %s240, %s242
      %p249 = scmp.eq.s32.totalorder %s37, 4
      %p250 = por %p248, %p249
      %p251 = scmp.ne.s32.totalorder %s242, %s243
      %p252 = scmp.eq.s32.totalorder %s37, 0
      %p253 = por %p251, %p252
      %p254 = scmp.ne.s32.totalorder %s242, %s243
      %p255 = scmp.eq.s32.totalorder %s38, 4
      %p256 = por %p254, %p255
      %p258 = scmp.ne.s32.totalorder %s243, %s257
      %p259 = scmp.eq.s32.totalorder %s38, 0
      %p260 = por %p258, %p259
      %s262 = sadd.s32 %s261, 1
      %p265 = scmp.eq.s32.totalorder %s32, 4
      %p266 = scmp.ne.s32.totalorder %s261, %s263
      %p267 = scmp.eq.s32.totalorder %s32, 0
      %p268 = por %p266, %p267
      %p269 = scmp.ne.s32.totalorder %s261, %s263
      %p270 = scmp.eq.s32.totalorder %s37, 4
      %p271 = por %p269, %p270
      %p272 = scmp.ne.s32.totalorder %s263, %s264
      %p273 = scmp.eq.s32.totalorder %s37, 0
      %p274 = por %p272, %p273
      %p275 = scmp.ne.s32.totalorder %s263, %s264
      %p276 = scmp.eq.s32.totalorder %s38, 4
      %p277 = por %p275, %p276
      %p279 = scmp.ne.s32.totalorder %s264, %s278
      %p280 = scmp.eq.s32.totalorder %s38, 0
      %p281 = por %p279, %p280
      %s283 = sadd.s32 %s282, 1
      %p286 = scmp.eq.s32.totalorder %s32, 4
      %p287 = scmp.ne.s32.totalorder %s282, %s284
      %p288 = scmp.eq.s32.totalorder %s32, 0
      %p289 = por %p287, %p288
      %p290 = scmp.ne.s32.totalorder %s282, %s284
      %p291 = scmp.eq.s32.totalorder %s37, 4
      %p292 = por %p290, %p291
      %p293 = scmp.ne.s32.totalorder %s284, %s285
      %p294 = scmp.eq.s32.totalorder %s37, 0
      %p295 = por %p293, %p294
      %p296 = scmp.ne.s32.totalorder %s284, %s285
      %p297 = scmp.eq.s32.totalorder %s38, 4
      %p298 = por %p296, %p297
      %p300 = scmp.ne.s32.totalorder %s285, %s299
      %p301 = scmp.eq.s32.totalorder %s38, 0
      %p302 = por %p300, %p301
      %s304 = sadd.s32 %s303, 1
      %p307 = scmp.eq.s32.totalorder %s32, 4
      %p308 = scmp.ne.s32.totalorder %s303, %s305
      %p309 = scmp.eq.s32.totalorder %s32, 0
      %p310 = por %p308, %p309
      %p311 = scmp.ne.s32.totalorder %s303, %s305
      %p312 = scmp.eq.s32.totalorder %s37, 4
      %p313 = por %p311, %p312
      %p314 = scmp.ne.s32.totalorder %s305, %s306
      %p315 = scmp.eq.s32.totalorder %s37, 0
      %p316 = por %p314, %p315
      %p317 = scmp.ne.s32.totalorder %s305, %s306
      %p318 = scmp.eq.s32.totalorder %s38, 4
      %p319 = por %p317, %p318
      %p321 = scmp.ne.s32.totalorder %s306, %s320
      %p322 = scmp.eq.s32.totalorder %s38, 0
      %p323 = por %p321, %p322
      %s325 = sadd.s32 %s324, 1
      %p328 = scmp.eq.s32.totalorder %s32, 4
      %p329 = scmp.ne.s32.totalorder %s324, %s326
      %p330 = scmp.eq.s32.totalorder %s32, 0
      %p331 = por %p329, %p330
      %p332 = scmp.ne.s32.totalorder %s324, %s326
      %p333 = scmp.eq.s32.totalorder %s37, 4
      %p334 = por %p332, %p333
      %p335 = scmp.ne.s32.totalorder %s326, %s327
      %p336 = scmp.eq.s32.totalorder %s37, 0
      %p337 = por %p335, %p336
      %p338 = scmp.ne.s32.totalorder %s326, %s327
      %p339 = scmp.eq.s32.totalorder %s38, 4
      %p340 = por %p338, %p339
      %p342 = scmp.ne.s32.totalorder %s327, %s341
      %p343 = scmp.eq.s32.totalorder %s38, 0
      %p344 = por %p342, %p343
      %s346 = sadd.s32 %s345, 1
      %p349 = scmp.eq.s32.totalorder %s32, 4
      %p350 = scmp.ne.s32.totalorder %s345, %s347
      %p351 = scmp.eq.s32.totalorder %s32, 0
      %p352 = por %p350, %p351
      %p353 = scmp.ne.s32.totalorder %s345, %s347
      %p354 = scmp.eq.s32.totalorder %s37, 4
      %p355 = por %p353, %p354
      %p356 = scmp.ne.s32.totalorder %s347, %s348
      %p357 = scmp.eq.s32.totalorder %s37, 0
      %p358 = por %p356, %p357
      %p359 = scmp.ne.s32.totalorder %s347, %s348
      %p360 = scmp.eq.s32.totalorder %s38, 4
      %p361 = por %p359, %p360
      %p363 = scmp.ne.s32.totalorder %s348, %s362
      %p364 = scmp.eq.s32.totalorder %s38, 0
      %p365 = por %p363, %p364
      %s367 = sadd.s32 %s366, 1
      %p370 = scmp.eq.s32.totalorder %s32, 4
      %p371 = scmp.ne.s32.totalorder %s366, %s368
      %p372 = scmp.eq.s32.totalorder %s32, 0
      %p373 = por %p371, %p372
      %p374 = scmp.ne.s32.totalorder %s366, %s368
      %p375 = scmp.eq.s32.totalorder %s37, 4
      %p376 = por %p374, %p375
      %p377 = scmp.ne.s32.totalorder %s368, %s369
      %p378 = scmp.eq.s32.totalorder %s37, 0
      %p379 = por %p377, %p378
      %p380 = scmp.ne.s32.totalorder %s368, %s369
      %p381 = scmp.eq.s32.totalorder %s38, 4
      %p382 = por %p380, %p381
      %p384 = scmp.ne.s32.totalorder %s369, %s383
      %p385 = scmp.eq.s32.totalorder %s38, 0
      %p386 = por %p384, %p385
      %s388 = sadd.s32 %s387, 1
      %p391 = scmp.eq.s32.totalorder %s32, 4
      %p392 = scmp.ne.s32.totalorder %s387, %s389
      %p393 = scmp.eq.s32.totalorder %s32, 0
      %p394 = por %p392, %p393
      %p395 = scmp.ne.s32.totalorder %s387, %s389
      %p396 = scmp.eq.s32.totalorder %s37, 4
      %p397 = por %p395, %p396
      %p398 = scmp.ne.s32.totalorder %s389, %s390
      %p399 = scmp.eq.s32.totalorder %s37, 0
      %p400 = por %p398, %p399
      %p401 = scmp.ne.s32.totalorder %s389, %s390
      %p402 = scmp.eq.s32.totalorder %s38, 4
      %p403 = por %p401, %p402
      %p405 = scmp.ne.s32.totalorder %s390, %s404
      %p406 = scmp.eq.s32.totalorder %s38, 0
      %p407 = por %p405, %p406
      %s409 = sadd.s32 %s408, 1
      %p412 = scmp.eq.s32.totalorder %s32, 4
      %p413 = scmp.ne.s32.totalorder %s408, %s410
      %p414 = scmp.eq.s32.totalorder %s32, 0
      %p415 = por %p413, %p414
      %p416 = scmp.ne.s32.totalorder %s408, %s410
      %p417 = scmp.eq.s32.totalorder %s37, 4
      %p418 = por %p416, %p417
      %p419 = scmp.ne.s32.totalorder %s410, %s411
      %p420 = scmp.eq.s32.totalorder %s37, 0
      %p421 = por %p419, %p420
      %p422 = scmp.ne.s32.totalorder %s410, %s411
      %p423 = scmp.eq.s32.totalorder %s38, 4
      %p424 = por %p422, %p423
      %p426 = scmp.ne.s32.totalorder %s411, %s425
      %p427 = scmp.eq.s32.totalorder %s38, 0
      %p428 = por %p426, %p427
      %s429 = ssub.s32 %s40, %s47
      %s430 = ssub.s32 %s39, %s51
      %s431 = sor.u32 %s429, %s430
      %p432 = scmp.eq.s32.totalorder %s431, 0
      %s434 = sadd.s32 %s433, 1
      %s435 = scalar_select %p432, %s433, %s434
      %p438 = pneg %p432
      %p439 = scmp.eq.s32.totalorder %s32, 4
      %p440 = por %p438, %p439
      %p441 = scmp.ne.s32.totalorder %s433, %s436
      %p442 = scmp.eq.s32.totalorder %s32, 0
      %p443 = por %p441, %p442
      %p444 = scmp.ne.s32.totalorder %s433, %s436
      %p445 = scmp.eq.s32.totalorder %s37, 4
      %p446 = por %p444, %p445
      %p447 = scmp.ne.s32.totalorder %s436, %s437
      %p448 = scmp.eq.s32.totalorder %s37, 0
      %p449 = por %p447, %p448
      %p450 = scmp.ne.s32.totalorder %s436, %s437
      %p451 = scmp.eq.s32.totalorder %s38, 4
      %p452 = por %p450, %p451
      %p454 = scmp.ne.s32.totalorder %s437, %s453
      %p455 = scmp.eq.s32.totalorder %s38, 0
      %p456 = por %p454, %p455
      %p457 = scmp.le.s32.totalorder 1, %s32
      %p458 = scmp.lt.s32.totalorder %s32, 6
      %p459 = pnand %p457, %p458
      %p460 = pneg %p459
      // Predicated region
      $region9: #{tpu_custom_call.1} parent=5 // pred_check
        _
      $region10: #{tpu_custom_call.1} parent=5 // pred_check_branch
        %462 = sbr.rel (%p459) target = $region12
      $region11: #{tpu_custom_call.1} parent=5 // pred_region
        %s463 = ssub.s32 %s32, 1
        // Predicated region
        $region13: #{tpu_custom_call.1} parent=11 // pred_check
          %p464 = pneg %p70
        $region14: #{tpu_custom_call.1} parent=11 // pred_check_branch
          %466 = sbr.rel (%p464) target = $region16
        $region15: #{tpu_custom_call.1} parent=11 // pred_region
          %s467 = smul.u32 8, %s41
          %s469 = ssub.s32 1024, 1024
          %470 = vsyncadd [#allocation9], %s469
          %s471 = smul.addr %s467, 128
          %s472 = scalar_lea.hbm %s0, %s471
          %s473 = sshll.u32 [#allocation8], 4
          %s474 = int_to_ptr.vmem [resolvable:$true] %s473
          %479 = dma.hbm_to_vmem [thread:$0]  %s472, 1024, %s474, [#allocation9], 128, 128, 8
        $region16: #{tpu_custom_call.1} parent=11 // pred_fallthru
          _
        // Predicated region
        $region17: #{tpu_custom_call.1} parent=11 // pred_check
          %p480 = pneg %p96
        $region18: #{tpu_custom_call.1} parent=11 // pred_check_branch
          %482 = sbr.rel (%p480) target = $region20
        $region19: #{tpu_custom_call.1} parent=11 // pred_region
          %s484 = ssub.s32 128, 128
          %485 = vsyncadd [#allocation12], %s484
          %s486 = smul.addr %s41, 128
          %s487 = scalar_lea.hbm %s1, %s486
          %s489 = sshll.u32 [#allocation11], 4
          %s490 = int_to_ptr.vmem [resolvable:$true] %s489
          %492 = dma.hbm_to_vmem [thread:$0]  %s487, 128, %s490, [#allocation12]
        $region20: #{tpu_custom_call.1} parent=11 // pred_fallthru
          _
        // Predicated region
        $region21: #{tpu_custom_call.1} parent=11 // pred_check
          %p493 = pneg %p122
        $region22: #{tpu_custom_call.1} parent=11 // pred_check_branch
          %495 = sbr.rel (%p493) target = $region24
        $region23: #{tpu_custom_call.1} parent=11 // pred_region
          %s497 = ssub.s32 128, 128
          %498 = vsyncadd [#allocation12], %s497
          %s499 = smul.addr %s41, 128
          %s500 = scalar_lea.hbm %s2, %s499
          %s502 = sshll.u32 [#allocation13], 4
          %s503 = int_to_ptr.vmem [resolvable:$true] %s502
          %505 = dma.hbm_to_vmem [thread:$0]  %s500, 128, %s503, [#allocation12]
        $region24: #{tpu_custom_call.1} parent=11 // pred_fallthru
          _
        // Predicated region
        $region25: #{tpu_custom_call.1} parent=11 // pred_check
          %p506 = pneg %p148
        $region26: #{tpu_custom_call.1} parent=11 // pred_check_branch
          %508 = sbr.rel (%p506) target = $region28
        $region27: #{tpu_custom_call.1} parent=11 // pred_region
          %s510 = ssub.s32 128, 128
          %511 = vsyncadd [#allocation15], %s510
          %s512 = smul.addr %s41, 128
          %s513 = scalar_lea.hbm %s3, %s512
          %s515 = sshll.u32 [#allocation14], 4
          %s516 = int_to_ptr.vmem [resolvable:$true] %s515
          %518 = dma.hbm_to_vmem [thread:$0]  %s513, 128, %s516, [#allocation15]
        $region28: #{tpu_custom_call.1} parent=11 // pred_fallthru
          _
        // Predicated region
        $region29: #{tpu_custom_call.1} parent=11 // pred_check
          %p519 = pneg %p169
        $region30: #{tpu_custom_call.1} parent=11 // pred_check_branch
          %521 = sbr.rel (%p519) target = $region32
        $region31: #{tpu_custom_call.1} parent=11 // pred_region
          %s523 = ssub.s32 8192, 8192
          %524 = vsyncadd [#allocation15], %s523
          %s525 = sshll.u32 [#allocation16], 4
          %s526 = int_to_ptr.vmem [resolvable:$true] %s525
          %531 = dma.hbm_to_vmem [thread:$0]  %s4, 8192, %s526, [#allocation15], 512, 512, 32
        $region32: #{tpu_custom_call.1} parent=11 // pred_fallthru
          _
        // Predicated region
        $region33: #{tpu_custom_call.1} parent=11 // pred_check
          %p532 = pneg %p190
        $region34: #{tpu_custom_call.1} parent=11 // pred_check_branch
          %534 = sbr.rel (%p532) target = $region36
        $region35: #{tpu_custom_call.1} parent=11 // pred_region
          %s536 = ssub.s32 8192, 8192
          %537 = vsyncadd [#allocation18], %s536
          %s538 = sshll.u32 [#allocation17], 4
          %s539 = int_to_ptr.vmem [resolvable:$true] %s538
          %544 = dma.hbm_to_vmem [thread:$0]  %s5, 8192, %s539, [#allocation18], 512, 512, 32
        $region36: #{tpu_custom_call.1} parent=11 // pred_fallthru
          _
        // Predicated region
        $region37: #{tpu_custom_call.1} parent=11 // pred_check
          %p545 = pneg %p211
        $region38: #{tpu_custom_call.1} parent=11 // pred_check_branch
          %547 = sbr.rel (%p545) target = $region40
        $region39: #{tpu_custom_call.1} parent=11 // pred_region
          _
        $region40: #{tpu_custom_call.1} parent=11 // pred_fallthru
          _
        // Predicated region
        $region41: #{tpu_custom_call.1} parent=11 // pred_check
          %p548 = pneg %p232
        $region42: #{tpu_custom_call.1} parent=11 // pred_check_branch
          %550 = sbr.rel (%p548) target = $region44
        $region43: #{tpu_custom_call.1} parent=11 // pred_region
          %s552 = ssub.s32 2048, 2048
          %553 = vsyncadd [#allocation18], %s552
          %s554 = sshll.u32 [#allocation19], 4
          %s555 = int_to_ptr.vmem [resolvable:$true] %s554
          %560 = dma.hbm_to_vmem [thread:$0]  %s7, 2048, %s555, [#allocation18], 128, 128, 8
        $region44: #{tpu_custom_call.1} parent=11 // pred_fallthru
          _
        // Predicated region
        $region45: #{tpu_custom_call.1} parent=11 // pred_check
          %p561 = pneg %p253
        $region46: #{tpu_custom_call.1} parent=11 // pred_check_branch
          %563 = sbr.rel (%p561) target = $region48
        $region47: #{tpu_custom_call.1} parent=11 // pred_region
          _
        $region48: #{tpu_custom_call.1} parent=11 // pred_fallthru
          _
        // Predicated region
        $region49: #{tpu_custom_call.1} parent=11 // pred_check
          %p564 = pneg %p274
        $region50: #{tpu_custom_call.1} parent=11 // pred_check_branch
          %566 = sbr.rel (%p564) target = $region52
        $region51: #{tpu_custom_call.1} parent=11 // pred_region
          %s568 = ssub.s32 2048, 2048
          %569 = vsyncadd [#allocation21], %s568
          %s570 = sshll.u32 [#allocation20], 4
          %s571 = int_to_ptr.vmem [resolvable:$true] %s570
          %576 = dma.hbm_to_vmem [thread:$0]  %s9, 2048, %s571, [#allocation21], 128, 128, 8
        $region52: #{tpu_custom_call.1} parent=11 // pred_fallthru
          _
        // Predicated region
        $region53: #{tpu_custom_call.1} parent=11 // pred_check
          %p577 = pneg %p295
        $region54: #{tpu_custom_call.1} parent=11 // pred_check_branch
          %579 = sbr.rel (%p577) target = $region56
        $region55: #{tpu_custom_call.1} parent=11 // pred_region
          _
        $region56: #{tpu_custom_call.1} parent=11 // pred_fallthru
          _
        // Predicated region
        $region57: #{tpu_custom_call.1} parent=11 // pred_check
          %p580 = pneg %p316
        $region58: #{tpu_custom_call.1} parent=11 // pred_check_branch
          %582 = sbr.rel (%p580) target = $region60
        $region59: #{tpu_custom_call.1} parent=11 // pred_region
          _
        $region60: #{tpu_custom_call.1} parent=11 // pred_fallthru
          _
        // Predicated region
        $region61: #{tpu_custom_call.1} parent=11 // pred_check
          %p583 = pneg %p337
        $region62: #{tpu_custom_call.1} parent=11 // pred_check_branch
          %585 = sbr.rel (%p583) target = $region64
        $region63: #{tpu_custom_call.1} parent=11 // pred_region
          %s587 = ssub.s32 4096, 4096
          %588 = vsyncadd [#allocation21], %s587
          %s589 = sshll.u32 [#allocation22], 4
          %s590 = int_to_ptr.vmem [resolvable:$true] %s589
          %595 = dma.hbm_to_vmem [thread:$0]  %s12, 4096, %s590, [#allocation21], 128, 128, 8
        $region64: #{tpu_custom_call.1} parent=11 // pred_fallthru
          _
        // Predicated region
        $region65: #{tpu_custom_call.1} parent=11 // pred_check
          %p596 = pneg %p358
        $region66: #{tpu_custom_call.1} parent=11 // pred_check_branch
          %598 = sbr.rel (%p596) target = $region68
        $region67: #{tpu_custom_call.1} parent=11 // pred_region
          _
        $region68: #{tpu_custom_call.1} parent=11 // pred_fallthru
          _
        // Predicated region
        $region69: #{tpu_custom_call.1} parent=11 // pred_check
          %p599 = pneg %p379
        $region70: #{tpu_custom_call.1} parent=11 // pred_check_branch
          %601 = sbr.rel (%p599) target = $region72
        $region71: #{tpu_custom_call.1} parent=11 // pred_region
          %s603 = ssub.s32 2048, 2048
          %604 = vsyncadd [#allocation24], %s603
          %s605 = sshll.u32 [#allocation23], 4
          %s606 = int_to_ptr.vmem [resolvable:$true] %s605
          %611 = dma.hbm_to_vmem [thread:$0]  %s14, 2048, %s606, [#allocation24], 128, 128, 8
        $region72: #{tpu_custom_call.1} parent=11 // pred_fallthru
          _
        // Predicated region
        $region73: #{tpu_custom_call.1} parent=11 // pred_check
          %p612 = pneg %p400
        $region74: #{tpu_custom_call.1} parent=11 // pred_check_branch
          %614 = sbr.rel (%p612) target = $region76
        $region75: #{tpu_custom_call.1} parent=11 // pred_region
          _
        $region76: #{tpu_custom_call.1} parent=11 // pred_fallthru
          _
        // Predicated region
        $region77: #{tpu_custom_call.1} parent=11 // pred_check
          %p615 = pneg %p421
        $region78: #{tpu_custom_call.1} parent=11 // pred_check_branch
          %617 = sbr.rel (%p615) target = $region80
        $region79: #{tpu_custom_call.1} parent=11 // pred_region
          %s619 = ssub.s32 2048, 2048
          %620 = vsyncadd [#allocation24], %s619
          %s621 = sshll.u32 [#allocation25], 4
          %s622 = int_to_ptr.vmem [resolvable:$true] %s621
          %627 = dma.hbm_to_vmem [thread:$0]  %s16, 2048, %s622, [#allocation24], 128, 128, 8
        $region80: #{tpu_custom_call.1} parent=11 // pred_fallthru
          _
      $region12: #{tpu_custom_call.1} parent=5 // pred_fallthru
        _
      %p628 = scmp.lt.s32.totalorder %s32, 5
      // Predicated region
      $region81: #{tpu_custom_call.1} parent=5 // pred_check
        %p629 = pneg %p628
      $region82: #{tpu_custom_call.1} parent=5 // pred_check_branch
        %631 = sbr.rel (%p629) target = $region84
      $region83: #{tpu_custom_call.1} parent=5 // pred_region
        _
      $region84: #{tpu_custom_call.1} parent=5 // pred_fallthru
        _
      %p632 = scmp.le.s32.totalorder 1, %s32
      %p633 = scmp.lt.s32.totalorder %s32, 6
      %p634 = pnand %p632, %p633
      %p635 = pneg %p634
      // Predicated region
      $region85: #{tpu_custom_call.1} parent=5 // pred_check
        _
      $region86: #{tpu_custom_call.1} parent=5 // pred_check_branch
        %637 = sbr.rel (%p634) target = $region88
      $region87: #{tpu_custom_call.1} parent=5 // pred_region
        %s638 = ssub.s32 %s32, 1
        // Predicated region
        $region89: #{tpu_custom_call.1} parent=87 // pred_check
          %p639 = pneg %p70
        $region90: #{tpu_custom_call.1} parent=87 // pred_check_branch
          %641 = sbr.rel (%p639) target = $region92
        $region91: #{tpu_custom_call.1} parent=87 // pred_region
          %642 = dma.done [#allocation9], 1024
        $region92: #{tpu_custom_call.1} parent=87 // pred_fallthru
          _
        // Predicated region
        $region93: #{tpu_custom_call.1} parent=87 // pred_check
          %p643 = pneg %p96
        $region94: #{tpu_custom_call.1} parent=87 // pred_check_branch
          %645 = sbr.rel (%p643) target = $region96
        $region95: #{tpu_custom_call.1} parent=87 // pred_region
          %646 = dma.done [#allocation12], 128
        $region96: #{tpu_custom_call.1} parent=87 // pred_fallthru
          _
        // Predicated region
        $region97: #{tpu_custom_call.1} parent=87 // pred_check
          %p647 = pneg %p122
        $region98: #{tpu_custom_call.1} parent=87 // pred_check_branch
          %649 = sbr.rel (%p647) target = $region100
        $region99: #{tpu_custom_call.1} parent=87 // pred_region
          %650 = dma.done [#allocation12], 128
        $region100: #{tpu_custom_call.1} parent=87 // pred_fallthru
          _
        // Predicated region
        $region101: #{tpu_custom_call.1} parent=87 // pred_check
          %p651 = pneg %p148
        $region102: #{tpu_custom_call.1} parent=87 // pred_check_branch
          %653 = sbr.rel (%p651) target = $region104
        $region103: #{tpu_custom_call.1} parent=87 // pred_region
          %654 = dma.done [#allocation15], 128
        $region104: #{tpu_custom_call.1} parent=87 // pred_fallthru
          _
        // Predicated region
        $region105: #{tpu_custom_call.1} parent=87 // pred_check
          %p655 = pneg %p169
        $region106: #{tpu_custom_call.1} parent=87 // pred_check_branch
          %657 = sbr.rel (%p655) target = $region108
        $region107: #{tpu_custom_call.1} parent=87 // pred_region
          %658 = dma.done [#allocation15], 8192
        $region108: #{tpu_custom_call.1} parent=87 // pred_fallthru
          _
        // Predicated region
        $region109: #{tpu_custom_call.1} parent=87 // pred_check
          %p659 = pneg %p190
        $region110: #{tpu_custom_call.1} parent=87 // pred_check_branch
          %661 = sbr.rel (%p659) target = $region112
        $region111: #{tpu_custom_call.1} parent=87 // pred_region
          %662 = dma.done [#allocation18], 8192
        $region112: #{tpu_custom_call.1} parent=87 // pred_fallthru
          _
        // Predicated region
        $region113: #{tpu_custom_call.1} parent=87 // pred_check
          %p663 = pneg %p232
        $region114: #{tpu_custom_call.1} parent=87 // pred_check_branch
          %665 = sbr.rel (%p663) target = $region116
        $region115: #{tpu_custom_call.1} parent=87 // pred_region
          %666 = dma.done [#allocation18], 2048
        $region116: #{tpu_custom_call.1} parent=87 // pred_fallthru
          _
        // Predicated region
        $region117: #{tpu_custom_call.1} parent=87 // pred_check
          %p667 = pneg %p274
        $region118: #{tpu_custom_call.1} parent=87 // pred_check_branch
          %669 = sbr.rel (%p667) target = $region120
        $region119: #{tpu_custom_call.1} parent=87 // pred_region
          %670 = dma.done [#allocation21], 2048
        $region120: #{tpu_custom_call.1} parent=87 // pred_fallthru
          _
        // Predicated region
        $region121: #{tpu_custom_call.1} parent=87 // pred_check
          %p671 = pneg %p337
        $region122: #{tpu_custom_call.1} parent=87 // pred_check_branch
          %673 = sbr.rel (%p671) target = $region124
        $region123: #{tpu_custom_call.1} parent=87 // pred_region
          %674 = dma.done [#allocation21], 4096
        $region124: #{tpu_custom_call.1} parent=87 // pred_fallthru
          _
        // Predicated region
        $region125: #{tpu_custom_call.1} parent=87 // pred_check
          %p675 = pneg %p379
        $region126: #{tpu_custom_call.1} parent=87 // pred_check_branch
          %677 = sbr.rel (%p675) target = $region128
        $region127: #{tpu_custom_call.1} parent=87 // pred_region
          %678 = dma.done [#allocation24], 2048
        $region128: #{tpu_custom_call.1} parent=87 // pred_fallthru
          _
        // Predicated region
        $region129: #{tpu_custom_call.1} parent=87 // pred_check
          %p679 = pneg %p421
        $region130: #{tpu_custom_call.1} parent=87 // pred_check_branch
          %681 = sbr.rel (%p679) target = $region132
        $region131: #{tpu_custom_call.1} parent=87 // pred_region
          %682 = dma.done [#allocation24], 2048
        $region132: #{tpu_custom_call.1} parent=87 // pred_fallthru
          _
        %p683 = pneg %p70
        %p684 = pneg %p67
        %p685 = pneg %p96
        %p686 = pneg %p93
        %p687 = pneg %p122
        %p688 = pneg %p119
        %p689 = pneg %p148
        %p690 = pneg %p145
        %p691 = pneg %p169
        %p692 = pneg %p166
        %p693 = pneg %p190
        %p694 = pneg %p187
        %p695 = pneg %p211
        %p696 = pneg %p208
        %p697 = pneg %p232
        %p698 = pneg %p229
        %p699 = pneg %p253
        %p700 = pneg %p250
        %p701 = pneg %p274
        %p702 = pneg %p271
        %p703 = pneg %p295
        %p704 = pneg %p292
        %p705 = pneg %p316
        %p706 = pneg %p313
        %p707 = pneg %p337
        %p708 = pneg %p334
        %p709 = pneg %p358
        %p710 = pneg %p355
        %p711 = pneg %p379
        %p712 = pneg %p376
        %p713 = pneg %p400
        %p714 = pneg %p397
        %p715 = pneg %p421
        %p716 = pneg %p418
        %p717 = pneg %p449
        %p718 = pneg %p446
        %s719 = sand.u32 %s436, 1
        %s720 = scalar_lea.sflag [#allocation10], %s719
        %s721 = sand.u32 %s436, 1
        %s722 = smul.addr %s721, 8
        %s723 = scalar_lea.vmem [#allocation26], %s722
        %s724 = smul.u32 8, %s41
        %p725 = scmp.eq.s32.totalorder %s42, 0
        // Predicated region
        $region133: #{tpu_custom_call.1} parent=87 // pred_check
          %p726 = pneg %p725
        $region134: #{tpu_custom_call.1} parent=87 // pred_check_branch
          %728 = sbr.rel (%p726) target = $region136
        $region135: #{tpu_custom_call.1} parent=87 // pred_region
          %v729 = vld [vmem:[#allocation13] sm:$0xff]
          %730 = vst [vmem:[#allocation2] sm:$0xff] %v729
          %v731 = vld [vmem:[#allocation14] sm:$0xff]
          %732 = vst [vmem:[#allocation3] sm:$0xff] %v731
          %733 = vst [vmem:[#allocation4] sm:$0xff] 0.0
          %734 = vst [vmem:[#allocation5] sm:$0xff] 0.0
          %735 = vst [vmem:[#allocation5 + $0x8] sm:$0xff] 0.0
          %736 = vst [vmem:[#allocation5 + $0x10] sm:$0xff] 0.0
          %737 = vst [vmem:[#allocation5 + $0x18] sm:$0xff] 0.0
          %738 = vst [vmem:[#allocation5 + $0x20] sm:$0xff] 0.0
          %vm739 = vcmask 7168
          %740 = vst.msk [vmem:[#allocation6] sm:$0xff] %vm739, 0.0
          %741 = vst.msk [vmem:[#allocation6 + $0x8] sm:$0xff] %vm739, 0.0
          %742 = vst.msk [vmem:[#allocation6 + $0x10] sm:$0xff] %vm739, 0.0
          %743 = vst.msk [vmem:[#allocation6 + $0x18] sm:$0xff] %vm739, 0.0
          %744 = vst.msk [vmem:[#allocation6 + $0x20] sm:$0xff] %vm739, 0.0
          %745 = vst [vmem:[#allocation7] sm:$0xff] 0.0
        $region136: #{tpu_custom_call.1} parent=87 // pred_fallthru
          _
        %v746 = vld [vmem:[#allocation4] sm:$0xff]
        %v747 = vld [vmem:[#allocation16] sm:$0xff]
        %v748 = vld [vmem:[#allocation16 + $0x8] sm:$0xff]
        %v749 = vld [vmem:[#allocation16 + $0x10] sm:$0xff]
        %v750 = vld [vmem:[#allocation16 + $0x18] sm:$0xff]
        %v751 = vld [vmem:[#allocation16 + $0x20] sm:$0xff]
        %v752 = vld [vmem:[#allocation16 + $0x28] sm:$0xff]
        %v753 = vld [vmem:[#allocation16 + $0x30] sm:$0xff]
        %v754 = vld [vmem:[#allocation16 + $0x38] sm:$0xff]
        %v755 = vld [vmem:[#allocation16 + $0x40] sm:$0xff]
        %v756 = vld [vmem:[#allocation16 + $0x48] sm:$0xff]
        %v757 = vld [vmem:[#allocation16 + $0x50] sm:$0xff]
        %v758 = vld [vmem:[#allocation16 + $0x58] sm:$0xff]
        %v759 = vld [vmem:[#allocation16 + $0x60] sm:$0xff]
        %v760 = vld [vmem:[#allocation16 + $0x68] sm:$0xff]
        %v761 = vld [vmem:[#allocation16 + $0x70] sm:$0xff]
        %v762 = vld [vmem:[#allocation16 + $0x78] sm:$0xff]
        %v763 = vld [vmem:[#allocation16 + $0x80] sm:$0xff]
        %v764 = vld [vmem:[#allocation16 + $0x88] sm:$0xff]
        %v765 = vld [vmem:[#allocation16 + $0x90] sm:$0xff]
        %v766 = vld [vmem:[#allocation16 + $0x98] sm:$0xff]
        %v767 = vld [vmem:[#allocation16 + $0xa0] sm:$0xff]
        %v768 = vld [vmem:[#allocation16 + $0xa8] sm:$0xff]
        %v769 = vld [vmem:[#allocation16 + $0xb0] sm:$0xff]
        %v770 = vld [vmem:[#allocation16 + $0xb8] sm:$0xff]
        %v771 = vld [vmem:[#allocation16 + $0xc0] sm:$0xff]
        %v772 = vld [vmem:[#allocation16 + $0xc8] sm:$0xff]
        %v773 = vld [vmem:[#allocation16 + $0xd0] sm:$0xff]
        %v774 = vld [vmem:[#allocation16 + $0xd8] sm:$0xff]
        %v775 = vld [vmem:[#allocation16 + $0xe0] sm:$0xff]
        %v776 = vld [vmem:[#allocation16 + $0xe8] sm:$0xff]
        %v777 = vld [vmem:[#allocation16 + $0xf0] sm:$0xff]
        %v778 = vld [vmem:[#allocation16 + $0xf8] sm:$0xff]
        %v779 = vld [vmem:[#allocation16 + $0x100] sm:$0xff]
        %v780 = vld [vmem:[#allocation16 + $0x108] sm:$0xff]
        %v781 = vld [vmem:[#allocation16 + $0x110] sm:$0xff]
        %v782 = vld [vmem:[#allocation16 + $0x118] sm:$0xff]
        %v783 = vld [vmem:[#allocation16 + $0x120] sm:$0xff]
        %v784 = vld [vmem:[#allocation16 + $0x128] sm:$0xff]
        %v785 = vld [vmem:[#allocation16 + $0x130] sm:$0xff]
        %v786 = vld [vmem:[#allocation16 + $0x138] sm:$0xff]
        %v787 = vld [vmem:[#allocation16 + $0x140] sm:$0xff]
        %v788 = vld [vmem:[#allocation16 + $0x148] sm:$0xff]
        %v789 = vld [vmem:[#allocation16 + $0x150] sm:$0xff]
        %v790 = vld [vmem:[#allocation16 + $0x158] sm:$0xff]
        %v791 = vld [vmem:[#allocation16 + $0x160] sm:$0xff]
        %v792 = vld [vmem:[#allocation16 + $0x168] sm:$0xff]
        %v793 = vld [vmem:[#allocation16 + $0x170] sm:$0xff]
        %v794 = vld [vmem:[#allocation16 + $0x178] sm:$0xff]
        %v795 = vld [vmem:[#allocation16 + $0x180] sm:$0xff]
        %v796 = vld [vmem:[#allocation16 + $0x188] sm:$0xff]
        %v797 = vld [vmem:[#allocation16 + $0x190] sm:$0xff]
        %v798 = vld [vmem:[#allocation16 + $0x198] sm:$0xff]
        %v799 = vld [vmem:[#allocation16 + $0x1a0] sm:$0xff]
        %v800 = vld [vmem:[#allocation16 + $0x1a8] sm:$0xff]
        %v801 = vld [vmem:[#allocation16 + $0x1b0] sm:$0xff]
        %v802 = vld [vmem:[#allocation16 + $0x1b8] sm:$0xff]
        %v803 = vld [vmem:[#allocation16 + $0x1c0] sm:$0xff]
        %v804 = vld [vmem:[#allocation16 + $0x1c8] sm:$0xff]
        %v805 = vld [vmem:[#allocation16 + $0x1d0] sm:$0xff]
        %v806 = vld [vmem:[#allocation16 + $0x1d8] sm:$0xff]
        %v807 = vld [vmem:[#allocation16 + $0x1e0] sm:$0xff]
        %v808 = vld [vmem:[#allocation16 + $0x1e8] sm:$0xff]
        %v809 = vld [vmem:[#allocation16 + $0x1f0] sm:$0xff]
        %v810 = vld [vmem:[#allocation16 + $0x1f8] sm:$0xff]
        %v811 = vld [vmem:[#allocation2] sm:$0xff]
        %v812 = vld [vmem:[#allocation17] sm:$0xff]
        %v813 = vld [vmem:[#allocation17 + $0x8] sm:$0xff]
        %v814 = vld [vmem:[#allocation17 + $0x10] sm:$0xff]
        %v815 = vld [vmem:[#allocation17 + $0x18] sm:$0xff]
        %v816 = vld [vmem:[#allocation17 + $0x20] sm:$0xff]
        %v817 = vld [vmem:[#allocation17 + $0x28] sm:$0xff]
        %v818 = vld [vmem:[#allocation17 + $0x30] sm:$0xff]
        %v819 = vld [vmem:[#allocation17 + $0x38] sm:$0xff]
        %v820 = vld [vmem:[#allocation17 + $0x40] sm:$0xff]
        %v821 = vld [vmem:[#allocation17 + $0x48] sm:$0xff]
        %v822 = vld [vmem:[#allocation17 + $0x50] sm:$0xff]
        %v823 = vld [vmem:[#allocation17 + $0x58] sm:$0xff]
        %v824 = vld [vmem:[#allocation17 + $0x60] sm:$0xff]
        %v825 = vld [vmem:[#allocation17 + $0x68] sm:$0xff]
        %v826 = vld [vmem:[#allocation17 + $0x70] sm:$0xff]
        %v827 = vld [vmem:[#allocation17 + $0x78] sm:$0xff]
        %v828 = vld [vmem:[#allocation17 + $0x80] sm:$0xff]
        %v829 = vld [vmem:[#allocation17 + $0x88] sm:$0xff]
        %v830 = vld [vmem:[#allocation17 + $0x90] sm:$0xff]
        %v831 = vld [vmem:[#allocation17 + $0x98] sm:$0xff]
        %v832 = vld [vmem:[#allocation17 + $0xa0] sm:$0xff]
        %v833 = vld [vmem:[#allocation17 + $0xa8] sm:$0xff]
        %v834 = vld [vmem:[#allocation17 + $0xb0] sm:$0xff]
        %v835 = vld [vmem:[#allocation17 + $0xb8] sm:$0xff]
        %v836 = vld [vmem:[#allocation17 + $0xc0] sm:$0xff]
        %v837 = vld [vmem:[#allocation17 + $0xc8] sm:$0xff]
        %v838 = vld [vmem:[#allocation17 + $0xd0] sm:$0xff]
        %v839 = vld [vmem:[#allocation17 + $0xd8] sm:$0xff]
        %v840 = vld [vmem:[#allocation17 + $0xe0] sm:$0xff]
        %v841 = vld [vmem:[#allocation17 + $0xe8] sm:$0xff]
        %v842 = vld [vmem:[#allocation17 + $0xf0] sm:$0xff]
        %v843 = vld [vmem:[#allocation17 + $0xf8] sm:$0xff]
        %v844 = vld [vmem:[#allocation17 + $0x100] sm:$0xff]
        %v845 = vld [vmem:[#allocation17 + $0x108] sm:$0xff]
        %v846 = vld [vmem:[#allocation17 + $0x110] sm:$0xff]
        %v847 = vld [vmem:[#allocation17 + $0x118] sm:$0xff]
        %v848 = vld [vmem:[#allocation17 + $0x120] sm:$0xff]
        %v849 = vld [vmem:[#allocation17 + $0x128] sm:$0xff]
        %v850 = vld [vmem:[#allocation17 + $0x130] sm:$0xff]
        %v851 = vld [vmem:[#allocation17 + $0x138] sm:$0xff]
        %v852 = vld [vmem:[#allocation17 + $0x140] sm:$0xff]
        %v853 = vld [vmem:[#allocation17 + $0x148] sm:$0xff]
        %v854 = vld [vmem:[#allocation17 + $0x150] sm:$0xff]
        %v855 = vld [vmem:[#allocation17 + $0x158] sm:$0xff]
        %v856 = vld [vmem:[#allocation17 + $0x160] sm:$0xff]
        %v857 = vld [vmem:[#allocation17 + $0x168] sm:$0xff]
        %v858 = vld [vmem:[#allocation17 + $0x170] sm:$0xff]
        %v859 = vld [vmem:[#allocation17 + $0x178] sm:$0xff]
        %v860 = vld [vmem:[#allocation17 + $0x180] sm:$0xff]
        %v861 = vld [vmem:[#allocation17 + $0x188] sm:$0xff]
        %v862 = vld [vmem:[#allocation17 + $0x190] sm:$0xff]
        %v863 = vld [vmem:[#allocation17 + $0x198] sm:$0xff]
        %v864 = vld [vmem:[#allocation17 + $0x1a0] sm:$0xff]
        %v865 = vld [vmem:[#allocation17 + $0x1a8] sm:$0xff]
        %v866 = vld [vmem:[#allocation17 + $0x1b0] sm:$0xff]
        %v867 = vld [vmem:[#allocation17 + $0x1b8] sm:$0xff]
        %v868 = vld [vmem:[#allocation17 + $0x1c0] sm:$0xff]
        %v869 = vld [vmem:[#allocation17 + $0x1c8] sm:$0xff]
        %v870 = vld [vmem:[#allocation17 + $0x1d0] sm:$0xff]
        %v871 = vld [vmem:[#allocation17 + $0x1d8] sm:$0xff]
        %v872 = vld [vmem:[#allocation17 + $0x1e0] sm:$0xff]
        %v873 = vld [vmem:[#allocation17 + $0x1e8] sm:$0xff]
        %v874 = vld [vmem:[#allocation17 + $0x1f0] sm:$0xff]
        %v875 = vld [vmem:[#allocation17 + $0x1f8] sm:$0xff]
        %876 = vmatprep.subr.mxu0 %v873
        %877 = vmatpush1.msra.mxu0 %v872
        %878 = vmatprep.subr.mxu0 %v869
        %879 = vmatpush1.msra.mxu0 %v868
        %880 = vmatprep.subr.mxu0 %v865
        %881 = vmatpush1.msra.mxu0 %v864
        %882 = vmatprep.subr.mxu0 %v861
        %883 = vmatpush1.msra.mxu0 %v860
        %884 = vmatprep.subr.mxu0 %v857
        %885 = vmatpush1.msra.mxu0 %v856
        %886 = vmatprep.subr.mxu0 %v853
        %887 = vmatpush1.msra.mxu0 %v852
        %888 = vmatprep.subr.mxu0 %v849
        %889 = vmatpush1.msra.mxu0 %v848
        %890 = vmatprep.subr.mxu0 %v845
        %891 = vmatpush1.msra.mxu0 %v844
        %892 = vmatprep.subr.mxu0 %v841
        %893 = vmatpush1.msra.mxu0 %v840
        %894 = vmatprep.subr.mxu0 %v837
        %895 = vmatpush1.msra.mxu0 %v836
        %896 = vmatprep.subr.mxu0 %v833
        %897 = vmatpush1.msra.mxu0 %v832
        %898 = vmatprep.subr.mxu0 %v829
        %899 = vmatpush1.msra.mxu0 %v828
        %900 = vmatprep.subr.mxu0 %v825
        %901 = vmatpush1.msra.mxu0 %v824
        %902 = vmatprep.subr.mxu0 %v821
        %903 = vmatpush1.msra.mxu0 %v820
        %904 = vmatprep.subr.mxu0 %v817
        %905 = vmatpush1.msra.mxu0 %v816
        %906 = vmatprep.subr.mxu0 %v813
        %907 = vmatpush1.msra.mxu0 %v812
        %908 = vmatprep.subr.mxu0 0.0
        %909 = vmatpush2.msra.mxu0 0.0
        %910 = vmatprep.subr.mxu0 0.0
        %911 = vmatpush2.msra.mxu0 0.0
        %912 = vmatprep.subr.mxu0 0.0
        %913 = vmatpush2.msra.mxu0 0.0
        %914 = vmatprep.subr.mxu0 0.0
        %915 = vmatpush2.msra.mxu0 0.0
        %916 = vmatprep.subr.mxu0 0.0
        %917 = vmatpush2.msra.mxu0 0.0
        %918 = vmatprep.subr.mxu0 0.0
        %919 = vmatpush2.msra.mxu0 0.0
        %920 = vmatprep.subr.mxu0 0.0
        %921 = vmatpush2.msra.mxu0 0.0
        %922 = vmatprep.subr.mxu0 0.0
        %923 = vmatpush2.msra.mxu0 0.0
        %924 = vmatprep.subr.mxu0 0.0
        %925 = vmatpush2.msra.mxu0 0.0
        %926 = vmatprep.subr.mxu0 0.0
        %927 = vmatpush2.msra.mxu0 0.0
        %928 = vmatprep.subr.mxu0 0.0
        %929 = vmatpush2.msra.mxu0 0.0
        %930 = vmatprep.subr.mxu0 0.0
        %931 = vmatpush2.msra.mxu0 0.0
        %932 = vmatprep.subr.mxu0 0.0
        %933 = vmatpush2.msra.mxu0 0.0
        %934 = vmatprep.subr.mxu0 0.0
        %935 = vmatpush2.msra.mxu0 0.0
        %936 = vmatprep.subr.mxu0 0.0
        %937 = vmatpush2.msra.mxu0 0.0
        %938 = vmatprep.subr.mxu0 0.0
        %939 = vmatpush2.msra.mxu0 0.0
        %940 = vmatprep.mubr.f32.mxu0 0.0
        %941 = vmatmul.mubr.f32.gmra.mxu0 %v811
        %v942 = vpop.f32.mrf.mxu0
        %v943 = vadd.f32 0.0, %v942
        %v944 = vpop.f32.mrf.mxu0
        %v945 = vadd.f32 0.0, %v944
        %946 = vdwg.mxu0
        %947 = vmatprep.subr.mxu0 %v875
        %948 = vmatpush1.msra.mxu0 %v874
        %949 = vmatprep.subr.mxu0 %v871
        %950 = vmatpush1.msra.mxu0 %v870
        %951 = vmatprep.subr.mxu0 %v867
        %952 = vmatpush1.msra.mxu0 %v866
        %953 = vmatprep.subr.mxu0 %v863
        %954 = vmatpush1.msra.mxu0 %v862
        %955 = vmatprep.subr.mxu0 %v859
        %956 = vmatpush1.msra.mxu0 %v858
        %957 = vmatprep.subr.mxu0 %v855
        %958 = vmatpush1.msra.mxu0 %v854
        %959 = vmatprep.subr.mxu0 %v851
        %960 = vmatpush1.msra.mxu0 %v850
        %961 = vmatprep.subr.mxu0 %v847
        %962 = vmatpush1.msra.mxu0 %v846
        %963 = vmatprep.subr.mxu0 %v843
        %964 = vmatpush1.msra.mxu0 %v842
        %965 = vmatprep.subr.mxu0 %v839
        %966 = vmatpush1.msra.mxu0 %v838
        %967 = vmatprep.subr.mxu0 %v835
        %968 = vmatpush1.msra.mxu0 %v834
        %969 = vmatprep.subr.mxu0 %v831
        %970 = vmatpush1.msra.mxu0 %v830
        %971 = vmatprep.subr.mxu0 %v827
        %972 = vmatpush1.msra.mxu0 %v826
        %973 = vmatprep.subr.mxu0 %v823
        %974 = vmatpush1.msra.mxu0 %v822
        %975 = vmatprep.subr.mxu0 %v819
        %976 = vmatpush1.msra.mxu0 %v818
        %977 = vmatprep.subr.mxu0 %v815
        %978 = vmatpush1.msra.mxu0 %v814
        %979 = vmatprep.subr.mxu0 0.0
        %980 = vmatpush2.msra.mxu0 0.0
        %981 = vmatprep.subr.mxu0 0.0
        %982 = vmatpush2.msra.mxu0 0.0
        %983 = vmatprep.subr.mxu0 0.0
        %984 = vmatpush2.msra.mxu0 0.0
        %985 = vmatprep.subr.mxu0 0.0
        %986 = vmatpush2.msra.mxu0 0.0
        %987 = vmatprep.subr.mxu0 0.0
        %988 = vmatpush2.msra.mxu0 0.0
        %989 = vmatprep.subr.mxu0 0.0
        %990 = vmatpush2.msra.mxu0 0.0
        %991 = vmatprep.subr.mxu0 0.0
        %992 = vmatpush2.msra.mxu0 0.0
        %993 = vmatprep.subr.mxu0 0.0
        %994 = vmatpush2.msra.mxu0 0.0
        %995 = vmatprep.subr.mxu0 0.0
        %996 = vmatpush2.msra.mxu0 0.0
        %997 = vmatprep.subr.mxu0 0.0
        %998 = vmatpush2.msra.mxu0 0.0
        %999 = vmatprep.subr.mxu0 0.0
        %1000 = vmatpush2.msra.mxu0 0.0
        %1001 = vmatprep.subr.mxu0 0.0
        %1002 = vmatpush2.msra.mxu0 0.0
        %1003 = vmatprep.subr.mxu0 0.0
        %1004 = vmatpush2.msra.mxu0 0.0
        %1005 = vmatprep.subr.mxu0 0.0
        %1006 = vmatpush2.msra.mxu0 0.0
        %1007 = vmatprep.subr.mxu0 0.0
        %1008 = vmatpush2.msra.mxu0 0.0
        %1009 = vmatprep.subr.mxu0 0.0
        %1010 = vmatpush2.msra.mxu0 0.0
        %1011 = vmatprep.mubr.f32.mxu0 0.0
        %1012 = vmatmul.mubr.f32.gmra.mxu0 %v811
        %v1013 = vpop.f32.mrf.mxu0
        %v1014 = vadd.f32 0.0, %v1013
        %v1015 = vpop.f32.mrf.mxu0
        %v1016 = vadd.f32 0.0, %v1015
        %1017 = vdwg.mxu0
        %1018 = vmatprep.subr.mxu0 %v808
        %1019 = vmatpush1.msra.mxu0 %v807
        %1020 = vmatprep.subr.mxu0 %v804
        %1021 = vmatpush1.msra.mxu0 %v803
        %1022 = vmatprep.subr.mxu0 %v800
        %1023 = vmatpush1.msra.mxu0 %v799
        %1024 = vmatprep.subr.mxu0 %v796
        %1025 = vmatpush1.msra.mxu0 %v795
        %1026 = vmatprep.subr.mxu0 %v792
        %1027 = vmatpush1.msra.mxu0 %v791
        %1028 = vmatprep.subr.mxu0 %v788
        %1029 = vmatpush1.msra.mxu0 %v787
        %1030 = vmatprep.subr.mxu0 %v784
        %1031 = vmatpush1.msra.mxu0 %v783
        %1032 = vmatprep.subr.mxu0 %v780
        %1033 = vmatpush1.msra.mxu0 %v779
        %1034 = vmatprep.subr.mxu0 %v776
        %1035 = vmatpush1.msra.mxu0 %v775
        %1036 = vmatprep.subr.mxu0 %v772
        %1037 = vmatpush1.msra.mxu0 %v771
        %1038 = vmatprep.subr.mxu0 %v768
        %1039 = vmatpush1.msra.mxu0 %v767
        %1040 = vmatprep.subr.mxu0 %v764
        %1041 = vmatpush1.msra.mxu0 %v763
        %1042 = vmatprep.subr.mxu0 %v760
        %1043 = vmatpush1.msra.mxu0 %v759
        %1044 = vmatprep.subr.mxu0 %v756
        %1045 = vmatpush1.msra.mxu0 %v755
        %1046 = vmatprep.subr.mxu0 %v752
        %1047 = vmatpush1.msra.mxu0 %v751
        %1048 = vmatprep.subr.mxu0 %v748
        %1049 = vmatpush1.msra.mxu0 %v747
        %1050 = vmatprep.subr.mxu0 0.0
        %1051 = vmatpush2.msra.mxu0 0.0
        %1052 = vmatprep.subr.mxu0 0.0
        %1053 = vmatpush2.msra.mxu0 0.0
        %1054 = vmatprep.subr.mxu0 0.0
        %1055 = vmatpush2.msra.mxu0 0.0
        %1056 = vmatprep.subr.mxu0 0.0
        %1057 = vmatpush2.msra.mxu0 0.0
        %1058 = vmatprep.subr.mxu0 0.0
        %1059 = vmatpush2.msra.mxu0 0.0
        %1060 = vmatprep.subr.mxu0 0.0
        %1061 = vmatpush2.msra.mxu0 0.0
        %1062 = vmatprep.subr.mxu0 0.0
        %1063 = vmatpush2.msra.mxu0 0.0
        %1064 = vmatprep.subr.mxu0 0.0
        %1065 = vmatpush2.msra.mxu0 0.0
        %1066 = vmatprep.subr.mxu0 0.0
        %1067 = vmatpush2.msra.mxu0 0.0
        %1068 = vmatprep.subr.mxu0 0.0
        %1069 = vmatpush2.msra.mxu0 0.0
        %1070 = vmatprep.subr.mxu0 0.0
        %1071 = vmatpush2.msra.mxu0 0.0
        %1072 = vmatprep.subr.mxu0 0.0
        %1073 = vmatpush2.msra.mxu0 0.0
        %1074 = vmatprep.subr.mxu0 0.0
        %1075 = vmatpush2.msra.mxu0 0.0
        %1076 = vmatprep.subr.mxu0 0.0
        %1077 = vmatpush2.msra.mxu0 0.0
        %1078 = vmatprep.subr.mxu0 0.0
        %1079 = vmatpush2.msra.mxu0 0.0
        %1080 = vmatprep.subr.mxu0 0.0
        %1081 = vmatpush2.msra.mxu0 0.0
        %1082 = vmatprep.mubr.f32.mxu0 0.0
        %1083 = vmatmul.mubr.f32.gmra.mxu0 %v746
        %v1084 = vpop.f32.mrf.mxu0
        %v1085 = vadd.f32 %v943, %v1084
        %v1086 = vpop.f32.mrf.mxu0
        %v1087 = vadd.f32 %v945, %v1086
        %1088 = vdwg.mxu0
        %1089 = vmatprep.subr.mxu0 %v810
        %1090 = vmatpush1.msra.mxu0 %v809
        %1091 = vmatprep.subr.mxu0 %v806
        %1092 = vmatpush1.msra.mxu0 %v805
        %1093 = vmatprep.subr.mxu0 %v802
        %1094 = vmatpush1.msra.mxu0 %v801
        %1095 = vmatprep.subr.mxu0 %v798
        %1096 = vmatpush1.msra.mxu0 %v797
        %1097 = vmatprep.subr.mxu0 %v794
        %1098 = vmatpush1.msra.mxu0 %v793
        %1099 = vmatprep.subr.mxu0 %v790
        %1100 = vmatpush1.msra.mxu0 %v789
        %1101 = vmatprep.subr.mxu0 %v786
        %1102 = vmatpush1.msra.mxu0 %v785
        %1103 = vmatprep.subr.mxu0 %v782
        %1104 = vmatpush1.msra.mxu0 %v781
        %1105 = vmatprep.subr.mxu0 %v778
        %1106 = vmatpush1.msra.mxu0 %v777
        %1107 = vmatprep.subr.mxu0 %v774
        %1108 = vmatpush1.msra.mxu0 %v773
        %1109 = vmatprep.subr.mxu0 %v770
        %1110 = vmatpush1.msra.mxu0 %v769
        %1111 = vmatprep.subr.mxu0 %v766
        %1112 = vmatpush1.msra.mxu0 %v765
        %1113 = vmatprep.subr.mxu0 %v762
        %1114 = vmatpush1.msra.mxu0 %v761
        %1115 = vmatprep.subr.mxu0 %v758
        %1116 = vmatpush1.msra.mxu0 %v757
        %1117 = vmatprep.subr.mxu0 %v754
        %1118 = vmatpush1.msra.mxu0 %v753
        %1119 = vmatprep.subr.mxu0 %v750
        %1120 = vmatpush1.msra.mxu0 %v749
        %1121 = vmatprep.subr.mxu0 0.0
        %1122 = vmatpush2.msra.mxu0 0.0
        %1123 = vmatprep.subr.mxu0 0.0
        %1124 = vmatpush2.msra.mxu0 0.0
        %1125 = vmatprep.subr.mxu0 0.0
        %1126 = vmatpush2.msra.mxu0 0.0
        %1127 = vmatprep.subr.mxu0 0.0
        %1128 = vmatpush2.msra.mxu0 0.0
        %1129 = vmatprep.subr.mxu0 0.0
        %1130 = vmatpush2.msra.mxu0 0.0
        %1131 = vmatprep.subr.mxu0 0.0
        %1132 = vmatpush2.msra.mxu0 0.0
        %1133 = vmatprep.subr.mxu0 0.0
        %1134 = vmatpush2.msra.mxu0 0.0
        %1135 = vmatprep.subr.mxu0 0.0
        %1136 = vmatpush2.msra.mxu0 0.0
        %1137 = vmatprep.subr.mxu0 0.0
        %1138 = vmatpush2.msra.mxu0 0.0
        %1139 = vmatprep.subr.mxu0 0.0
        %1140 = vmatpush2.msra.mxu0 0.0
        %1141 = vmatprep.subr.mxu0 0.0
        %1142 = vmatpush2.msra.mxu0 0.0
        %1143 = vmatprep.subr.mxu0 0.0
        %1144 = vmatpush2.msra.mxu0 0.0
        %1145 = vmatprep.subr.mxu0 0.0
        %1146 = vmatpush2.msra.mxu0 0.0
        %1147 = vmatprep.subr.mxu0 0.0
        %1148 = vmatpush2.msra.mxu0 0.0
        %1149 = vmatprep.subr.mxu0 0.0
        %1150 = vmatpush2.msra.mxu0 0.0
        %1151 = vmatprep.subr.mxu0 0.0
        %1152 = vmatpush2.msra.mxu0 0.0
        %1153 = vmatprep.mubr.f32.mxu0 0.0
        %1154 = vmatmul.mubr.f32.gmra.mxu0 %v746
        %v1155 = vpop.f32.mrf.mxu0
        %v1156 = vadd.f32 %v1014, %v1155
        %v1157 = vpop.f32.mrf.mxu0
        %v1158 = vadd.f32 %v1016, %v1157
        %1159 = vdwg.mxu0
        %v1160 = vld [vmem:[%s6] sm:$0xf]
        %v1162 = vlaneseq
        %v1163 = vshrl.u32 %v1162, 7
        %v1164 = vsub.s32 0, %v1163
        %v1165 = vrot.slane %v1160, %v1164
        %v1166 = vlaneseq
        %v1167 = vshrl.u32 %v1166, 7
        %v1168 = vsub.s32 1, %v1167
        %v1169 = vrot.slane %v1160, %v1168
        %v1170 = vlaneseq
        %v1171 = vshrl.u32 %v1170, 7
        %v1172 = vsub.s32 2, %v1171
        %v1173 = vrot.slane %v1160, %v1172
        %v1174 = vlaneseq
        %v1175 = vshrl.u32 %v1174, 7
        %v1176 = vsub.s32 3, %v1175
        %v1177 = vrot.slane %v1160, %v1176
        %v1182 = vadd.f32 %v1085, %v1165
        %v1183 = vadd.f32 %v1087, %v1169
        %v1184 = vadd.f32 %v1156, %v1173
        %v1185 = vadd.f32 %v1158, %v1177
        %v1186 = vxor.u32 %v1182, 2147483648
        %v1187 = vmul.f32 %v1186, 1.442695
        %v1188 = vpow.pop %v1187
        %v1189 = vadd.f32 %v1188, 1.0
        %v1190 = vrcp.pop %v1189
        %v1191 = vmul.f32 1.0, %v1190
        %v1192 = vxor.u32 %v1183, 2147483648
        %v1193 = vmul.f32 %v1192, 1.442695
        %v1194 = vpow.pop %v1193
        %v1195 = vadd.f32 %v1194, 1.0
        %v1196 = vrcp.pop %v1195
        %v1197 = vmul.f32 1.0, %v1196
        %v1198 = vtanh.pop %v1184
        %v1199 = vxor.u32 %v1185, 2147483648
        %v1200 = vmul.f32 %v1199, 1.442695
        %v1201 = vpow.pop %v1200
        %v1202 = vadd.f32 %v1201, 1.0
        %v1203 = vrcp.pop %v1202
        %v1204 = vmul.f32 1.0, %v1203
        %v1205 = vld [vmem:[#allocation3] sm:$0xff]
        %v1206 = vmul.f32 %v1197, %v1205
        %v1207 = vmul.f32 %v1191, %v1198
        %v1208 = vadd.f32 %v1206, %v1207
        %v1209 = vtanh.pop %v1208
        %v1210 = vmul.f32 %v1204, %v1209
        %1211 = vst [vmem:[#allocation2] sm:$0xff] %v1210
        %1212 = vst [vmem:[#allocation3] sm:$0xff] %v1208
        %v1213 = vld [vmem:[#allocation8] sm:$0xff]
        %v1214 = vld [vmem:[#allocation8 + $0x8] sm:$0xff]
        %v1215 = vld [vmem:[#allocation8 + $0x10] sm:$0xff]
        %v1216 = vld [vmem:[#allocation8 + $0x18] sm:$0xff]
        %v1217 = vld [vmem:[#allocation8 + $0x20] sm:$0xff]
        %v1218 = vld [vmem:[#allocation8 + $0x28] sm:$0xff]
        %v1219 = vld [vmem:[#allocation8 + $0x30] sm:$0xff]
        %v1220 = vld [vmem:[#allocation8 + $0x38] sm:$0xff]
        %v1221 = vld [vmem:[#allocation19] sm:$0xff]
        %v1222 = vld [vmem:[#allocation19 + $0x8] sm:$0xff]
        %v1223 = vld [vmem:[#allocation19 + $0x10] sm:$0xff]
        %v1224 = vld [vmem:[#allocation19 + $0x18] sm:$0xff]
        %v1225 = vld [vmem:[#allocation19 + $0x20] sm:$0xff]
        %v1226 = vld [vmem:[#allocation19 + $0x28] sm:$0xff]
        %v1227 = vld [vmem:[#allocation19 + $0x30] sm:$0xff]
        %v1228 = vld [vmem:[#allocation19 + $0x38] sm:$0xff]
        %v1229 = vld [vmem:[#allocation19 + $0x40] sm:$0xff]
        %v1230 = vld [vmem:[#allocation19 + $0x48] sm:$0xff]
        %v1231 = vld [vmem:[#allocation19 + $0x50] sm:$0xff]
        %v1232 = vld [vmem:[#allocation19 + $0x58] sm:$0xff]
        %v1233 = vld [vmem:[#allocation19 + $0x60] sm:$0xff]
        %v1234 = vld [vmem:[#allocation19 + $0x68] sm:$0xff]
        %v1235 = vld [vmem:[#allocation19 + $0x70] sm:$0xff]
        %v1236 = vld [vmem:[#allocation19 + $0x78] sm:$0xff]
        %v1237 = vld [vmem:[%s8] sm:$0x1]
        %v1239 = vlaneseq
        %v1240 = vshrl.u32 %v1239, 7
        %v1241 = vsub.s32 0, %v1240
        %v1242 = vrot.slane %v1237, %v1241
        %1244 = vmatprep.subr.mxu0 0.0
        %1245 = vmatpush1.msra.mxu0 %v1236
        %1246 = vmatprep.subr.mxu0 0.0
        %1247 = vmatpush1.msra.mxu0 %v1235
        %1248 = vmatprep.subr.mxu0 0.0
        %1249 = vmatpush1.msra.mxu0 %v1234
        %1250 = vmatprep.subr.mxu0 0.0
        %1251 = vmatpush1.msra.mxu0 %v1233
        %1252 = vmatprep.subr.mxu0 0.0
        %1253 = vmatpush1.msra.mxu0 %v1232
        %1254 = vmatprep.subr.mxu0 0.0
        %1255 = vmatpush1.msra.mxu0 %v1231
        %1256 = vmatprep.subr.mxu0 0.0
        %1257 = vmatpush1.msra.mxu0 %v1230
        %1258 = vmatprep.subr.mxu0 0.0
        %1259 = vmatpush1.msra.mxu0 %v1229
        %1260 = vmatprep.subr.mxu0 0.0
        %1261 = vmatpush1.msra.mxu0 %v1228
        %1262 = vmatprep.subr.mxu0 0.0
        %1263 = vmatpush1.msra.mxu0 %v1227
        %1264 = vmatprep.subr.mxu0 0.0
        %1265 = vmatpush1.msra.mxu0 %v1226
        %1266 = vmatprep.subr.mxu0 0.0
        %1267 = vmatpush1.msra.mxu0 %v1225
        %1268 = vmatprep.subr.mxu0 0.0
        %1269 = vmatpush1.msra.mxu0 %v1224
        %1270 = vmatprep.subr.mxu0 0.0
        %1271 = vmatpush1.msra.mxu0 %v1223
        %1272 = vmatprep.subr.mxu0 0.0
        %1273 = vmatpush1.msra.mxu0 %v1222
        %1274 = vmatprep.subr.mxu0 0.0
        %1275 = vmatpush1.msra.mxu0 %v1221
        %1276 = vmatprep.subr.mxu0 0.0
        %1277 = vmatpush2.msra.mxu0 0.0
        %1278 = vmatprep.subr.mxu0 0.0
        %1279 = vmatpush2.msra.mxu0 0.0
        %1280 = vmatprep.subr.mxu0 0.0
        %1281 = vmatpush2.msra.mxu0 0.0
        %1282 = vmatprep.subr.mxu0 0.0
        %1283 = vmatpush2.msra.mxu0 0.0
        %1284 = vmatprep.subr.mxu0 0.0
        %1285 = vmatpush2.msra.mxu0 0.0
        %1286 = vmatprep.subr.mxu0 0.0
        %1287 = vmatpush2.msra.mxu0 0.0
        %1288 = vmatprep.subr.mxu0 0.0
        %1289 = vmatpush2.msra.mxu0 0.0
        %1290 = vmatprep.subr.mxu0 0.0
        %1291 = vmatpush2.msra.mxu0 0.0
        %1292 = vmatprep.subr.mxu0 0.0
        %1293 = vmatpush2.msra.mxu0 0.0
        %1294 = vmatprep.subr.mxu0 0.0
        %1295 = vmatpush2.msra.mxu0 0.0
        %1296 = vmatprep.subr.mxu0 0.0
        %1297 = vmatpush2.msra.mxu0 0.0
        %1298 = vmatprep.subr.mxu0 0.0
        %1299 = vmatpush2.msra.mxu0 0.0
        %1300 = vmatprep.subr.mxu0 0.0
        %1301 = vmatpush2.msra.mxu0 0.0
        %1302 = vmatprep.subr.mxu0 0.0
        %1303 = vmatpush2.msra.mxu0 0.0
        %1304 = vmatprep.subr.mxu0 0.0
        %1305 = vmatpush2.msra.mxu0 0.0
        %1306 = vmatprep.subr.mxu0 0.0
        %1307 = vmatpush2.msra.mxu0 0.0
        %1308 = vmatprep.mubr.f32.mxu0 0.0
        %1309 = vmatmul.mubr.f32.gmra.mxu0 %v1210
        %v1310 = vpop.f32.mrf.mxu0
        %v1311 = vadd.f32 %v1242, %v1310
        %v1312 = vpop.f32.mrf.mxu0
        %1313 = vdwg.mxu0
        %v1315 = vcombine.high %v1311, %v1311
        %v1317 = vunpack.c.l.s4 1966171168
        %v1318 = vunpack.c.0.s8 %v1317
        %v1319 = vlaneseq
        %v1320 = vshrl.u32 %v1319, 7
        %v1321 = vsub.s32 %v1318, %v1320
        %v1322 = vrot.slane %v1311, %v1321
        %v1324 = vunpack.c.l.s4 1966171168
        %v1325 = vunpack.c.0.s8 %v1324
        %v1326 = vlaneseq
        %v1327 = vshrl.u32 %v1326, 7
        %v1328 = vsub.s32 %v1325, %v1327
        %v1329 = vrot.slane %v1315, %v1328
        %v1330 = vcombine.high %v1322, %v1322
        %v1331 = vcombine.high %v1329, %v1329
        %v1333 = vunpack.c.l.s4 1966171168
        %v1334 = vunpack.c.0.s8 %v1333
        %v1335 = vlaneseq
        %v1336 = vshrl.u32 %v1335, 7
        %v1337 = vsub.s32 %v1334, %v1336
        %v1338 = vrot.slane %v1322, %v1337
        %v1340 = vunpack.c.l.s4 1966171168
        %v1341 = vunpack.c.0.s8 %v1340
        %v1342 = vlaneseq
        %v1343 = vshrl.u32 %v1342, 7
        %v1344 = vsub.s32 %v1341, %v1343
        %v1345 = vrot.slane %v1329, %v1344
        %v1347 = vunpack.c.l.s4 1966171168
        %v1348 = vunpack.c.0.s8 %v1347
        %v1349 = vlaneseq
        %v1350 = vshrl.u32 %v1349, 7
        %v1351 = vsub.s32 %v1348, %v1350
        %v1352 = vrot.slane %v1330, %v1351
        %v1354 = vunpack.c.l.s4 1966171168
        %v1355 = vunpack.c.0.s8 %v1354
        %v1356 = vlaneseq
        %v1357 = vshrl.u32 %v1356, 7
        %v1358 = vsub.s32 %v1355, %v1357
        %v1359 = vrot.slane %v1331, %v1358
        %v1360 = vcombine.high %v1338, %v1338
        %v1361 = vcombine.high %v1345, %v1345
        %v1362 = vcombine.high %v1352, %v1352
        %v1363 = vcombine.high %v1359, %v1359
        %v1372 = vld [vmem:[#allocation11] sm:$0xff]
        %v1374 = vcombine.high %v1372, %v1372
        %v1376 = vunpack.c.l.s4 1966171168
        %v1377 = vunpack.c.0.s8 %v1376
        %v1378 = vlaneseq
        %v1379 = vshrl.u32 %v1378, 7
        %v1380 = vsub.s32 %v1377, %v1379
        %v1381 = vrot.slane %v1372, %v1380
        %v1383 = vunpack.c.l.s4 1966171168
        %v1384 = vunpack.c.0.s8 %v1383
        %v1385 = vlaneseq
        %v1386 = vshrl.u32 %v1385, 7
        %v1387 = vsub.s32 %v1384, %v1386
        %v1388 = vrot.slane %v1374, %v1387
        %v1389 = vcombine.high %v1381, %v1381
        %v1390 = vcombine.high %v1388, %v1388
        %v1392 = vunpack.c.l.s4 1966171168
        %v1393 = vunpack.c.0.s8 %v1392
        %v1394 = vlaneseq
        %v1395 = vshrl.u32 %v1394, 7
        %v1396 = vsub.s32 %v1393, %v1395
        %v1397 = vrot.slane %v1381, %v1396
        %v1399 = vunpack.c.l.s4 1966171168
        %v1400 = vunpack.c.0.s8 %v1399
        %v1401 = vlaneseq
        %v1402 = vshrl.u32 %v1401, 7
        %v1403 = vsub.s32 %v1400, %v1402
        %v1404 = vrot.slane %v1388, %v1403
        %v1406 = vunpack.c.l.s4 1966171168
        %v1407 = vunpack.c.0.s8 %v1406
        %v1408 = vlaneseq
        %v1409 = vshrl.u32 %v1408, 7
        %v1410 = vsub.s32 %v1407, %v1409
        %v1411 = vrot.slane %v1389, %v1410
        %v1413 = vunpack.c.l.s4 1966171168
        %v1414 = vunpack.c.0.s8 %v1413
        %v1415 = vlaneseq
        %v1416 = vshrl.u32 %v1415, 7
        %v1417 = vsub.s32 %v1414, %v1416
        %v1418 = vrot.slane %v1390, %v1417
        %v1419 = vcombine.high %v1397, %v1397
        %v1420 = vcombine.high %v1404, %v1404
        %v1421 = vcombine.high %v1411, %v1411
        %v1422 = vcombine.high %v1418, %v1418
        %1431 = vmatprep.subr.mxu0 0.0
        %1432 = vmatpush1.xpose.msra.mxu0 0.0
        %1433 = vmatprep.subr.mxu0 0.0
        %1434 = vmatpush1.xpose.msra.mxu0 0.0
        %1435 = vmatprep.subr.mxu0 0.0
        %1436 = vmatpush1.xpose.msra.mxu0 0.0
        %1437 = vmatprep.subr.mxu0 0.0
        %1438 = vmatpush1.xpose.msra.mxu0 0.0
        %1439 = vmatprep.subr.mxu0 0.0
        %1440 = vmatpush1.xpose.msra.mxu0 0.0
        %1441 = vmatprep.subr.mxu0 0.0
        %1442 = vmatpush1.xpose.msra.mxu0 0.0
        %1443 = vmatprep.subr.mxu0 0.0
        %1444 = vmatpush1.xpose.msra.mxu0 0.0
        %1445 = vmatprep.subr.mxu0 0.0
        %1446 = vmatpush1.xpose.msra.mxu0 0.0
        %1447 = vmatprep.subr.mxu0 0.0
        %1448 = vmatpush1.xpose.msra.mxu0 0.0
        %1449 = vmatprep.subr.mxu0 0.0
        %1450 = vmatpush1.xpose.msra.mxu0 0.0
        %1451 = vmatprep.subr.mxu0 0.0
        %1452 = vmatpush1.xpose.msra.mxu0 0.0
        %1453 = vmatprep.subr.mxu0 0.0
        %1454 = vmatpush1.xpose.msra.mxu0 0.0
        %1455 = vmatprep.subr.mxu0 0.0
        %1456 = vmatpush1.xpose.msra.mxu0 0.0
        %1457 = vmatprep.subr.mxu0 0.0
        %1458 = vmatpush1.xpose.msra.mxu0 0.0
        %1459 = vmatprep.subr.mxu0 0.0
        %1460 = vmatpush1.xpose.msra.mxu0 0.0
        %1461 = vmatprep.subr.mxu0 0.0
        %1462 = vmatpush1.xpose.msra.mxu0 %v1213
        %1463 = vmatprep.subr.mxu0 0.0
        %1464 = vmatpush2.xpose.msra.mxu0 0.0
        %1465 = vmatprep.subr.mxu0 0.0
        %1466 = vmatpush2.xpose.msra.mxu0 0.0
        %1467 = vmatprep.subr.mxu0 0.0
        %1468 = vmatpush2.xpose.msra.mxu0 0.0
        %1469 = vmatprep.subr.mxu0 0.0
        %1470 = vmatpush2.xpose.msra.mxu0 0.0
        %1471 = vmatprep.subr.mxu0 0.0
        %1472 = vmatpush2.xpose.msra.mxu0 0.0
        %1473 = vmatprep.subr.mxu0 0.0
        %1474 = vmatpush2.xpose.msra.mxu0 0.0
        %1475 = vmatprep.subr.mxu0 0.0
        %1476 = vmatpush2.xpose.msra.mxu0 0.0
        %1477 = vmatprep.subr.mxu0 0.0
        %1478 = vmatpush2.xpose.msra.mxu0 0.0
        %1479 = vmatprep.subr.mxu0 0.0
        %1480 = vmatpush2.xpose.msra.mxu0 0.0
        %1481 = vmatprep.subr.mxu0 0.0
        %1482 = vmatpush2.xpose.msra.mxu0 0.0
        %1483 = vmatprep.subr.mxu0 0.0
        %1484 = vmatpush2.xpose.msra.mxu0 0.0
        %1485 = vmatprep.subr.mxu0 0.0
        %1486 = vmatpush2.xpose.msra.mxu0 0.0
        %1487 = vmatprep.subr.mxu0 0.0
        %1488 = vmatpush2.xpose.msra.mxu0 0.0
        %1489 = vmatprep.subr.mxu0 0.0
        %1490 = vmatpush2.xpose.msra.mxu0 0.0
        %1491 = vmatprep.subr.mxu0 0.0
        %1492 = vmatpush2.xpose.msra.mxu0 0.0
        %1493 = vmatprep.subr.mxu0 0.0
        %1494 = vmatpush2.xpose.msra.mxu0 0.0
        %1495 = vmatprep.mubr.f32.mxu0 0.0
        %1496 = vmatmul.mubr.f32.gmra.mxu0 %v1338
        %v1497 = vpop.f32.mrf.mxu0
        %v1498 = vadd.f32 %v1397, %v1497
        %v1499 = vpop.f32.mrf.mxu0
        %1500 = vdwg.mxu0
        %1501 = vmatprep.subr.mxu0 0.0
        %1502 = vmatpush1.xpose.msra.mxu0 0.0
        %1503 = vmatprep.subr.mxu0 0.0
        %1504 = vmatpush1.xpose.msra.mxu0 0.0
        %1505 = vmatprep.subr.mxu0 0.0
        %1506 = vmatpush1.xpose.msra.mxu0 0.0
        %1507 = vmatprep.subr.mxu0 0.0
        %1508 = vmatpush1.xpose.msra.mxu0 0.0
        %1509 = vmatprep.subr.mxu0 0.0
        %1510 = vmatpush1.xpose.msra.mxu0 0.0
        %1511 = vmatprep.subr.mxu0 0.0
        %1512 = vmatpush1.xpose.msra.mxu0 0.0
        %1513 = vmatprep.subr.mxu0 0.0
        %1514 = vmatpush1.xpose.msra.mxu0 0.0
        %1515 = vmatprep.subr.mxu0 0.0
        %1516 = vmatpush1.xpose.msra.mxu0 0.0
        %1517 = vmatprep.subr.mxu0 0.0
        %1518 = vmatpush1.xpose.msra.mxu0 0.0
        %1519 = vmatprep.subr.mxu0 0.0
        %1520 = vmatpush1.xpose.msra.mxu0 0.0
        %1521 = vmatprep.subr.mxu0 0.0
        %1522 = vmatpush1.xpose.msra.mxu0 0.0
        %1523 = vmatprep.subr.mxu0 0.0
        %1524 = vmatpush1.xpose.msra.mxu0 0.0
        %1525 = vmatprep.subr.mxu0 0.0
        %1526 = vmatpush1.xpose.msra.mxu0 0.0
        %1527 = vmatprep.subr.mxu0 0.0
        %1528 = vmatpush1.xpose.msra.mxu0 0.0
        %1529 = vmatprep.subr.mxu0 0.0
        %1530 = vmatpush1.xpose.msra.mxu0 0.0
        %1531 = vmatprep.subr.mxu0 0.0
        %1532 = vmatpush1.xpose.msra.mxu0 %v1214
        %1533 = vmatprep.subr.mxu0 0.0
        %1534 = vmatpush2.xpose.msra.mxu0 0.0
        %1535 = vmatprep.subr.mxu0 0.0
        %1536 = vmatpush2.xpose.msra.mxu0 0.0
        %1537 = vmatprep.subr.mxu0 0.0
        %1538 = vmatpush2.xpose.msra.mxu0 0.0
        %1539 = vmatprep.subr.mxu0 0.0
        %1540 = vmatpush2.xpose.msra.mxu0 0.0
        %1541 = vmatprep.subr.mxu0 0.0
        %1542 = vmatpush2.xpose.msra.mxu0 0.0
        %1543 = vmatprep.subr.mxu0 0.0
        %1544 = vmatpush2.xpose.msra.mxu0 0.0
        %1545 = vmatprep.subr.mxu0 0.0
        %1546 = vmatpush2.xpose.msra.mxu0 0.0
        %1547 = vmatprep.subr.mxu0 0.0
        %1548 = vmatpush2.xpose.msra.mxu0 0.0
        %1549 = vmatprep.subr.mxu0 0.0
        %1550 = vmatpush2.xpose.msra.mxu0 0.0
        %1551 = vmatprep.subr.mxu0 0.0
        %1552 = vmatpush2.xpose.msra.mxu0 0.0
        %1553 = vmatprep.subr.mxu0 0.0
        %1554 = vmatpush2.xpose.msra.mxu0 0.0
        %1555 = vmatprep.subr.mxu0 0.0
        %1556 = vmatpush2.xpose.msra.mxu0 0.0
        %1557 = vmatprep.subr.mxu0 0.0
        %1558 = vmatpush2.xpose.msra.mxu0 0.0
        %1559 = vmatprep.subr.mxu0 0.0
        %1560 = vmatpush2.xpose.msra.mxu0 0.0
        %1561 = vmatprep.subr.mxu0 0.0
        %1562 = vmatpush2.xpose.msra.mxu0 0.0
        %1563 = vmatprep.subr.mxu0 0.0
        %1564 = vmatpush2.xpose.msra.mxu0 0.0
        %1565 = vmatprep.mubr.f32.mxu0 0.0
        %1566 = vmatmul.mubr.f32.gmra.mxu0 %v1352
        %v1567 = vpop.f32.mrf.mxu0
        %v1568 = vadd.f32 %v1411, %v1567
        %v1569 = vpop.f32.mrf.mxu0
        %1570 = vdwg.mxu0
        %1571 = vmatprep.subr.mxu0 0.0
        %1572 = vmatpush1.xpose.msra.mxu0 0.0
        %1573 = vmatprep.subr.mxu0 0.0
        %1574 = vmatpush1.xpose.msra.mxu0 0.0
        %1575 = vmatprep.subr.mxu0 0.0
        %1576 = vmatpush1.xpose.msra.mxu0 0.0
        %1577 = vmatprep.subr.mxu0 0.0
        %1578 = vmatpush1.xpose.msra.mxu0 0.0
        %1579 = vmatprep.subr.mxu0 0.0
        %1580 = vmatpush1.xpose.msra.mxu0 0.0
        %1581 = vmatprep.subr.mxu0 0.0
        %1582 = vmatpush1.xpose.msra.mxu0 0.0
        %1583 = vmatprep.subr.mxu0 0.0
        %1584 = vmatpush1.xpose.msra.mxu0 0.0
        %1585 = vmatprep.subr.mxu0 0.0
        %1586 = vmatpush1.xpose.msra.mxu0 0.0
        %1587 = vmatprep.subr.mxu0 0.0
        %1588 = vmatpush1.xpose.msra.mxu0 0.0
        %1589 = vmatprep.subr.mxu0 0.0
        %1590 = vmatpush1.xpose.msra.mxu0 0.0
        %1591 = vmatprep.subr.mxu0 0.0
        %1592 = vmatpush1.xpose.msra.mxu0 0.0
        %1593 = vmatprep.subr.mxu0 0.0
        %1594 = vmatpush1.xpose.msra.mxu0 0.0
        %1595 = vmatprep.subr.mxu0 0.0
        %1596 = vmatpush1.xpose.msra.mxu0 0.0
        %1597 = vmatprep.subr.mxu0 0.0
        %1598 = vmatpush1.xpose.msra.mxu0 0.0
        %1599 = vmatprep.subr.mxu0 0.0
        %1600 = vmatpush1.xpose.msra.mxu0 0.0
        %1601 = vmatprep.subr.mxu0 0.0
        %1602 = vmatpush1.xpose.msra.mxu0 %v1215
        %1603 = vmatprep.subr.mxu0 0.0
        %1604 = vmatpush2.xpose.msra.mxu0 0.0
        %1605 = vmatprep.subr.mxu0 0.0
        %1606 = vmatpush2.xpose.msra.mxu0 0.0
        %1607 = vmatprep.subr.mxu0 0.0
        %1608 = vmatpush2.xpose.msra.mxu0 0.0
        %1609 = vmatprep.subr.mxu0 0.0
        %1610 = vmatpush2.xpose.msra.mxu0 0.0
        %1611 = vmatprep.subr.mxu0 0.0
        %1612 = vmatpush2.xpose.msra.mxu0 0.0
        %1613 = vmatprep.subr.mxu0 0.0
        %1614 = vmatpush2.xpose.msra.mxu0 0.0
        %1615 = vmatprep.subr.mxu0 0.0
        %1616 = vmatpush2.xpose.msra.mxu0 0.0
        %1617 = vmatprep.subr.mxu0 0.0
        %1618 = vmatpush2.xpose.msra.mxu0 0.0
        %1619 = vmatprep.subr.mxu0 0.0
        %1620 = vmatpush2.xpose.msra.mxu0 0.0
        %1621 = vmatprep.subr.mxu0 0.0
        %1622 = vmatpush2.xpose.msra.mxu0 0.0
        %1623 = vmatprep.subr.mxu0 0.0
        %1624 = vmatpush2.xpose.msra.mxu0 0.0
        %1625 = vmatprep.subr.mxu0 0.0
        %1626 = vmatpush2.xpose.msra.mxu0 0.0
        %1627 = vmatprep.subr.mxu0 0.0
        %1628 = vmatpush2.xpose.msra.mxu0 0.0
        %1629 = vmatprep.subr.mxu0 0.0
        %1630 = vmatpush2.xpose.msra.mxu0 0.0
        %1631 = vmatprep.subr.mxu0 0.0
        %1632 = vmatpush2.xpose.msra.mxu0 0.0
        %1633 = vmatprep.subr.mxu0 0.0
        %1634 = vmatpush2.xpose.msra.mxu0 0.0
        %1635 = vmatprep.mubr.f32.mxu0 0.0
        %1636 = vmatmul.mubr.f32.gmra.mxu0 %v1360
        %v1637 = vpop.f32.mrf.mxu0
        %v1638 = vadd.f32 %v1419, %v1637
        %v1639 = vpop.f32.mrf.mxu0
        %1640 = vdwg.mxu0
        %1641 = vmatprep.subr.mxu0 0.0
        %1642 = vmatpush1.xpose.msra.mxu0 0.0
        %1643 = vmatprep.subr.mxu0 0.0
        %1644 = vmatpush1.xpose.msra.mxu0 0.0
        %1645 = vmatprep.subr.mxu0 0.0
        %1646 = vmatpush1.xpose.msra.mxu0 0.0
        %1647 = vmatprep.subr.mxu0 0.0
        %1648 = vmatpush1.xpose.msra.mxu0 0.0
        %1649 = vmatprep.subr.mxu0 0.0
        %1650 = vmatpush1.xpose.msra.mxu0 0.0
        %1651 = vmatprep.subr.mxu0 0.0
        %1652 = vmatpush1.xpose.msra.mxu0 0.0
        %1653 = vmatprep.subr.mxu0 0.0
        %1654 = vmatpush1.xpose.msra.mxu0 0.0
        %1655 = vmatprep.subr.mxu0 0.0
        %1656 = vmatpush1.xpose.msra.mxu0 0.0
        %1657 = vmatprep.subr.mxu0 0.0
        %1658 = vmatpush1.xpose.msra.mxu0 0.0
        %1659 = vmatprep.subr.mxu0 0.0
        %1660 = vmatpush1.xpose.msra.mxu0 0.0
        %1661 = vmatprep.subr.mxu0 0.0
        %1662 = vmatpush1.xpose.msra.mxu0 0.0
        %1663 = vmatprep.subr.mxu0 0.0
        %1664 = vmatpush1.xpose.msra.mxu0 0.0
        %1665 = vmatprep.subr.mxu0 0.0
        %1666 = vmatpush1.xpose.msra.mxu0 0.0
        %1667 = vmatprep.subr.mxu0 0.0
        %1668 = vmatpush1.xpose.msra.mxu0 0.0
        %1669 = vmatprep.subr.mxu0 0.0
        %1670 = vmatpush1.xpose.msra.mxu0 0.0
        %1671 = vmatprep.subr.mxu0 0.0
        %1672 = vmatpush1.xpose.msra.mxu0 %v1216
        %1673 = vmatprep.subr.mxu0 0.0
        %1674 = vmatpush2.xpose.msra.mxu0 0.0
        %1675 = vmatprep.subr.mxu0 0.0
        %1676 = vmatpush2.xpose.msra.mxu0 0.0
        %1677 = vmatprep.subr.mxu0 0.0
        %1678 = vmatpush2.xpose.msra.mxu0 0.0
        %1679 = vmatprep.subr.mxu0 0.0
        %1680 = vmatpush2.xpose.msra.mxu0 0.0
        %1681 = vmatprep.subr.mxu0 0.0
        %1682 = vmatpush2.xpose.msra.mxu0 0.0
        %1683 = vmatprep.subr.mxu0 0.0
        %1684 = vmatpush2.xpose.msra.mxu0 0.0
        %1685 = vmatprep.subr.mxu0 0.0
        %1686 = vmatpush2.xpose.msra.mxu0 0.0
        %1687 = vmatprep.subr.mxu0 0.0
        %1688 = vmatpush2.xpose.msra.mxu0 0.0
        %1689 = vmatprep.subr.mxu0 0.0
        %1690 = vmatpush2.xpose.msra.mxu0 0.0
        %1691 = vmatprep.subr.mxu0 0.0
        %1692 = vmatpush2.xpose.msra.mxu0 0.0
        %1693 = vmatprep.subr.mxu0 0.0
        %1694 = vmatpush2.xpose.msra.mxu0 0.0
        %1695 = vmatprep.subr.mxu0 0.0
        %1696 = vmatpush2.xpose.msra.mxu0 0.0
        %1697 = vmatprep.subr.mxu0 0.0
        %1698 = vmatpush2.xpose.msra.mxu0 0.0
        %1699 = vmatprep.subr.mxu0 0.0
        %1700 = vmatpush2.xpose.msra.mxu0 0.0
        %1701 = vmatprep.subr.mxu0 0.0
        %1702 = vmatpush2.xpose.msra.mxu0 0.0
        %1703 = vmatprep.subr.mxu0 0.0
        %1704 = vmatpush2.xpose.msra.mxu0 0.0
        %1705 = vmatprep.mubr.f32.mxu0 0.0
        %1706 = vmatmul.mubr.f32.gmra.mxu0 %v1362
        %v1707 = vpop.f32.mrf.mxu0
        %v1708 = vadd.f32 %v1421, %v1707
        %v1709 = vpop.f32.mrf.mxu0
        %1710 = vdwg.mxu0
        %1711 = vmatprep.subr.mxu0 0.0
        %1712 = vmatpush1.xpose.msra.mxu0 0.0
        %1713 = vmatprep.subr.mxu0 0.0
        %1714 = vmatpush1.xpose.msra.mxu0 0.0
        %1715 = vmatprep.subr.mxu0 0.0
        %1716 = vmatpush1.xpose.msra.mxu0 0.0
        %1717 = vmatprep.subr.mxu0 0.0
        %1718 = vmatpush1.xpose.msra.mxu0 0.0
        %1719 = vmatprep.subr.mxu0 0.0
        %1720 = vmatpush1.xpose.msra.mxu0 0.0
        %1721 = vmatprep.subr.mxu0 0.0
        %1722 = vmatpush1.xpose.msra.mxu0 0.0
        %1723 = vmatprep.subr.mxu0 0.0
        %1724 = vmatpush1.xpose.msra.mxu0 0.0
        %1725 = vmatprep.subr.mxu0 0.0
        %1726 = vmatpush1.xpose.msra.mxu0 0.0
        %1727 = vmatprep.subr.mxu0 0.0
        %1728 = vmatpush1.xpose.msra.mxu0 0.0
        %1729 = vmatprep.subr.mxu0 0.0
        %1730 = vmatpush1.xpose.msra.mxu0 0.0
        %1731 = vmatprep.subr.mxu0 0.0
        %1732 = vmatpush1.xpose.msra.mxu0 0.0
        %1733 = vmatprep.subr.mxu0 0.0
        %1734 = vmatpush1.xpose.msra.mxu0 0.0
        %1735 = vmatprep.subr.mxu0 0.0
        %1736 = vmatpush1.xpose.msra.mxu0 0.0
        %1737 = vmatprep.subr.mxu0 0.0
        %1738 = vmatpush1.xpose.msra.mxu0 0.0
        %1739 = vmatprep.subr.mxu0 0.0
        %1740 = vmatpush1.xpose.msra.mxu0 0.0
        %1741 = vmatprep.subr.mxu0 0.0
        %1742 = vmatpush1.xpose.msra.mxu0 %v1217
        %1743 = vmatprep.subr.mxu0 0.0
        %1744 = vmatpush2.xpose.msra.mxu0 0.0
        %1745 = vmatprep.subr.mxu0 0.0
        %1746 = vmatpush2.xpose.msra.mxu0 0.0
        %1747 = vmatprep.subr.mxu0 0.0
        %1748 = vmatpush2.xpose.msra.mxu0 0.0
        %1749 = vmatprep.subr.mxu0 0.0
        %1750 = vmatpush2.xpose.msra.mxu0 0.0
        %1751 = vmatprep.subr.mxu0 0.0
        %1752 = vmatpush2.xpose.msra.mxu0 0.0
        %1753 = vmatprep.subr.mxu0 0.0
        %1754 = vmatpush2.xpose.msra.mxu0 0.0
        %1755 = vmatprep.subr.mxu0 0.0
        %1756 = vmatpush2.xpose.msra.mxu0 0.0
        %1757 = vmatprep.subr.mxu0 0.0
        %1758 = vmatpush2.xpose.msra.mxu0 0.0
        %1759 = vmatprep.subr.mxu0 0.0
        %1760 = vmatpush2.xpose.msra.mxu0 0.0
        %1761 = vmatprep.subr.mxu0 0.0
        %1762 = vmatpush2.xpose.msra.mxu0 0.0
        %1763 = vmatprep.subr.mxu0 0.0
        %1764 = vmatpush2.xpose.msra.mxu0 0.0
        %1765 = vmatprep.subr.mxu0 0.0
        %1766 = vmatpush2.xpose.msra.mxu0 0.0
        %1767 = vmatprep.subr.mxu0 0.0
        %1768 = vmatpush2.xpose.msra.mxu0 0.0
        %1769 = vmatprep.subr.mxu0 0.0
        %1770 = vmatpush2.xpose.msra.mxu0 0.0
        %1771 = vmatprep.subr.mxu0 0.0
        %1772 = vmatpush2.xpose.msra.mxu0 0.0
        %1773 = vmatprep.subr.mxu0 0.0
        %1774 = vmatpush2.xpose.msra.mxu0 0.0
        %1775 = vmatprep.mubr.f32.mxu0 0.0
        %1776 = vmatmul.mubr.f32.gmra.mxu0 %v1345
        %v1777 = vpop.f32.mrf.mxu0
        %v1778 = vadd.f32 %v1404, %v1777
        %v1779 = vpop.f32.mrf.mxu0
        %1780 = vdwg.mxu0
        %1781 = vmatprep.subr.mxu0 0.0
        %1782 = vmatpush1.xpose.msra.mxu0 0.0
        %1783 = vmatprep.subr.mxu0 0.0
        %1784 = vmatpush1.xpose.msra.mxu0 0.0
        %1785 = vmatprep.subr.mxu0 0.0
        %1786 = vmatpush1.xpose.msra.mxu0 0.0
        %1787 = vmatprep.subr.mxu0 0.0
        %1788 = vmatpush1.xpose.msra.mxu0 0.0
        %1789 = vmatprep.subr.mxu0 0.0
        %1790 = vmatpush1.xpose.msra.mxu0 0.0
        %1791 = vmatprep.subr.mxu0 0.0
        %1792 = vmatpush1.xpose.msra.mxu0 0.0
        %1793 = vmatprep.subr.mxu0 0.0
        %1794 = vmatpush1.xpose.msra.mxu0 0.0
        %1795 = vmatprep.subr.mxu0 0.0
        %1796 = vmatpush1.xpose.msra.mxu0 0.0
        %1797 = vmatprep.subr.mxu0 0.0
        %1798 = vmatpush1.xpose.msra.mxu0 0.0
        %1799 = vmatprep.subr.mxu0 0.0
        %1800 = vmatpush1.xpose.msra.mxu0 0.0
        %1801 = vmatprep.subr.mxu0 0.0
        %1802 = vmatpush1.xpose.msra.mxu0 0.0
        %1803 = vmatprep.subr.mxu0 0.0
        %1804 = vmatpush1.xpose.msra.mxu0 0.0
        %1805 = vmatprep.subr.mxu0 0.0
        %1806 = vmatpush1.xpose.msra.mxu0 0.0
        %1807 = vmatprep.subr.mxu0 0.0
        %1808 = vmatpush1.xpose.msra.mxu0 0.0
        %1809 = vmatprep.subr.mxu0 0.0
        %1810 = vmatpush1.xpose.msra.mxu0 0.0
        %1811 = vmatprep.subr.mxu0 0.0
        %1812 = vmatpush1.xpose.msra.mxu0 %v1218
        %1813 = vmatprep.subr.mxu0 0.0
        %1814 = vmatpush2.xpose.msra.mxu0 0.0
        %1815 = vmatprep.subr.mxu0 0.0
        %1816 = vmatpush2.xpose.msra.mxu0 0.0
        %1817 = vmatprep.subr.mxu0 0.0
        %1818 = vmatpush2.xpose.msra.mxu0 0.0
        %1819 = vmatprep.subr.mxu0 0.0
        %1820 = vmatpush2.xpose.msra.mxu0 0.0
        %1821 = vmatprep.subr.mxu0 0.0
        %1822 = vmatpush2.xpose.msra.mxu0 0.0
        %1823 = vmatprep.subr.mxu0 0.0
        %1824 = vmatpush2.xpose.msra.mxu0 0.0
        %1825 = vmatprep.subr.mxu0 0.0
        %1826 = vmatpush2.xpose.msra.mxu0 0.0
        %1827 = vmatprep.subr.mxu0 0.0
        %1828 = vmatpush2.xpose.msra.mxu0 0.0
        %1829 = vmatprep.subr.mxu0 0.0
        %1830 = vmatpush2.xpose.msra.mxu0 0.0
        %1831 = vmatprep.subr.mxu0 0.0
        %1832 = vmatpush2.xpose.msra.mxu0 0.0
        %1833 = vmatprep.subr.mxu0 0.0
        %1834 = vmatpush2.xpose.msra.mxu0 0.0
        %1835 = vmatprep.subr.mxu0 0.0
        %1836 = vmatpush2.xpose.msra.mxu0 0.0
        %1837 = vmatprep.subr.mxu0 0.0
        %1838 = vmatpush2.xpose.msra.mxu0 0.0
        %1839 = vmatprep.subr.mxu0 0.0
        %1840 = vmatpush2.xpose.msra.mxu0 0.0
        %1841 = vmatprep.subr.mxu0 0.0
        %1842 = vmatpush2.xpose.msra.mxu0 0.0
        %1843 = vmatprep.subr.mxu0 0.0
        %1844 = vmatpush2.xpose.msra.mxu0 0.0
        %1845 = vmatprep.mubr.f32.mxu0 0.0
        %1846 = vmatmul.mubr.f32.gmra.mxu0 %v1359
        %v1847 = vpop.f32.mrf.mxu0
        %v1848 = vadd.f32 %v1418, %v1847
        %v1849 = vpop.f32.mrf.mxu0
        %1850 = vdwg.mxu0
        %1851 = vmatprep.subr.mxu0 0.0
        %1852 = vmatpush1.xpose.msra.mxu0 0.0
        %1853 = vmatprep.subr.mxu0 0.0
        %1854 = vmatpush1.xpose.msra.mxu0 0.0
        %1855 = vmatprep.subr.mxu0 0.0
        %1856 = vmatpush1.xpose.msra.mxu0 0.0
        %1857 = vmatprep.subr.mxu0 0.0
        %1858 = vmatpush1.xpose.msra.mxu0 0.0
        %1859 = vmatprep.subr.mxu0 0.0
        %1860 = vmatpush1.xpose.msra.mxu0 0.0
        %1861 = vmatprep.subr.mxu0 0.0
        %1862 = vmatpush1.xpose.msra.mxu0 0.0
        %1863 = vmatprep.subr.mxu0 0.0
        %1864 = vmatpush1.xpose.msra.mxu0 0.0
        %1865 = vmatprep.subr.mxu0 0.0
        %1866 = vmatpush1.xpose.msra.mxu0 0.0
        %1867 = vmatprep.subr.mxu0 0.0
        %1868 = vmatpush1.xpose.msra.mxu0 0.0
        %1869 = vmatprep.subr.mxu0 0.0
        %1870 = vmatpush1.xpose.msra.mxu0 0.0
        %1871 = vmatprep.subr.mxu0 0.0
        %1872 = vmatpush1.xpose.msra.mxu0 0.0
        %1873 = vmatprep.subr.mxu0 0.0
        %1874 = vmatpush1.xpose.msra.mxu0 0.0
        %1875 = vmatprep.subr.mxu0 0.0
        %1876 = vmatpush1.xpose.msra.mxu0 0.0
        %1877 = vmatprep.subr.mxu0 0.0
        %1878 = vmatpush1.xpose.msra.mxu0 0.0
        %1879 = vmatprep.subr.mxu0 0.0
        %1880 = vmatpush1.xpose.msra.mxu0 0.0
        %1881 = vmatprep.subr.mxu0 0.0
        %1882 = vmatpush1.xpose.msra.mxu0 %v1219
        %1883 = vmatprep.subr.mxu0 0.0
        %1884 = vmatpush2.xpose.msra.mxu0 0.0
        %1885 = vmatprep.subr.mxu0 0.0
        %1886 = vmatpush2.xpose.msra.mxu0 0.0
        %1887 = vmatprep.subr.mxu0 0.0
        %1888 = vmatpush2.xpose.msra.mxu0 0.0
        %1889 = vmatprep.subr.mxu0 0.0
        %1890 = vmatpush2.xpose.msra.mxu0 0.0
        %1891 = vmatprep.subr.mxu0 0.0
        %1892 = vmatpush2.xpose.msra.mxu0 0.0
        %1893 = vmatprep.subr.mxu0 0.0
        %1894 = vmatpush2.xpose.msra.mxu0 0.0
        %1895 = vmatprep.subr.mxu0 0.0
        %1896 = vmatpush2.xpose.msra.mxu0 0.0
        %1897 = vmatprep.subr.mxu0 0.0
        %1898 = vmatpush2.xpose.msra.mxu0 0.0
        %1899 = vmatprep.subr.mxu0 0.0
        %1900 = vmatpush2.xpose.msra.mxu0 0.0
        %1901 = vmatprep.subr.mxu0 0.0
        %1902 = vmatpush2.xpose.msra.mxu0 0.0
        %1903 = vmatprep.subr.mxu0 0.0
        %1904 = vmatpush2.xpose.msra.mxu0 0.0
        %1905 = vmatprep.subr.mxu0 0.0
        %1906 = vmatpush2.xpose.msra.mxu0 0.0
        %1907 = vmatprep.subr.mxu0 0.0
        %1908 = vmatpush2.xpose.msra.mxu0 0.0
        %1909 = vmatprep.subr.mxu0 0.0
        %1910 = vmatpush2.xpose.msra.mxu0 0.0
        %1911 = vmatprep.subr.mxu0 0.0
        %1912 = vmatpush2.xpose.msra.mxu0 0.0
        %1913 = vmatprep.subr.mxu0 0.0
        %1914 = vmatpush2.xpose.msra.mxu0 0.0
        %1915 = vmatprep.mubr.f32.mxu0 0.0
        %1916 = vmatmul.mubr.f32.gmra.mxu0 %v1361
        %v1917 = vpop.f32.mrf.mxu0
        %v1918 = vadd.f32 %v1420, %v1917
        %v1919 = vpop.f32.mrf.mxu0
        %1920 = vdwg.mxu0
        %1921 = vmatprep.subr.mxu0 0.0
        %1922 = vmatpush1.xpose.msra.mxu0 0.0
        %1923 = vmatprep.subr.mxu0 0.0
        %1924 = vmatpush1.xpose.msra.mxu0 0.0
        %1925 = vmatprep.subr.mxu0 0.0
        %1926 = vmatpush1.xpose.msra.mxu0 0.0
        %1927 = vmatprep.subr.mxu0 0.0
        %1928 = vmatpush1.xpose.msra.mxu0 0.0
        %1929 = vmatprep.subr.mxu0 0.0
        %1930 = vmatpush1.xpose.msra.mxu0 0.0
        %1931 = vmatprep.subr.mxu0 0.0
        %1932 = vmatpush1.xpose.msra.mxu0 0.0
        %1933 = vmatprep.subr.mxu0 0.0
        %1934 = vmatpush1.xpose.msra.mxu0 0.0
        %1935 = vmatprep.subr.mxu0 0.0
        %1936 = vmatpush1.xpose.msra.mxu0 0.0
        %1937 = vmatprep.subr.mxu0 0.0
        %1938 = vmatpush1.xpose.msra.mxu0 0.0
        %1939 = vmatprep.subr.mxu0 0.0
        %1940 = vmatpush1.xpose.msra.mxu0 0.0
        %1941 = vmatprep.subr.mxu0 0.0
        %1942 = vmatpush1.xpose.msra.mxu0 0.0
        %1943 = vmatprep.subr.mxu0 0.0
        %1944 = vmatpush1.xpose.msra.mxu0 0.0
        %1945 = vmatprep.subr.mxu0 0.0
        %1946 = vmatpush1.xpose.msra.mxu0 0.0
        %1947 = vmatprep.subr.mxu0 0.0
        %1948 = vmatpush1.xpose.msra.mxu0 0.0
        %1949 = vmatprep.subr.mxu0 0.0
        %1950 = vmatpush1.xpose.msra.mxu0 0.0
        %1951 = vmatprep.subr.mxu0 0.0
        %1952 = vmatpush1.xpose.msra.mxu0 %v1220
        %1953 = vmatprep.subr.mxu0 0.0
        %1954 = vmatpush2.xpose.msra.mxu0 0.0
        %1955 = vmatprep.subr.mxu0 0.0
        %1956 = vmatpush2.xpose.msra.mxu0 0.0
        %1957 = vmatprep.subr.mxu0 0.0
        %1958 = vmatpush2.xpose.msra.mxu0 0.0
        %1959 = vmatprep.subr.mxu0 0.0
        %1960 = vmatpush2.xpose.msra.mxu0 0.0
        %1961 = vmatprep.subr.mxu0 0.0
        %1962 = vmatpush2.xpose.msra.mxu0 0.0
        %1963 = vmatprep.subr.mxu0 0.0
        %1964 = vmatpush2.xpose.msra.mxu0 0.0
        %1965 = vmatprep.subr.mxu0 0.0
        %1966 = vmatpush2.xpose.msra.mxu0 0.0
        %1967 = vmatprep.subr.mxu0 0.0
        %1968 = vmatpush2.xpose.msra.mxu0 0.0
        %1969 = vmatprep.subr.mxu0 0.0
        %1970 = vmatpush2.xpose.msra.mxu0 0.0
        %1971 = vmatprep.subr.mxu0 0.0
        %1972 = vmatpush2.xpose.msra.mxu0 0.0
        %1973 = vmatprep.subr.mxu0 0.0
        %1974 = vmatpush2.xpose.msra.mxu0 0.0
        %1975 = vmatprep.subr.mxu0 0.0
        %1976 = vmatpush2.xpose.msra.mxu0 0.0
        %1977 = vmatprep.subr.mxu0 0.0
        %1978 = vmatpush2.xpose.msra.mxu0 0.0
        %1979 = vmatprep.subr.mxu0 0.0
        %1980 = vmatpush2.xpose.msra.mxu0 0.0
        %1981 = vmatprep.subr.mxu0 0.0
        %1982 = vmatpush2.xpose.msra.mxu0 0.0
        %1983 = vmatprep.subr.mxu0 0.0
        %1984 = vmatpush2.xpose.msra.mxu0 0.0
        %1985 = vmatprep.mubr.f32.mxu0 0.0
        %1986 = vmatmul.mubr.f32.gmra.mxu0 %v1363
        %v1987 = vpop.f32.mrf.mxu0
        %v1988 = vadd.f32 %v1422, %v1987
        %v1989 = vpop.f32.mrf.mxu0
        %1990 = vdwg.mxu0
        %vm1991 = vcmask 57344
        %v1992 = vsel %vm1991, %v1498, -inf
        %1993 = vmax.xlane.f32.xlu0 %v1992
        %v1994 = vpop.xlane.xlu0 %1993
        %v1995 = vsel %vm1991, %v1568, -inf
        %1996 = vmax.xlane.f32.xlu0 %v1995
        %v1997 = vpop.xlane.xlu0 %1996
        %v1998 = vsel %vm1991, %v1638, -inf
        %1999 = vmax.xlane.f32.xlu0 %v1998
        %v2000 = vpop.xlane.xlu0 %1999
        %v2001 = vsel %vm1991, %v1708, -inf
        %2002 = vmax.xlane.f32.xlu0 %v2001
        %v2003 = vpop.xlane.xlu0 %2002
        %v2004 = vsel %vm1991, %v1778, -inf
        %2005 = vmax.xlane.f32.xlu0 %v2004
        %v2006 = vpop.xlane.xlu0 %2005
        %v2007 = vsel %vm1991, %v1848, -inf
        %2008 = vmax.xlane.f32.xlu0 %v2007
        %v2009 = vpop.xlane.xlu0 %2008
        %v2010 = vsel %vm1991, %v1918, -inf
        %2011 = vmax.xlane.f32.xlu0 %v2010
        %v2012 = vpop.xlane.xlu0 %2011
        %v2013 = vsel %vm1991, %v1988, -inf
        %2014 = vmax.xlane.f32.xlu0 %v2013
        %v2015 = vpop.xlane.xlu0 %2014
        %v2016 = vsub.f32 %v1498, %v1994
        %v2017 = vsub.f32 %v1568, %v1997
        %v2018 = vsub.f32 %v1638, %v2000
        %v2019 = vsub.f32 %v1708, %v2003
        %v2020 = vsub.f32 %v1778, %v2006
        %v2021 = vsub.f32 %v1848, %v2009
        %v2022 = vsub.f32 %v1918, %v2012
        %v2023 = vsub.f32 %v1988, %v2015
        %v2024 = vmul.f32 %v2016, 1.442695
        %v2025 = vpow.pop %v2024
        %v2026 = vmul.f32 %v2017, 1.442695
        %v2027 = vpow.pop %v2026
        %v2028 = vmul.f32 %v2018, 1.442695
        %v2029 = vpow.pop %v2028
        %v2030 = vmul.f32 %v2019, 1.442695
        %v2031 = vpow.pop %v2030
        %v2032 = vmul.f32 %v2020, 1.442695
        %v2033 = vpow.pop %v2032
        %v2034 = vmul.f32 %v2021, 1.442695
        %v2035 = vpow.pop %v2034
        %v2036 = vmul.f32 %v2022, 1.442695
        %v2037 = vpow.pop %v2036
        %v2038 = vmul.f32 %v2023, 1.442695
        %v2039 = vpow.pop %v2038
        %v2040 = vsel %vm1991, %v2025, 0.0
        %2041 = vadd.xlane.f32.xlu0 %v2040
        %v2042 = vpop.xlane.xlu0 %2041
        %v2043 = vsel %vm1991, %v2027, 0.0
        %2044 = vadd.xlane.f32.xlu0 %v2043
        %v2045 = vpop.xlane.xlu0 %2044
        %v2046 = vsel %vm1991, %v2029, 0.0
        %2047 = vadd.xlane.f32.xlu0 %v2046
        %v2048 = vpop.xlane.xlu0 %2047
        %v2049 = vsel %vm1991, %v2031, 0.0
        %2050 = vadd.xlane.f32.xlu0 %v2049
        %v2051 = vpop.xlane.xlu0 %2050
        %v2052 = vsel %vm1991, %v2033, 0.0
        %2053 = vadd.xlane.f32.xlu0 %v2052
        %v2054 = vpop.xlane.xlu0 %2053
        %v2055 = vsel %vm1991, %v2035, 0.0
        %2056 = vadd.xlane.f32.xlu0 %v2055
        %v2057 = vpop.xlane.xlu0 %2056
        %v2058 = vsel %vm1991, %v2037, 0.0
        %2059 = vadd.xlane.f32.xlu0 %v2058
        %v2060 = vpop.xlane.xlu0 %2059
        %v2061 = vsel %vm1991, %v2039, 0.0
        %2062 = vadd.xlane.f32.xlu0 %v2061
        %v2063 = vpop.xlane.xlu0 %2062
        %v2064 = vrcp.pop %v2042
        %v2065 = vrcp.pop %v2045
        %v2066 = vrcp.pop %v2048
        %v2067 = vrcp.pop %v2051
        %v2068 = vrcp.pop %v2054
        %v2069 = vrcp.pop %v2057
        %v2070 = vrcp.pop %v2060
        %v2071 = vrcp.pop %v2063
        %v2072 = vmul.f32 %v2025, %v2064
        %v2073 = vmul.f32 %v2027, %v2065
        %v2074 = vmul.f32 %v2029, %v2066
        %v2075 = vmul.f32 %v2031, %v2067
        %v2076 = vmul.f32 %v2033, %v2068
        %v2077 = vmul.f32 %v2035, %v2069
        %v2078 = vmul.f32 %v2037, %v2070
        %v2079 = vmul.f32 %v2039, %v2071
        %vm2080 = vcmask 64512
        %v2082 = vsel %vm2080, %v2072, 0
        %2084 = vmatprep.subr.mxu0 0.0
        %2085 = vmatpush1.msra.mxu0 0.0
        %2086 = vmatprep.subr.mxu0 0.0
        %2087 = vmatpush1.msra.mxu0 0.0
        %2088 = vmatprep.subr.mxu0 0.0
        %2089 = vmatpush1.msra.mxu0 0.0
        %2090 = vmatprep.subr.mxu0 0.0
        %2091 = vmatpush1.msra.mxu0 0.0
        %2092 = vmatprep.subr.mxu0 0.0
        %2093 = vmatpush1.msra.mxu0 0.0
        %2094 = vmatprep.subr.mxu0 0.0
        %2095 = vmatpush1.msra.mxu0 0.0
        %2096 = vmatprep.subr.mxu0 0.0
        %2097 = vmatpush1.msra.mxu0 0.0
        %2098 = vmatprep.subr.mxu0 0.0
        %2099 = vmatpush1.msra.mxu0 0.0
        %2100 = vmatprep.subr.mxu0 0.0
        %2101 = vmatpush1.msra.mxu0 0.0
        %2102 = vmatprep.subr.mxu0 0.0
        %2103 = vmatpush1.msra.mxu0 0.0
        %2104 = vmatprep.subr.mxu0 0.0
        %2105 = vmatpush1.msra.mxu0 0.0
        %2106 = vmatprep.subr.mxu0 0.0
        %2107 = vmatpush1.msra.mxu0 0.0
        %2108 = vmatprep.subr.mxu0 0.0
        %2109 = vmatpush1.msra.mxu0 0.0
        %2110 = vmatprep.subr.mxu0 0.0
        %2111 = vmatpush1.msra.mxu0 0.0
        %2112 = vmatprep.subr.mxu0 0.0
        %2113 = vmatpush1.msra.mxu0 0.0
        %2114 = vmatprep.subr.mxu0 0.0
        %2115 = vmatpush1.msra.mxu0 %v1213
        %2116 = vmatprep.subr.mxu0 0.0
        %2117 = vmatpush2.msra.mxu0 0.0
        %2118 = vmatprep.subr.mxu0 0.0
        %2119 = vmatpush2.msra.mxu0 0.0
        %2120 = vmatprep.subr.mxu0 0.0
        %2121 = vmatpush2.msra.mxu0 0.0
        %2122 = vmatprep.subr.mxu0 0.0
        %2123 = vmatpush2.msra.mxu0 0.0
        %2124 = vmatprep.subr.mxu0 0.0
        %2125 = vmatpush2.msra.mxu0 0.0
        %2126 = vmatprep.subr.mxu0 0.0
        %2127 = vmatpush2.msra.mxu0 0.0
        %2128 = vmatprep.subr.mxu0 0.0
        %2129 = vmatpush2.msra.mxu0 0.0
        %2130 = vmatprep.subr.mxu0 0.0
        %2131 = vmatpush2.msra.mxu0 0.0
        %2132 = vmatprep.subr.mxu0 0.0
        %2133 = vmatpush2.msra.mxu0 0.0
        %2134 = vmatprep.subr.mxu0 0.0
        %2135 = vmatpush2.msra.mxu0 0.0
        %2136 = vmatprep.subr.mxu0 0.0
        %2137 = vmatpush2.msra.mxu0 0.0
        %2138 = vmatprep.subr.mxu0 0.0
        %2139 = vmatpush2.msra.mxu0 0.0
        %2140 = vmatprep.subr.mxu0 0.0
        %2141 = vmatpush2.msra.mxu0 0.0
        %2142 = vmatprep.subr.mxu0 0.0
        %2143 = vmatpush2.msra.mxu0 0.0
        %2144 = vmatprep.subr.mxu0 0.0
        %2145 = vmatpush2.msra.mxu0 0.0
        %2146 = vmatprep.subr.mxu0 0.0
        %2147 = vmatpush2.msra.mxu0 0.0
        %2148 = vmatprep.mubr.f32.mxu0 0.0
        %2149 = vmatmul.mubr.f32.gmra.mxu0 %v2082
        %v2150 = vpop.f32.mrf.mxu0
        %v2151 = vadd.f32 0.0, %v2150
        %v2152 = vpop.f32.mrf.mxu0
        %2153 = vdwg.mxu0
        %v2155 = vsel %vm2080, %v2073, 0
        %2157 = vmatprep.subr.mxu0 0.0
        %2158 = vmatpush1.msra.mxu0 0.0
        %2159 = vmatprep.subr.mxu0 0.0
        %2160 = vmatpush1.msra.mxu0 0.0
        %2161 = vmatprep.subr.mxu0 0.0
        %2162 = vmatpush1.msra.mxu0 0.0
        %2163 = vmatprep.subr.mxu0 0.0
        %2164 = vmatpush1.msra.mxu0 0.0
        %2165 = vmatprep.subr.mxu0 0.0
        %2166 = vmatpush1.msra.mxu0 0.0
        %2167 = vmatprep.subr.mxu0 0.0
        %2168 = vmatpush1.msra.mxu0 0.0
        %2169 = vmatprep.subr.mxu0 0.0
        %2170 = vmatpush1.msra.mxu0 0.0
        %2171 = vmatprep.subr.mxu0 0.0
        %2172 = vmatpush1.msra.mxu0 0.0
        %2173 = vmatprep.subr.mxu0 0.0
        %2174 = vmatpush1.msra.mxu0 0.0
        %2175 = vmatprep.subr.mxu0 0.0
        %2176 = vmatpush1.msra.mxu0 0.0
        %2177 = vmatprep.subr.mxu0 0.0
        %2178 = vmatpush1.msra.mxu0 0.0
        %2179 = vmatprep.subr.mxu0 0.0
        %2180 = vmatpush1.msra.mxu0 0.0
        %2181 = vmatprep.subr.mxu0 0.0
        %2182 = vmatpush1.msra.mxu0 0.0
        %2183 = vmatprep.subr.mxu0 0.0
        %2184 = vmatpush1.msra.mxu0 0.0
        %2185 = vmatprep.subr.mxu0 0.0
        %2186 = vmatpush1.msra.mxu0 0.0
        %2187 = vmatprep.subr.mxu0 0.0
        %2188 = vmatpush1.msra.mxu0 %v1214
        %2189 = vmatprep.subr.mxu0 0.0
        %2190 = vmatpush2.msra.mxu0 0.0
        %2191 = vmatprep.subr.mxu0 0.0
        %2192 = vmatpush2.msra.mxu0 0.0
        %2193 = vmatprep.subr.mxu0 0.0
        %2194 = vmatpush2.msra.mxu0 0.0
        %2195 = vmatprep.subr.mxu0 0.0
        %2196 = vmatpush2.msra.mxu0 0.0
        %2197 = vmatprep.subr.mxu0 0.0
        %2198 = vmatpush2.msra.mxu0 0.0
        %2199 = vmatprep.subr.mxu0 0.0
        %2200 = vmatpush2.msra.mxu0 0.0
        %2201 = vmatprep.subr.mxu0 0.0
        %2202 = vmatpush2.msra.mxu0 0.0
        %2203 = vmatprep.subr.mxu0 0.0
        %2204 = vmatpush2.msra.mxu0 0.0
        %2205 = vmatprep.subr.mxu0 0.0
        %2206 = vmatpush2.msra.mxu0 0.0
        %2207 = vmatprep.subr.mxu0 0.0
        %2208 = vmatpush2.msra.mxu0 0.0
        %2209 = vmatprep.subr.mxu0 0.0
        %2210 = vmatpush2.msra.mxu0 0.0
        %2211 = vmatprep.subr.mxu0 0.0
        %2212 = vmatpush2.msra.mxu0 0.0
        %2213 = vmatprep.subr.mxu0 0.0
        %2214 = vmatpush2.msra.mxu0 0.0
        %2215 = vmatprep.subr.mxu0 0.0
        %2216 = vmatpush2.msra.mxu0 0.0
        %2217 = vmatprep.subr.mxu0 0.0
        %2218 = vmatpush2.msra.mxu0 0.0
        %2219 = vmatprep.subr.mxu0 0.0
        %2220 = vmatpush2.msra.mxu0 0.0
        %2221 = vmatprep.mubr.f32.mxu0 0.0
        %2222 = vmatmul.mubr.f32.gmra.mxu0 %v2155
        %v2223 = vpop.f32.mrf.mxu0
        %v2224 = vadd.f32 0.0, %v2223
        %v2225 = vpop.f32.mrf.mxu0
        %2226 = vdwg.mxu0
        %v2228 = vsel %vm2080, %v2074, 0
        %2230 = vmatprep.subr.mxu0 0.0
        %2231 = vmatpush1.msra.mxu0 0.0
        %2232 = vmatprep.subr.mxu0 0.0
        %2233 = vmatpush1.msra.mxu0 0.0
        %2234 = vmatprep.subr.mxu0 0.0
        %2235 = vmatpush1.msra.mxu0 0.0
        %2236 = vmatprep.subr.mxu0 0.0
        %2237 = vmatpush1.msra.mxu0 0.0
        %2238 = vmatprep.subr.mxu0 0.0
        %2239 = vmatpush1.msra.mxu0 0.0
        %2240 = vmatprep.subr.mxu0 0.0
        %2241 = vmatpush1.msra.mxu0 0.0
        %2242 = vmatprep.subr.mxu0 0.0
        %2243 = vmatpush1.msra.mxu0 0.0
        %2244 = vmatprep.subr.mxu0 0.0
        %2245 = vmatpush1.msra.mxu0 0.0
        %2246 = vmatprep.subr.mxu0 0.0
        %2247 = vmatpush1.msra.mxu0 0.0
        %2248 = vmatprep.subr.mxu0 0.0
        %2249 = vmatpush1.msra.mxu0 0.0
        %2250 = vmatprep.subr.mxu0 0.0
        %2251 = vmatpush1.msra.mxu0 0.0
        %2252 = vmatprep.subr.mxu0 0.0
        %2253 = vmatpush1.msra.mxu0 0.0
        %2254 = vmatprep.subr.mxu0 0.0
        %2255 = vmatpush1.msra.mxu0 0.0
        %2256 = vmatprep.subr.mxu0 0.0
        %2257 = vmatpush1.msra.mxu0 0.0
        %2258 = vmatprep.subr.mxu0 0.0
        %2259 = vmatpush1.msra.mxu0 0.0
        %2260 = vmatprep.subr.mxu0 0.0
        %2261 = vmatpush1.msra.mxu0 %v1215
        %2262 = vmatprep.subr.mxu0 0.0
        %2263 = vmatpush2.msra.mxu0 0.0
        %2264 = vmatprep.subr.mxu0 0.0
        %2265 = vmatpush2.msra.mxu0 0.0
        %2266 = vmatprep.subr.mxu0 0.0
        %2267 = vmatpush2.msra.mxu0 0.0
        %2268 = vmatprep.subr.mxu0 0.0
        %2269 = vmatpush2.msra.mxu0 0.0
        %2270 = vmatprep.subr.mxu0 0.0
        %2271 = vmatpush2.msra.mxu0 0.0
        %2272 = vmatprep.subr.mxu0 0.0
        %2273 = vmatpush2.msra.mxu0 0.0
        %2274 = vmatprep.subr.mxu0 0.0
        %2275 = vmatpush2.msra.mxu0 0.0
        %2276 = vmatprep.subr.mxu0 0.0
        %2277 = vmatpush2.msra.mxu0 0.0
        %2278 = vmatprep.subr.mxu0 0.0
        %2279 = vmatpush2.msra.mxu0 0.0
        %2280 = vmatprep.subr.mxu0 0.0
        %2281 = vmatpush2.msra.mxu0 0.0
        %2282 = vmatprep.subr.mxu0 0.0
        %2283 = vmatpush2.msra.mxu0 0.0
        %2284 = vmatprep.subr.mxu0 0.0
        %2285 = vmatpush2.msra.mxu0 0.0
        %2286 = vmatprep.subr.mxu0 0.0
        %2287 = vmatpush2.msra.mxu0 0.0
        %2288 = vmatprep.subr.mxu0 0.0
        %2289 = vmatpush2.msra.mxu0 0.0
        %2290 = vmatprep.subr.mxu0 0.0
        %2291 = vmatpush2.msra.mxu0 0.0
        %2292 = vmatprep.subr.mxu0 0.0
        %2293 = vmatpush2.msra.mxu0 0.0
        %2294 = vmatprep.mubr.f32.mxu0 0.0
        %2295 = vmatmul.mubr.f32.gmra.mxu0 %v2228
        %v2296 = vpop.f32.mrf.mxu0
        %v2297 = vadd.f32 0.0, %v2296
        %v2298 = vpop.f32.mrf.mxu0
        %2299 = vdwg.mxu0
        %v2301 = vsel %vm2080, %v2075, 0
        %2303 = vmatprep.subr.mxu0 0.0
        %2304 = vmatpush1.msra.mxu0 0.0
        %2305 = vmatprep.subr.mxu0 0.0
        %2306 = vmatpush1.msra.mxu0 0.0
        %2307 = vmatprep.subr.mxu0 0.0
        %2308 = vmatpush1.msra.mxu0 0.0
        %2309 = vmatprep.subr.mxu0 0.0
        %2310 = vmatpush1.msra.mxu0 0.0
        %2311 = vmatprep.subr.mxu0 0.0
        %2312 = vmatpush1.msra.mxu0 0.0
        %2313 = vmatprep.subr.mxu0 0.0
        %2314 = vmatpush1.msra.mxu0 0.0
        %2315 = vmatprep.subr.mxu0 0.0
        %2316 = vmatpush1.msra.mxu0 0.0
        %2317 = vmatprep.subr.mxu0 0.0
        %2318 = vmatpush1.msra.mxu0 0.0
        %2319 = vmatprep.subr.mxu0 0.0
        %2320 = vmatpush1.msra.mxu0 0.0
        %2321 = vmatprep.subr.mxu0 0.0
        %2322 = vmatpush1.msra.mxu0 0.0
        %2323 = vmatprep.subr.mxu0 0.0
        %2324 = vmatpush1.msra.mxu0 0.0
        %2325 = vmatprep.subr.mxu0 0.0
        %2326 = vmatpush1.msra.mxu0 0.0
        %2327 = vmatprep.subr.mxu0 0.0
        %2328 = vmatpush1.msra.mxu0 0.0
        %2329 = vmatprep.subr.mxu0 0.0
        %2330 = vmatpush1.msra.mxu0 0.0
        %2331 = vmatprep.subr.mxu0 0.0
        %2332 = vmatpush1.msra.mxu0 0.0
        %2333 = vmatprep.subr.mxu0 0.0
        %2334 = vmatpush1.msra.mxu0 %v1216
        %2335 = vmatprep.subr.mxu0 0.0
        %2336 = vmatpush2.msra.mxu0 0.0
        %2337 = vmatprep.subr.mxu0 0.0
        %2338 = vmatpush2.msra.mxu0 0.0
        %2339 = vmatprep.subr.mxu0 0.0
        %2340 = vmatpush2.msra.mxu0 0.0
        %2341 = vmatprep.subr.mxu0 0.0
        %2342 = vmatpush2.msra.mxu0 0.0
        %2343 = vmatprep.subr.mxu0 0.0
        %2344 = vmatpush2.msra.mxu0 0.0
        %2345 = vmatprep.subr.mxu0 0.0
        %2346 = vmatpush2.msra.mxu0 0.0
        %2347 = vmatprep.subr.mxu0 0.0
        %2348 = vmatpush2.msra.mxu0 0.0
        %2349 = vmatprep.subr.mxu0 0.0
        %2350 = vmatpush2.msra.mxu0 0.0
        %2351 = vmatprep.subr.mxu0 0.0
        %2352 = vmatpush2.msra.mxu0 0.0
        %2353 = vmatprep.subr.mxu0 0.0
        %2354 = vmatpush2.msra.mxu0 0.0
        %2355 = vmatprep.subr.mxu0 0.0
        %2356 = vmatpush2.msra.mxu0 0.0
        %2357 = vmatprep.subr.mxu0 0.0
        %2358 = vmatpush2.msra.mxu0 0.0
        %2359 = vmatprep.subr.mxu0 0.0
        %2360 = vmatpush2.msra.mxu0 0.0
        %2361 = vmatprep.subr.mxu0 0.0
        %2362 = vmatpush2.msra.mxu0 0.0
        %2363 = vmatprep.subr.mxu0 0.0
        %2364 = vmatpush2.msra.mxu0 0.0
        %2365 = vmatprep.subr.mxu0 0.0
        %2366 = vmatpush2.msra.mxu0 0.0
        %2367 = vmatprep.mubr.f32.mxu0 0.0
        %2368 = vmatmul.mubr.f32.gmra.mxu0 %v2301
        %v2369 = vpop.f32.mrf.mxu0
        %v2370 = vadd.f32 0.0, %v2369
        %v2371 = vpop.f32.mrf.mxu0
        %2372 = vdwg.mxu0
        %v2374 = vsel %vm2080, %v2076, 0
        %2376 = vmatprep.subr.mxu0 0.0
        %2377 = vmatpush1.msra.mxu0 0.0
        %2378 = vmatprep.subr.mxu0 0.0
        %2379 = vmatpush1.msra.mxu0 0.0
        %2380 = vmatprep.subr.mxu0 0.0
        %2381 = vmatpush1.msra.mxu0 0.0
        %2382 = vmatprep.subr.mxu0 0.0
        %2383 = vmatpush1.msra.mxu0 0.0
        %2384 = vmatprep.subr.mxu0 0.0
        %2385 = vmatpush1.msra.mxu0 0.0
        %2386 = vmatprep.subr.mxu0 0.0
        %2387 = vmatpush1.msra.mxu0 0.0
        %2388 = vmatprep.subr.mxu0 0.0
        %2389 = vmatpush1.msra.mxu0 0.0
        %2390 = vmatprep.subr.mxu0 0.0
        %2391 = vmatpush1.msra.mxu0 0.0
        %2392 = vmatprep.subr.mxu0 0.0
        %2393 = vmatpush1.msra.mxu0 0.0
        %2394 = vmatprep.subr.mxu0 0.0
        %2395 = vmatpush1.msra.mxu0 0.0
        %2396 = vmatprep.subr.mxu0 0.0
        %2397 = vmatpush1.msra.mxu0 0.0
        %2398 = vmatprep.subr.mxu0 0.0
        %2399 = vmatpush1.msra.mxu0 0.0
        %2400 = vmatprep.subr.mxu0 0.0
        %2401 = vmatpush1.msra.mxu0 0.0
        %2402 = vmatprep.subr.mxu0 0.0
        %2403 = vmatpush1.msra.mxu0 0.0
        %2404 = vmatprep.subr.mxu0 0.0
        %2405 = vmatpush1.msra.mxu0 0.0
        %2406 = vmatprep.subr.mxu0 0.0
        %2407 = vmatpush1.msra.mxu0 %v1217
        %2408 = vmatprep.subr.mxu0 0.0
        %2409 = vmatpush2.msra.mxu0 0.0
        %2410 = vmatprep.subr.mxu0 0.0
        %2411 = vmatpush2.msra.mxu0 0.0
        %2412 = vmatprep.subr.mxu0 0.0
        %2413 = vmatpush2.msra.mxu0 0.0
        %2414 = vmatprep.subr.mxu0 0.0
        %2415 = vmatpush2.msra.mxu0 0.0
        %2416 = vmatprep.subr.mxu0 0.0
        %2417 = vmatpush2.msra.mxu0 0.0
        %2418 = vmatprep.subr.mxu0 0.0
        %2419 = vmatpush2.msra.mxu0 0.0
        %2420 = vmatprep.subr.mxu0 0.0
        %2421 = vmatpush2.msra.mxu0 0.0
        %2422 = vmatprep.subr.mxu0 0.0
        %2423 = vmatpush2.msra.mxu0 0.0
        %2424 = vmatprep.subr.mxu0 0.0
        %2425 = vmatpush2.msra.mxu0 0.0
        %2426 = vmatprep.subr.mxu0 0.0
        %2427 = vmatpush2.msra.mxu0 0.0
        %2428 = vmatprep.subr.mxu0 0.0
        %2429 = vmatpush2.msra.mxu0 0.0
        %2430 = vmatprep.subr.mxu0 0.0
        %2431 = vmatpush2.msra.mxu0 0.0
        %2432 = vmatprep.subr.mxu0 0.0
        %2433 = vmatpush2.msra.mxu0 0.0
        %2434 = vmatprep.subr.mxu0 0.0
        %2435 = vmatpush2.msra.mxu0 0.0
        %2436 = vmatprep.subr.mxu0 0.0
        %2437 = vmatpush2.msra.mxu0 0.0
        %2438 = vmatprep.subr.mxu0 0.0
        %2439 = vmatpush2.msra.mxu0 0.0
        %2440 = vmatprep.mubr.f32.mxu0 0.0
        %2441 = vmatmul.mubr.f32.gmra.mxu0 %v2374
        %v2442 = vpop.f32.mrf.mxu0
        %v2443 = vadd.f32 0.0, %v2442
        %v2444 = vpop.f32.mrf.mxu0
        %2445 = vdwg.mxu0
        %v2447 = vsel %vm2080, %v2077, 0
        %2449 = vmatprep.subr.mxu0 0.0
        %2450 = vmatpush1.msra.mxu0 0.0
        %2451 = vmatprep.subr.mxu0 0.0
        %2452 = vmatpush1.msra.mxu0 0.0
        %2453 = vmatprep.subr.mxu0 0.0
        %2454 = vmatpush1.msra.mxu0 0.0
        %2455 = vmatprep.subr.mxu0 0.0
        %2456 = vmatpush1.msra.mxu0 0.0
        %2457 = vmatprep.subr.mxu0 0.0
        %2458 = vmatpush1.msra.mxu0 0.0
        %2459 = vmatprep.subr.mxu0 0.0
        %2460 = vmatpush1.msra.mxu0 0.0
        %2461 = vmatprep.subr.mxu0 0.0
        %2462 = vmatpush1.msra.mxu0 0.0
        %2463 = vmatprep.subr.mxu0 0.0
        %2464 = vmatpush1.msra.mxu0 0.0
        %2465 = vmatprep.subr.mxu0 0.0
        %2466 = vmatpush1.msra.mxu0 0.0
        %2467 = vmatprep.subr.mxu0 0.0
        %2468 = vmatpush1.msra.mxu0 0.0
        %2469 = vmatprep.subr.mxu0 0.0
        %2470 = vmatpush1.msra.mxu0 0.0
        %2471 = vmatprep.subr.mxu0 0.0
        %2472 = vmatpush1.msra.mxu0 0.0
        %2473 = vmatprep.subr.mxu0 0.0
        %2474 = vmatpush1.msra.mxu0 0.0
        %2475 = vmatprep.subr.mxu0 0.0
        %2476 = vmatpush1.msra.mxu0 0.0
        %2477 = vmatprep.subr.mxu0 0.0
        %2478 = vmatpush1.msra.mxu0 0.0
        %2479 = vmatprep.subr.mxu0 0.0
        %2480 = vmatpush1.msra.mxu0 %v1218
        %2481 = vmatprep.subr.mxu0 0.0
        %2482 = vmatpush2.msra.mxu0 0.0
        %2483 = vmatprep.subr.mxu0 0.0
        %2484 = vmatpush2.msra.mxu0 0.0
        %2485 = vmatprep.subr.mxu0 0.0
        %2486 = vmatpush2.msra.mxu0 0.0
        %2487 = vmatprep.subr.mxu0 0.0
        %2488 = vmatpush2.msra.mxu0 0.0
        %2489 = vmatprep.subr.mxu0 0.0
        %2490 = vmatpush2.msra.mxu0 0.0
        %2491 = vmatprep.subr.mxu0 0.0
        %2492 = vmatpush2.msra.mxu0 0.0
        %2493 = vmatprep.subr.mxu0 0.0
        %2494 = vmatpush2.msra.mxu0 0.0
        %2495 = vmatprep.subr.mxu0 0.0
        %2496 = vmatpush2.msra.mxu0 0.0
        %2497 = vmatprep.subr.mxu0 0.0
        %2498 = vmatpush2.msra.mxu0 0.0
        %2499 = vmatprep.subr.mxu0 0.0
        %2500 = vmatpush2.msra.mxu0 0.0
        %2501 = vmatprep.subr.mxu0 0.0
        %2502 = vmatpush2.msra.mxu0 0.0
        %2503 = vmatprep.subr.mxu0 0.0
        %2504 = vmatpush2.msra.mxu0 0.0
        %2505 = vmatprep.subr.mxu0 0.0
        %2506 = vmatpush2.msra.mxu0 0.0
        %2507 = vmatprep.subr.mxu0 0.0
        %2508 = vmatpush2.msra.mxu0 0.0
        %2509 = vmatprep.subr.mxu0 0.0
        %2510 = vmatpush2.msra.mxu0 0.0
        %2511 = vmatprep.subr.mxu0 0.0
        %2512 = vmatpush2.msra.mxu0 0.0
        %2513 = vmatprep.mubr.f32.mxu0 0.0
        %2514 = vmatmul.mubr.f32.gmra.mxu0 %v2447
        %v2515 = vpop.f32.mrf.mxu0
        %v2516 = vadd.f32 0.0, %v2515
        %v2517 = vpop.f32.mrf.mxu0
        %2518 = vdwg.mxu0
        %v2520 = vsel %vm2080, %v2078, 0
        %2522 = vmatprep.subr.mxu0 0.0
        %2523 = vmatpush1.msra.mxu0 0.0
        %2524 = vmatprep.subr.mxu0 0.0
        %2525 = vmatpush1.msra.mxu0 0.0
        %2526 = vmatprep.subr.mxu0 0.0
        %2527 = vmatpush1.msra.mxu0 0.0
        %2528 = vmatprep.subr.mxu0 0.0
        %2529 = vmatpush1.msra.mxu0 0.0
        %2530 = vmatprep.subr.mxu0 0.0
        %2531 = vmatpush1.msra.mxu0 0.0
        %2532 = vmatprep.subr.mxu0 0.0
        %2533 = vmatpush1.msra.mxu0 0.0
        %2534 = vmatprep.subr.mxu0 0.0
        %2535 = vmatpush1.msra.mxu0 0.0
        %2536 = vmatprep.subr.mxu0 0.0
        %2537 = vmatpush1.msra.mxu0 0.0
        %2538 = vmatprep.subr.mxu0 0.0
        %2539 = vmatpush1.msra.mxu0 0.0
        %2540 = vmatprep.subr.mxu0 0.0
        %2541 = vmatpush1.msra.mxu0 0.0
        %2542 = vmatprep.subr.mxu0 0.0
        %2543 = vmatpush1.msra.mxu0 0.0
        %2544 = vmatprep.subr.mxu0 0.0
        %2545 = vmatpush1.msra.mxu0 0.0
        %2546 = vmatprep.subr.mxu0 0.0
        %2547 = vmatpush1.msra.mxu0 0.0
        %2548 = vmatprep.subr.mxu0 0.0
        %2549 = vmatpush1.msra.mxu0 0.0
        %2550 = vmatprep.subr.mxu0 0.0
        %2551 = vmatpush1.msra.mxu0 0.0
        %2552 = vmatprep.subr.mxu0 0.0
        %2553 = vmatpush1.msra.mxu0 %v1219
        %2554 = vmatprep.subr.mxu0 0.0
        %2555 = vmatpush2.msra.mxu0 0.0
        %2556 = vmatprep.subr.mxu0 0.0
        %2557 = vmatpush2.msra.mxu0 0.0
        %2558 = vmatprep.subr.mxu0 0.0
        %2559 = vmatpush2.msra.mxu0 0.0
        %2560 = vmatprep.subr.mxu0 0.0
        %2561 = vmatpush2.msra.mxu0 0.0
        %2562 = vmatprep.subr.mxu0 0.0
        %2563 = vmatpush2.msra.mxu0 0.0
        %2564 = vmatprep.subr.mxu0 0.0
        %2565 = vmatpush2.msra.mxu0 0.0
        %2566 = vmatprep.subr.mxu0 0.0
        %2567 = vmatpush2.msra.mxu0 0.0
        %2568 = vmatprep.subr.mxu0 0.0
        %2569 = vmatpush2.msra.mxu0 0.0
        %2570 = vmatprep.subr.mxu0 0.0
        %2571 = vmatpush2.msra.mxu0 0.0
        %2572 = vmatprep.subr.mxu0 0.0
        %2573 = vmatpush2.msra.mxu0 0.0
        %2574 = vmatprep.subr.mxu0 0.0
        %2575 = vmatpush2.msra.mxu0 0.0
        %2576 = vmatprep.subr.mxu0 0.0
        %2577 = vmatpush2.msra.mxu0 0.0
        %2578 = vmatprep.subr.mxu0 0.0
        %2579 = vmatpush2.msra.mxu0 0.0
        %2580 = vmatprep.subr.mxu0 0.0
        %2581 = vmatpush2.msra.mxu0 0.0
        %2582 = vmatprep.subr.mxu0 0.0
        %2583 = vmatpush2.msra.mxu0 0.0
        %2584 = vmatprep.subr.mxu0 0.0
        %2585 = vmatpush2.msra.mxu0 0.0
        %2586 = vmatprep.mubr.f32.mxu0 0.0
        %2587 = vmatmul.mubr.f32.gmra.mxu0 %v2520
        %v2588 = vpop.f32.mrf.mxu0
        %v2589 = vadd.f32 0.0, %v2588
        %v2590 = vpop.f32.mrf.mxu0
        %2591 = vdwg.mxu0
        %v2593 = vsel %vm2080, %v2079, 0
        %2595 = vmatprep.subr.mxu0 0.0
        %2596 = vmatpush1.msra.mxu0 0.0
        %2597 = vmatprep.subr.mxu0 0.0
        %2598 = vmatpush1.msra.mxu0 0.0
        %2599 = vmatprep.subr.mxu0 0.0
        %2600 = vmatpush1.msra.mxu0 0.0
        %2601 = vmatprep.subr.mxu0 0.0
        %2602 = vmatpush1.msra.mxu0 0.0
        %2603 = vmatprep.subr.mxu0 0.0
        %2604 = vmatpush1.msra.mxu0 0.0
        %2605 = vmatprep.subr.mxu0 0.0
        %2606 = vmatpush1.msra.mxu0 0.0
        %2607 = vmatprep.subr.mxu0 0.0
        %2608 = vmatpush1.msra.mxu0 0.0
        %2609 = vmatprep.subr.mxu0 0.0
        %2610 = vmatpush1.msra.mxu0 0.0
        %2611 = vmatprep.subr.mxu0 0.0
        %2612 = vmatpush1.msra.mxu0 0.0
        %2613 = vmatprep.subr.mxu0 0.0
        %2614 = vmatpush1.msra.mxu0 0.0
        %2615 = vmatprep.subr.mxu0 0.0
        %2616 = vmatpush1.msra.mxu0 0.0
        %2617 = vmatprep.subr.mxu0 0.0
        %2618 = vmatpush1.msra.mxu0 0.0
        %2619 = vmatprep.subr.mxu0 0.0
        %2620 = vmatpush1.msra.mxu0 0.0
        %2621 = vmatprep.subr.mxu0 0.0
        %2622 = vmatpush1.msra.mxu0 0.0
        %2623 = vmatprep.subr.mxu0 0.0
        %2624 = vmatpush1.msra.mxu0 0.0
        %2625 = vmatprep.subr.mxu0 0.0
        %2626 = vmatpush1.msra.mxu0 %v1220
        %2627 = vmatprep.subr.mxu0 0.0
        %2628 = vmatpush2.msra.mxu0 0.0
        %2629 = vmatprep.subr.mxu0 0.0
        %2630 = vmatpush2.msra.mxu0 0.0
        %2631 = vmatprep.subr.mxu0 0.0
        %2632 = vmatpush2.msra.mxu0 0.0
        %2633 = vmatprep.subr.mxu0 0.0
        %2634 = vmatpush2.msra.mxu0 0.0
        %2635 = vmatprep.subr.mxu0 0.0
        %2636 = vmatpush2.msra.mxu0 0.0
        %2637 = vmatprep.subr.mxu0 0.0
        %2638 = vmatpush2.msra.mxu0 0.0
        %2639 = vmatprep.subr.mxu0 0.0
        %2640 = vmatpush2.msra.mxu0 0.0
        %2641 = vmatprep.subr.mxu0 0.0
        %2642 = vmatpush2.msra.mxu0 0.0
        %2643 = vmatprep.subr.mxu0 0.0
        %2644 = vmatpush2.msra.mxu0 0.0
        %2645 = vmatprep.subr.mxu0 0.0
        %2646 = vmatpush2.msra.mxu0 0.0
        %2647 = vmatprep.subr.mxu0 0.0
        %2648 = vmatpush2.msra.mxu0 0.0
        %2649 = vmatprep.subr.mxu0 0.0
        %2650 = vmatpush2.msra.mxu0 0.0
        %2651 = vmatprep.subr.mxu0 0.0
        %2652 = vmatpush2.msra.mxu0 0.0
        %2653 = vmatprep.subr.mxu0 0.0
        %2654 = vmatpush2.msra.mxu0 0.0
        %2655 = vmatprep.subr.mxu0 0.0
        %2656 = vmatpush2.msra.mxu0 0.0
        %2657 = vmatprep.subr.mxu0 0.0
        %2658 = vmatpush2.msra.mxu0 0.0
        %2659 = vmatprep.mubr.f32.mxu0 0.0
        %2660 = vmatmul.mubr.f32.gmra.mxu0 %v2593
        %v2661 = vpop.f32.mrf.mxu0
        %v2662 = vadd.f32 0.0, %v2661
        %v2663 = vpop.f32.mrf.mxu0
        %2664 = vdwg.mxu0
        %v2665 = vld [vmem:[#allocation6] sm:$0xff]
        %v2666 = vld [vmem:[#allocation6 + $0x8] sm:$0xff]
        %v2667 = vld [vmem:[#allocation6 + $0x10] sm:$0xff]
        %v2668 = vld [vmem:[#allocation6 + $0x18] sm:$0xff]
        %v2669 = vld [vmem:[#allocation6 + $0x20] sm:$0xff]
        %p2670 = scmp.gt.s32.totalorder %s42, 1
        %s2671 = scalar_select %p2670, %s42, 1
        %v2672 = vstv %s2671
        %vm2673 = vcmp.gt.s32.totalorder %v2672, 0
        %vm2674 = vcmp.gt.s32.totalorder %v2672, 1
        %vm2675 = vcmp.gt.s32.totalorder %v2672, 2
        %vm2676 = vcmp.gt.s32.totalorder %v2672, 3
        %vm2677 = vcmp.gt.s32.totalorder %v2672, 4
        %v2678 = vsel %vm2673, %v2665, -1e+30
        %v2679 = vsel %vm2674, %v2666, -1e+30
        %v2680 = vsel %vm2675, %v2667, -1e+30
        %v2681 = vsel %vm2676, %v2668, -1e+30
        %v2682 = vsel %vm2677, %v2669, -1e+30
        %vm2683 = vcmask 7168
        %v2684 = vsel %vm2683, %v2678, -inf
        %v2685 = vsel %vm2683, %v2679, -inf
        %v2686 = vsel %vm2683, %v2680, -inf
        %v2687 = vsel %vm2683, %v2681, -inf
        %v2688 = vsel %vm2683, %v2682, -inf
        %v2689 = vmax.f32 %v2684, %v2688
        %v2690 = vmax.f32 %v2689, %v2685
        %v2691 = vmax.f32 %v2686, %v2687
        %v2692 = vmax.f32 %v2690, %v2691
        %v2693 = vsub.f32 %v2678, %v2692
        %v2694 = vsub.f32 %v2679, %v2692
        %v2695 = vsub.f32 %v2680, %v2692
        %v2696 = vsub.f32 %v2681, %v2692
        %v2697 = vsub.f32 %v2682, %v2692
        %v2698 = vmul.f32 %v2693, 1.442695
        %v2699 = vpow.pop %v2698
        %v2700 = vmul.f32 %v2694, 1.442695
        %v2701 = vpow.pop %v2700
        %v2702 = vmul.f32 %v2695, 1.442695
        %v2703 = vpow.pop %v2702
        %v2704 = vmul.f32 %v2696, 1.442695
        %v2705 = vpow.pop %v2704
        %v2706 = vmul.f32 %v2697, 1.442695
        %v2707 = vpow.pop %v2706
        %v2708 = vsel %vm2683, %v2699, 0.0
        %v2709 = vsel %vm2683, %v2701, 0.0
        %v2710 = vadd.f32 %v2708, %v2709
        %v2711 = vsel %vm2683, %v2703, 0.0
        %v2712 = vadd.f32 %v2710, %v2711
        %v2713 = vsel %vm2683, %v2705, 0.0
        %v2714 = vadd.f32 %v2712, %v2713
        %v2715 = vsel %vm2683, %v2707, 0.0
        %v2716 = vadd.f32 %v2714, %v2715
        %v2717 = vrcp.pop %v2716
        %v2718 = vmul.f32 %v2699, %v2717
        %v2719 = vmul.f32 %v2701, %v2717
        %v2720 = vmul.f32 %v2703, %v2717
        %v2721 = vmul.f32 %v2705, %v2717
        %v2722 = vmul.f32 %v2707, %v2717
        %v2723 = vld [vmem:[#allocation5] sm:$0xff]
        %v2724 = vld [vmem:[#allocation5 + $0x8] sm:$0xff]
        %v2725 = vld [vmem:[#allocation5 + $0x10] sm:$0xff]
        %v2726 = vld [vmem:[#allocation5 + $0x18] sm:$0xff]
        %v2727 = vld [vmem:[#allocation5 + $0x20] sm:$0xff]
        %2729 = vset.pattern.permute.xlu0 0
        %2730 = vperm.xlu0 %2729, %v2718
        %v2731 = vpop.permute.xlu0 %2730
        %2734 = vset.pattern.permute.xlu0 0
        %2735 = vperm.xlu0 %2734, %v2719
        %v2736 = vpop.permute.xlu0 %2735
        %2739 = vset.pattern.permute.xlu0 0
        %2740 = vperm.xlu0 %2739, %v2720
        %v2741 = vpop.permute.xlu0 %2740
        %2744 = vset.pattern.permute.xlu0 0
        %2745 = vperm.xlu0 %2744, %v2721
        %v2746 = vpop.permute.xlu0 %2745
        %2749 = vset.pattern.permute.xlu0 0
        %2750 = vperm.xlu0 %2749, %v2722
        %v2751 = vpop.permute.xlu0 %2750
        %v2753 = vmul.f32 %v2731, %v2723
        %v2754 = vmul.f32 %v2736, %v2724
        %v2755 = vmul.f32 %v2741, %v2725
        %v2756 = vmul.f32 %v2746, %v2726
        %v2757 = vmul.f32 %v2751, %v2727
        %v2758 = vadd.f32 %v2753, %v2754
        %v2759 = vadd.f32 %v2758, %v2755
        %v2760 = vadd.f32 %v2759, %v2756
        %v2761 = vadd.f32 %v2760, %v2757
        %v2762 = vadd.f32 %v1213, %v2151
        %v2763 = vadd.f32 %v1214, %v2224
        %v2764 = vadd.f32 %v1215, %v2297
        %v2765 = vadd.f32 %v1216, %v2370
        %v2766 = vadd.f32 %v1217, %v2443
        %v2767 = vadd.f32 %v1218, %v2516
        %v2768 = vadd.f32 %v1219, %v2589
        %v2769 = vadd.f32 %v1220, %v2662
        %v2770 = vadd.f32 %v746, %v2761
        %v2779 = vrot.slane %v2763, 7
        %vm2780 = vcmask 1041409
        %v2781 = vsel %vm2780, %v2779, %v2762
        %v2782 = vrot.slane %v2764, 6
        %vm2783 = vcmask 1042434
        %v2784 = vsel %vm2783, %v2782, %v2781
        %v2785 = vrot.slane %v2765, 5
        %vm2786 = vcmask 1043459
        %v2787 = vsel %vm2786, %v2785, %v2784
        %v2788 = vrot.slane %v2766, 4
        %vm2789 = vcmask 1044484
        %v2790 = vsel %vm2789, %v2788, %v2787
        %v2791 = vrot.slane %v2767, 3
        %vm2792 = vcmask 1045509
        %v2793 = vsel %vm2792, %v2791, %v2790
        %v2794 = vrot.slane %v2768, 2
        %vm2795 = vcmask 1046534
        %v2796 = vsel %vm2795, %v2794, %v2793
        %v2797 = vrot.slane %v2769, 1
        %vm2798 = vcmask 1047559
        %v2799 = vsel %vm2798, %v2797, %v2796
        %v2801 = vld [vmem:[#allocation22] sm:$0xff]
        %v2802 = vld [vmem:[#allocation22 + $0x8] sm:$0xff]
        %v2803 = vld [vmem:[#allocation22 + $0x10] sm:$0xff]
        %v2804 = vld [vmem:[#allocation22 + $0x18] sm:$0xff]
        %v2805 = vld [vmem:[#allocation22 + $0x20] sm:$0xff]
        %v2806 = vld [vmem:[#allocation22 + $0x28] sm:$0xff]
        %v2807 = vld [vmem:[#allocation22 + $0x30] sm:$0xff]
        %v2808 = vld [vmem:[#allocation22 + $0x38] sm:$0xff]
        %v2809 = vld [vmem:[#allocation22 + $0x40] sm:$0xff]
        %v2810 = vld [vmem:[#allocation22 + $0x48] sm:$0xff]
        %v2811 = vld [vmem:[#allocation22 + $0x50] sm:$0xff]
        %v2812 = vld [vmem:[#allocation22 + $0x58] sm:$0xff]
        %v2813 = vld [vmem:[#allocation22 + $0x60] sm:$0xff]
        %v2814 = vld [vmem:[#allocation22 + $0x68] sm:$0xff]
        %v2815 = vld [vmem:[#allocation22 + $0x70] sm:$0xff]
        %v2816 = vld [vmem:[#allocation22 + $0x78] sm:$0xff]
        %v2817 = vld [vmem:[#allocation22 + $0x80] sm:$0xff]
        %v2818 = vld [vmem:[#allocation22 + $0x88] sm:$0xff]
        %v2819 = vld [vmem:[#allocation22 + $0x90] sm:$0xff]
        %v2820 = vld [vmem:[#allocation22 + $0x98] sm:$0xff]
        %v2821 = vld [vmem:[#allocation22 + $0xa0] sm:$0xff]
        %v2822 = vld [vmem:[#allocation22 + $0xa8] sm:$0xff]
        %v2823 = vld [vmem:[#allocation22 + $0xb0] sm:$0xff]
        %v2824 = vld [vmem:[#allocation22 + $0xb8] sm:$0xff]
        %v2825 = vld [vmem:[#allocation22 + $0xc0] sm:$0xff]
        %v2826 = vld [vmem:[#allocation22 + $0xc8] sm:$0xff]
        %v2827 = vld [vmem:[#allocation22 + $0xd0] sm:$0xff]
        %v2828 = vld [vmem:[#allocation22 + $0xd8] sm:$0xff]
        %v2829 = vld [vmem:[#allocation22 + $0xe0] sm:$0xff]
        %v2830 = vld [vmem:[#allocation22 + $0xe8] sm:$0xff]
        %v2831 = vld [vmem:[#allocation22 + $0xf0] sm:$0xff]
        %v2832 = vld [vmem:[#allocation22 + $0xf8] sm:$0xff]
        %v2833 = vld [vmem:[%s13] sm:$0x1]
        %v2835 = vlaneseq
        %v2836 = vshrl.u32 %v2835, 7
        %v2837 = vsub.s32 0, %v2836
        %v2838 = vrot.slane %v2833, %v2837
        %2840 = vmatprep.subr.mxu0 0.0
        %2841 = vmatpush1.msra.mxu0 %v2816
        %2842 = vmatprep.subr.mxu0 0.0
        %2843 = vmatpush1.msra.mxu0 %v2815
        %2844 = vmatprep.subr.mxu0 0.0
        %2845 = vmatpush1.msra.mxu0 %v2814
        %2846 = vmatprep.subr.mxu0 0.0
        %2847 = vmatpush1.msra.mxu0 %v2813
        %2848 = vmatprep.subr.mxu0 0.0
        %2849 = vmatpush1.msra.mxu0 %v2812
        %2850 = vmatprep.subr.mxu0 0.0
        %2851 = vmatpush1.msra.mxu0 %v2811
        %2852 = vmatprep.subr.mxu0 0.0
        %2853 = vmatpush1.msra.mxu0 %v2810
        %2854 = vmatprep.subr.mxu0 0.0
        %2855 = vmatpush1.msra.mxu0 %v2809
        %2856 = vmatprep.subr.mxu0 0.0
        %2857 = vmatpush1.msra.mxu0 %v2808
        %2858 = vmatprep.subr.mxu0 0.0
        %2859 = vmatpush1.msra.mxu0 %v2807
        %2860 = vmatprep.subr.mxu0 0.0
        %2861 = vmatpush1.msra.mxu0 %v2806
        %2862 = vmatprep.subr.mxu0 0.0
        %2863 = vmatpush1.msra.mxu0 %v2805
        %2864 = vmatprep.subr.mxu0 0.0
        %2865 = vmatpush1.msra.mxu0 %v2804
        %2866 = vmatprep.subr.mxu0 0.0
        %2867 = vmatpush1.msra.mxu0 %v2803
        %2868 = vmatprep.subr.mxu0 0.0
        %2869 = vmatpush1.msra.mxu0 %v2802
        %2870 = vmatprep.subr.mxu0 0.0
        %2871 = vmatpush1.msra.mxu0 %v2801
        %2872 = vmatprep.subr.mxu0 0.0
        %2873 = vmatpush2.msra.mxu0 %v2832
        %2874 = vmatprep.subr.mxu0 0.0
        %2875 = vmatpush2.msra.mxu0 %v2831
        %2876 = vmatprep.subr.mxu0 0.0
        %2877 = vmatpush2.msra.mxu0 %v2830
        %2878 = vmatprep.subr.mxu0 0.0
        %2879 = vmatpush2.msra.mxu0 %v2829
        %2880 = vmatprep.subr.mxu0 0.0
        %2881 = vmatpush2.msra.mxu0 %v2828
        %2882 = vmatprep.subr.mxu0 0.0
        %2883 = vmatpush2.msra.mxu0 %v2827
        %2884 = vmatprep.subr.mxu0 0.0
        %2885 = vmatpush2.msra.mxu0 %v2826
        %2886 = vmatprep.subr.mxu0 0.0
        %2887 = vmatpush2.msra.mxu0 %v2825
        %2888 = vmatprep.subr.mxu0 0.0
        %2889 = vmatpush2.msra.mxu0 %v2824
        %2890 = vmatprep.subr.mxu0 0.0
        %2891 = vmatpush2.msra.mxu0 %v2823
        %2892 = vmatprep.subr.mxu0 0.0
        %2893 = vmatpush2.msra.mxu0 %v2822
        %2894 = vmatprep.subr.mxu0 0.0
        %2895 = vmatpush2.msra.mxu0 %v2821
        %2896 = vmatprep.subr.mxu0 0.0
        %2897 = vmatpush2.msra.mxu0 %v2820
        %2898 = vmatprep.subr.mxu0 0.0
        %2899 = vmatpush2.msra.mxu0 %v2819
        %2900 = vmatprep.subr.mxu0 0.0
        %2901 = vmatpush2.msra.mxu0 %v2818
        %2902 = vmatprep.subr.mxu0 0.0
        %2903 = vmatpush2.msra.mxu0 %v2817
        %2904 = vmatprep.mubr.f32.mxu0 %v2770
        %2905 = vmatmul.mubr.f32.gmra.mxu0 %v2799
        %v2906 = vpop.f32.mrf.mxu0
        %v2907 = vadd.f32 %v2838, %v2906
        %v2908 = vpop.f32.mrf.mxu0
        %2909 = vdwg.mxu0
        %v2910 = vmax.f32 %v2907, 0.0
        %v2911 = vld [vmem:[#allocation23] sm:$0xff]
        %v2912 = vld [vmem:[#allocation23 + $0x8] sm:$0xff]
        %v2913 = vld [vmem:[#allocation23 + $0x10] sm:$0xff]
        %v2914 = vld [vmem:[#allocation23 + $0x18] sm:$0xff]
        %v2915 = vld [vmem:[#allocation23 + $0x20] sm:$0xff]
        %v2916 = vld [vmem:[#allocation23 + $0x28] sm:$0xff]
        %v2917 = vld [vmem:[#allocation23 + $0x30] sm:$0xff]
        %v2918 = vld [vmem:[#allocation23 + $0x38] sm:$0xff]
        %v2919 = vld [vmem:[#allocation23 + $0x40] sm:$0xff]
        %v2920 = vld [vmem:[#allocation23 + $0x48] sm:$0xff]
        %v2921 = vld [vmem:[#allocation23 + $0x50] sm:$0xff]
        %v2922 = vld [vmem:[#allocation23 + $0x58] sm:$0xff]
        %v2923 = vld [vmem:[#allocation23 + $0x60] sm:$0xff]
        %v2924 = vld [vmem:[#allocation23 + $0x68] sm:$0xff]
        %v2925 = vld [vmem:[#allocation23 + $0x70] sm:$0xff]
        %v2926 = vld [vmem:[#allocation23 + $0x78] sm:$0xff]
        %v2927 = vld [vmem:[%s15] sm:$0x1]
        %v2929 = vlaneseq
        %v2930 = vshrl.u32 %v2929, 7
        %v2931 = vsub.s32 0, %v2930
        %v2932 = vrot.slane %v2927, %v2931
        %2934 = vmatprep.subr.mxu0 0.0
        %2935 = vmatpush1.msra.mxu0 %v2926
        %2936 = vmatprep.subr.mxu0 0.0
        %2937 = vmatpush1.msra.mxu0 %v2925
        %2938 = vmatprep.subr.mxu0 0.0
        %2939 = vmatpush1.msra.mxu0 %v2924
        %2940 = vmatprep.subr.mxu0 0.0
        %2941 = vmatpush1.msra.mxu0 %v2923
        %2942 = vmatprep.subr.mxu0 0.0
        %2943 = vmatpush1.msra.mxu0 %v2922
        %2944 = vmatprep.subr.mxu0 0.0
        %2945 = vmatpush1.msra.mxu0 %v2921
        %2946 = vmatprep.subr.mxu0 0.0
        %2947 = vmatpush1.msra.mxu0 %v2920
        %2948 = vmatprep.subr.mxu0 0.0
        %2949 = vmatpush1.msra.mxu0 %v2919
        %2950 = vmatprep.subr.mxu0 0.0
        %2951 = vmatpush1.msra.mxu0 %v2918
        %2952 = vmatprep.subr.mxu0 0.0
        %2953 = vmatpush1.msra.mxu0 %v2917
        %2954 = vmatprep.subr.mxu0 0.0
        %2955 = vmatpush1.msra.mxu0 %v2916
        %2956 = vmatprep.subr.mxu0 0.0
        %2957 = vmatpush1.msra.mxu0 %v2915
        %2958 = vmatprep.subr.mxu0 0.0
        %2959 = vmatpush1.msra.mxu0 %v2914
        %2960 = vmatprep.subr.mxu0 0.0
        %2961 = vmatpush1.msra.mxu0 %v2913
        %2962 = vmatprep.subr.mxu0 0.0
        %2963 = vmatpush1.msra.mxu0 %v2912
        %2964 = vmatprep.subr.mxu0 0.0
        %2965 = vmatpush1.msra.mxu0 %v2911
        %2966 = vmatprep.subr.mxu0 0.0
        %2967 = vmatpush2.msra.mxu0 0.0
        %2968 = vmatprep.subr.mxu0 0.0
        %2969 = vmatpush2.msra.mxu0 0.0
        %2970 = vmatprep.subr.mxu0 0.0
        %2971 = vmatpush2.msra.mxu0 0.0
        %2972 = vmatprep.subr.mxu0 0.0
        %2973 = vmatpush2.msra.mxu0 0.0
        %2974 = vmatprep.subr.mxu0 0.0
        %2975 = vmatpush2.msra.mxu0 0.0
        %2976 = vmatprep.subr.mxu0 0.0
        %2977 = vmatpush2.msra.mxu0 0.0
        %2978 = vmatprep.subr.mxu0 0.0
        %2979 = vmatpush2.msra.mxu0 0.0
        %2980 = vmatprep.subr.mxu0 0.0
        %2981 = vmatpush2.msra.mxu0 0.0
        %2982 = vmatprep.subr.mxu0 0.0
        %2983 = vmatpush2.msra.mxu0 0.0
        %2984 = vmatprep.subr.mxu0 0.0
        %2985 = vmatpush2.msra.mxu0 0.0
        %2986 = vmatprep.subr.mxu0 0.0
        %2987 = vmatpush2.msra.mxu0 0.0
        %2988 = vmatprep.subr.mxu0 0.0
        %2989 = vmatpush2.msra.mxu0 0.0
        %2990 = vmatprep.subr.mxu0 0.0
        %2991 = vmatpush2.msra.mxu0 0.0
        %2992 = vmatprep.subr.mxu0 0.0
        %2993 = vmatpush2.msra.mxu0 0.0
        %2994 = vmatprep.subr.mxu0 0.0
        %2995 = vmatpush2.msra.mxu0 0.0
        %2996 = vmatprep.subr.mxu0 0.0
        %2997 = vmatpush2.msra.mxu0 0.0
        %2998 = vmatprep.mubr.f32.mxu0 0.0
        %2999 = vmatmul.mubr.f32.gmra.mxu0 %v2910
        %v3000 = vpop.f32.mrf.mxu0
        %v3001 = vadd.f32 %v2932, %v3000
        %v3002 = vpop.f32.mrf.mxu0
        %3003 = vdwg.mxu0
        %v3004 = vld [vmem:[#allocation7] sm:$0xff]
        %v3005 = vadd.f32 %v3001, %v3004
        %3006 = vst [vmem:[%s723] sm:$0xff] %v3005
        %v3007 = vlaneseq
        %v3008 = vand.u32 %v3007, 127
        %3009 = vmax.xlane.f32.xlu0 %v3005
        %v3010 = vpop.xlane.xlu0 %3009
        %vm3011 = vcmp.eq.f32.partialorder %v3005, %v3010
        %v3012 = vsel %vm3011, %v3008, 128
        %v3013 = vand.u32 %v3012, 65535
        %v3014 = vshra.s32 %v3012, 16
        %v3015 = vcvt.s32.f32 %v3013
        %v3016 = vcvt.s32.f32 %v3014
        %3017 = vmin.xlane.f32.xlu0 %v3016
        %v3018 = vpop.xlane.xlu0 %3017
        %vm3019 = vcmp.eq.f32.partialorder %v3016, %v3018
        %v3020 = vsel %vm3019, %v3015, inf
        %3021 = vmin.xlane.f32.xlu0 %v3020
        %v3022 = vpop.xlane.xlu0 %3021
        %v3023 = vcvt.f32.s32 %v3022
        %v3024 = vcvt.f32.s32 %v3018
        %v3025 = vshll.u32 %v3024, 16
        %v3026 = vadd.s32 %v3025, %v3023
        %vm3027 = vcmp.eq.s32.totalorder %v3008, %v3026
        %v3028 = vsel %vm3027, 1, 0
        %v3029 = vcvt.s32.f32 %v3028
        %v3030 = vld [vmem:[#allocation25] sm:$0xff]
        %v3031 = vld [vmem:[#allocation25 + $0x8] sm:$0xff]
        %v3032 = vld [vmem:[#allocation25 + $0x10] sm:$0xff]
        %v3033 = vld [vmem:[#allocation25 + $0x18] sm:$0xff]
        %v3034 = vld [vmem:[#allocation25 + $0x20] sm:$0xff]
        %v3035 = vld [vmem:[#allocation25 + $0x28] sm:$0xff]
        %v3036 = vld [vmem:[#allocation25 + $0x30] sm:$0xff]
        %v3037 = vld [vmem:[#allocation25 + $0x38] sm:$0xff]
        %v3038 = vld [vmem:[#allocation25 + $0x40] sm:$0xff]
        %v3039 = vld [vmem:[#allocation25 + $0x48] sm:$0xff]
        %v3040 = vld [vmem:[#allocation25 + $0x50] sm:$0xff]
        %v3041 = vld [vmem:[#allocation25 + $0x58] sm:$0xff]
        %v3042 = vld [vmem:[#allocation25 + $0x60] sm:$0xff]
        %v3043 = vld [vmem:[#allocation25 + $0x68] sm:$0xff]
        %v3044 = vld [vmem:[#allocation25 + $0x70] sm:$0xff]
        %v3045 = vld [vmem:[#allocation25 + $0x78] sm:$0xff]
        %3046 = vmatprep.subr.mxu0 0.0
        %3047 = vmatpush1.msra.mxu0 %v3045
        %3048 = vmatprep.subr.mxu0 0.0
        %3049 = vmatpush1.msra.mxu0 %v3044
        %3050 = vmatprep.subr.mxu0 0.0
        %3051 = vmatpush1.msra.mxu0 %v3043
        %3052 = vmatprep.subr.mxu0 0.0
        %3053 = vmatpush1.msra.mxu0 %v3042
        %3054 = vmatprep.subr.mxu0 0.0
        %3055 = vmatpush1.msra.mxu0 %v3041
        %3056 = vmatprep.subr.mxu0 0.0
        %3057 = vmatpush1.msra.mxu0 %v3040
        %3058 = vmatprep.subr.mxu0 0.0
        %3059 = vmatpush1.msra.mxu0 %v3039
        %3060 = vmatprep.subr.mxu0 0.0
        %3061 = vmatpush1.msra.mxu0 %v3038
        %3062 = vmatprep.subr.mxu0 0.0
        %3063 = vmatpush1.msra.mxu0 %v3037
        %3064 = vmatprep.subr.mxu0 0.0
        %3065 = vmatpush1.msra.mxu0 %v3036
        %3066 = vmatprep.subr.mxu0 0.0
        %3067 = vmatpush1.msra.mxu0 %v3035
        %3068 = vmatprep.subr.mxu0 0.0
        %3069 = vmatpush1.msra.mxu0 %v3034
        %3070 = vmatprep.subr.mxu0 0.0
        %3071 = vmatpush1.msra.mxu0 %v3033
        %3072 = vmatprep.subr.mxu0 0.0
        %3073 = vmatpush1.msra.mxu0 %v3032
        %3074 = vmatprep.subr.mxu0 0.0
        %3075 = vmatpush1.msra.mxu0 %v3031
        %3076 = vmatprep.subr.mxu0 0.0
        %3077 = vmatpush1.msra.mxu0 %v3030
        %3078 = vmatprep.subr.mxu0 0.0
        %3079 = vmatpush2.msra.mxu0 0.0
        %3080 = vmatprep.subr.mxu0 0.0
        %3081 = vmatpush2.msra.mxu0 0.0
        %3082 = vmatprep.subr.mxu0 0.0
        %3083 = vmatpush2.msra.mxu0 0.0
        %3084 = vmatprep.subr.mxu0 0.0
        %3085 = vmatpush2.msra.mxu0 0.0
        %3086 = vmatprep.subr.mxu0 0.0
        %3087 = vmatpush2.msra.mxu0 0.0
        %3088 = vmatprep.subr.mxu0 0.0
        %3089 = vmatpush2.msra.mxu0 0.0
        %3090 = vmatprep.subr.mxu0 0.0
        %3091 = vmatpush2.msra.mxu0 0.0
        %3092 = vmatprep.subr.mxu0 0.0
        %3093 = vmatpush2.msra.mxu0 0.0
        %3094 = vmatprep.subr.mxu0 0.0
        %3095 = vmatpush2.msra.mxu0 0.0
        %3096 = vmatprep.subr.mxu0 0.0
        %3097 = vmatpush2.msra.mxu0 0.0
        %3098 = vmatprep.subr.mxu0 0.0
        %3099 = vmatpush2.msra.mxu0 0.0
        %3100 = vmatprep.subr.mxu0 0.0
        %3101 = vmatpush2.msra.mxu0 0.0
        %3102 = vmatprep.subr.mxu0 0.0
        %3103 = vmatpush2.msra.mxu0 0.0
        %3104 = vmatprep.subr.mxu0 0.0
        %3105 = vmatpush2.msra.mxu0 0.0
        %3106 = vmatprep.subr.mxu0 0.0
        %3107 = vmatpush2.msra.mxu0 0.0
        %3108 = vmatprep.subr.mxu0 0.0
        %3109 = vmatpush2.msra.mxu0 0.0
        %3110 = vmatprep.mubr.f32.mxu0 0.0
        %3111 = vmatmul.mubr.f32.gmra.mxu0 %v3029
        %v3112 = vpop.f32.mrf.mxu0
        %v3113 = vadd.f32 0.0, %v3112
        %v3114 = vpop.f32.mrf.mxu0
        %3115 = vdwg.mxu0
        %3116 = vst [vmem:[#allocation4] sm:$0xff] %v3113
        %s3117 = smul.u32 %s42, 8
        %s3118 = scalar_lea.vmem [#allocation5], %s3117
        %3119 = vst [vmem:[%s3118] sm:$0xff] %v3113
        %v3120 = vld [vmem:[#allocation20] sm:$0xff]
        %v3121 = vld [vmem:[#allocation20 + $0x8] sm:$0xff]
        %v3122 = vld [vmem:[#allocation20 + $0x10] sm:$0xff]
        %v3123 = vld [vmem:[#allocation20 + $0x18] sm:$0xff]
        %v3124 = vld [vmem:[#allocation20 + $0x20] sm:$0xff]
        %v3125 = vld [vmem:[#allocation20 + $0x28] sm:$0xff]
        %v3126 = vld [vmem:[#allocation20 + $0x30] sm:$0xff]
        %v3127 = vld [vmem:[#allocation20 + $0x38] sm:$0xff]
        %v3128 = vld [vmem:[#allocation20 + $0x40] sm:$0xff]
        %v3129 = vld [vmem:[#allocation20 + $0x48] sm:$0xff]
        %v3130 = vld [vmem:[#allocation20 + $0x50] sm:$0xff]
        %v3131 = vld [vmem:[#allocation20 + $0x58] sm:$0xff]
        %v3132 = vld [vmem:[#allocation20 + $0x60] sm:$0xff]
        %v3133 = vld [vmem:[#allocation20 + $0x68] sm:$0xff]
        %v3134 = vld [vmem:[#allocation20 + $0x70] sm:$0xff]
        %v3135 = vld [vmem:[#allocation20 + $0x78] sm:$0xff]
        %v3136 = vld [vmem:[%s10] sm:$0x1]
        %v3138 = vlaneseq
        %v3139 = vshrl.u32 %v3138, 7
        %v3140 = vsub.s32 0, %v3139
        %v3141 = vrot.slane %v3136, %v3140
        %3143 = vmatprep.subr.mxu0 0.0
        %3144 = vmatpush1.msra.mxu0 %v3135
        %3145 = vmatprep.subr.mxu0 0.0
        %3146 = vmatpush1.msra.mxu0 %v3134
        %3147 = vmatprep.subr.mxu0 0.0
        %3148 = vmatpush1.msra.mxu0 %v3133
        %3149 = vmatprep.subr.mxu0 0.0
        %3150 = vmatpush1.msra.mxu0 %v3132
        %3151 = vmatprep.subr.mxu0 0.0
        %3152 = vmatpush1.msra.mxu0 %v3131
        %3153 = vmatprep.subr.mxu0 0.0
        %3154 = vmatpush1.msra.mxu0 %v3130
        %3155 = vmatprep.subr.mxu0 0.0
        %3156 = vmatpush1.msra.mxu0 %v3129
        %3157 = vmatprep.subr.mxu0 0.0
        %3158 = vmatpush1.msra.mxu0 %v3128
        %3159 = vmatprep.subr.mxu0 0.0
        %3160 = vmatpush1.msra.mxu0 %v3127
        %3161 = vmatprep.subr.mxu0 0.0
        %3162 = vmatpush1.msra.mxu0 %v3126
        %3163 = vmatprep.subr.mxu0 0.0
        %3164 = vmatpush1.msra.mxu0 %v3125
        %3165 = vmatprep.subr.mxu0 0.0
        %3166 = vmatpush1.msra.mxu0 %v3124
        %3167 = vmatprep.subr.mxu0 0.0
        %3168 = vmatpush1.msra.mxu0 %v3123
        %3169 = vmatprep.subr.mxu0 0.0
        %3170 = vmatpush1.msra.mxu0 %v3122
        %3171 = vmatprep.subr.mxu0 0.0
        %3172 = vmatpush1.msra.mxu0 %v3121
        %3173 = vmatprep.subr.mxu0 0.0
        %3174 = vmatpush1.msra.mxu0 %v3120
        %3175 = vmatprep.subr.mxu0 0.0
        %3176 = vmatpush2.msra.mxu0 0.0
        %3177 = vmatprep.subr.mxu0 0.0
        %3178 = vmatpush2.msra.mxu0 0.0
        %3179 = vmatprep.subr.mxu0 0.0
        %3180 = vmatpush2.msra.mxu0 0.0
        %3181 = vmatprep.subr.mxu0 0.0
        %3182 = vmatpush2.msra.mxu0 0.0
        %3183 = vmatprep.subr.mxu0 0.0
        %3184 = vmatpush2.msra.mxu0 0.0
        %3185 = vmatprep.subr.mxu0 0.0
        %3186 = vmatpush2.msra.mxu0 0.0
        %3187 = vmatprep.subr.mxu0 0.0
        %3188 = vmatpush2.msra.mxu0 0.0
        %3189 = vmatprep.subr.mxu0 0.0
        %3190 = vmatpush2.msra.mxu0 0.0
        %3191 = vmatprep.subr.mxu0 0.0
        %3192 = vmatpush2.msra.mxu0 0.0
        %3193 = vmatprep.subr.mxu0 0.0
        %3194 = vmatpush2.msra.mxu0 0.0
        %3195 = vmatprep.subr.mxu0 0.0
        %3196 = vmatpush2.msra.mxu0 0.0
        %3197 = vmatprep.subr.mxu0 0.0
        %3198 = vmatpush2.msra.mxu0 0.0
        %3199 = vmatprep.subr.mxu0 0.0
        %3200 = vmatpush2.msra.mxu0 0.0
        %3201 = vmatprep.subr.mxu0 0.0
        %3202 = vmatpush2.msra.mxu0 0.0
        %3203 = vmatprep.subr.mxu0 0.0
        %3204 = vmatpush2.msra.mxu0 0.0
        %3205 = vmatprep.subr.mxu0 0.0
        %3206 = vmatpush2.msra.mxu0 0.0
        %3207 = vmatprep.mubr.f32.mxu0 0.0
        %3208 = vmatmul.mubr.f32.gmra.mxu0 %v3113
        %v3209 = vpop.f32.mrf.mxu0
        %v3210 = vadd.f32 %v3141, %v3209
        %v3211 = vpop.f32.mrf.mxu0
        %3212 = vdwg.mxu0
        %v3213 = vmax.f32 %v3210, 0.0
        %v3214 = vld [vmem:[%s11] sm:$0x1]
        %v3216 = vlaneseq
        %v3217 = vshrl.u32 %v3216, 7
        %v3218 = vsub.s32 0, %v3217
        %v3219 = vrot.slane %v3214, %v3218
        %v3221 = vmul.f32 %v3213, %v3219
        %3222 = vadd.xlane.f32.xlu0 %v3221
        %v3223 = vpop.xlane.xlu0 %3222
        %s3224 = scalar_lea.vmem [#allocation6], %s3117
        %3225 = vst.msk [vmem:[%s3224] sm:$0xff] %vm2683, %v3223
        %vm3226 = vcmp.gt.f32.partialorder %v3029, 0.0
        %v3227 = vld [vmem:[#allocation7] sm:$0xff]
        %v3228 = vsel %vm3226, -10000000.0, %v3227
        %vm3229 = vcmp.eq.s32.totalorder %v3008, 1
        %v3230 = vsel %vm3229, 0.0, %v3228
        %3231 = vst [vmem:[#allocation7] sm:$0xff] %v3230
        %s3232 = sand.u32 %s436, 1
        %s3233 = scalar_lea.sflag [#allocation10], %s3232
        %s3234 = sand.u32 %s436, 1
        %s3235 = smul.addr %s3234, 8
        %s3236 = scalar_lea.vmem [#allocation26], %s3235
        // Predicated region
        $region137: #{tpu_custom_call.1} parent=87 // pred_check
          %p3237 = pneg %p446
        $region138: #{tpu_custom_call.1} parent=87 // pred_check_branch
          %3239 = sbr.rel (%p3237) target = $region140
        $region139: #{tpu_custom_call.1} parent=87 // pred_region
          %s3241 = ssub.s32 128, 128
          %3242 = vsyncadd %s3233, %s3241
          %s3243 = sadd.s32 %s41, %s42
          %s3244 = smul.addr %s3243, 128
          %s3245 = scalar_lea.hbm %s17, %s3244
          %s3247 = sshll.u32 %s3236, 4
          %s3248 = int_to_ptr.vmem [resolvable:$true] %s3247
          %3250 = dma.vmem_to_hbm [thread:$0]  %s3248, 128, %s3245, %s3233
        $region140: #{tpu_custom_call.1} parent=87 // pred_fallthru
          _
      $region88: #{tpu_custom_call.1} parent=5 // pred_fallthru
        _
      %p3251 = scmp.le.s32.totalorder 2, %s32
      // Predicated region
      $region141: #{tpu_custom_call.1} parent=5 // pred_check
        %p3252 = pneg %p3251
      $region142: #{tpu_custom_call.1} parent=5 // pred_check_branch
        %3254 = sbr.rel (%p3252) target = $region144
      $region143: #{tpu_custom_call.1} parent=5 // pred_region
        %s3255 = ssub.s32 %s32, 2
        // Predicated region
        $region145: #{tpu_custom_call.1} parent=143 // pred_check
          %p3256 = pneg %p452
        $region146: #{tpu_custom_call.1} parent=143 // pred_check_branch
          %3258 = sbr.rel (%p3256) target = $region148
        $region147: #{tpu_custom_call.1} parent=143 // pred_region
          %s3259 = sand.u32 %s437, 1
          %s3260 = scalar_lea.sflag [#allocation10], %s3259
          %s3261 = sand.u32 %s437, 1
          %s3262 = smul.addr %s3261, 8
          %s3263 = scalar_lea.vmem [#allocation26], %s3262
          %3264 = dma.done %s3260, 128
        $region148: #{tpu_custom_call.1} parent=143 // pred_fallthru
          _
      $region144: #{tpu_custom_call.1} parent=5 // pred_fallthru
        _
    $region6: #{tpu_custom_call.1} parent=1 // loop_footer
      %s36 = sadd.s32 1, %s32
    $region7: #{tpu_custom_call.1} parent=1 // loop_footer_branch
      %31 = sbr.rel target = $region3
    $region8: #{tpu_custom_call.1} parent=1 // loop_exit
      _
    %3265 = vsyncpa [#allocation9], 1
    %s3266 = scalar_lea.sflag [#allocation9], 1
    %3267 = vsyncpa %s3266, 1
    %3268 = vsyncpa [#allocation12], 1
    %3269 = vsyncpa [#allocation15], 1
    %3270 = vsyncpa [#allocation18], 1
    %3271 = vsyncpa [#allocation21], 1
    %3272 = vsyncpa [#allocation24], 1
    %3273 = vsyncpa [#allocation10], 1
    %s3274 = scalar_lea.sflag [#allocation10], 1
    %3275 = vsyncpa %s3274, 1

</llo_original>
